<compile_context>
chip_gen: v7x
topology: tpu7x:2x2x1
jax: 0.10.0
libtpu: 0.0.40
codegen_flags: <defaults>
</compile_context>

<pallas_src>
import functools

import jax
import jax.numpy as jnp
from jax import lax
from jax.experimental import pallas as pl
from jax.experimental.pallas import tpu as pltpu

_LANE = 128  # lane-dense channel padding


def _round_up(x, m):
    return ((x + m - 1) // m) * m


# ----------------------------- Pallas kernels ------------------------------ #

def _conv3x3_bias_stats(pad_ref, w_ref, b_ref, y_ref, s_ref, q_ref):
    """Shared tail: 3x3 conv (9 shifted MXU matmuls) + bias + BN partial stats.

    pad_ref: VMEM (Ho+2, Wo+2, Cin) zero-haloed input tile
    w_ref:   (9, Cin, Cp)   per-tap (in, out) weight matrices
    b_ref:   (1, Cp)
    y_ref:   (Ho, Wo, Cp)   pre-BN conv output
    s_ref:   (1, Cp)        per-sample sum over spatial positions
    q_ref:   (1, Cp)        per-sample sum of squares
    """
    Ho, Wo, Cp = y_ref.shape
    Cin = pad_ref.shape[-1]

    padded = pad_ref[...]                                   # (Ho+2, Wo+2, Cin)
    acc = jnp.zeros((Ho * Wo, Cp), jnp.float32)
    for k in range(9):
        kh, kw = k // 3, k % 3
        win = padded[kh:kh + Ho, kw:kw + Wo, :].reshape(Ho * Wo, Cin)
        acc = acc + jnp.dot(win, w_ref[k], preferred_element_type=jnp.float32)
    acc = acc + b_ref[...]                                  # bias, broadcast (1, Cp)

    y_ref[...] = acc.reshape(Ho, Wo, Cp)
    s_ref[...] = jnp.sum(acc, axis=0, keepdims=True)        # fused BN partials
    q_ref[...] = jnp.sum(acc * acc, axis=0, keepdims=True)


def _pool_conv_bnstats_kernel(x_ref, w_ref, b_ref, y_ref, s_ref, q_ref, pad_ref):
    """Fused MaxPool2d(2) + conv1 + bias + BN1 partial stats for one sample.

    x_ref: (H, W/2, 2*Cin) -- W pairs folded into the lane dim (zero-copy view)
    """
    Hi, Wo, C2 = x_ref.shape
    Cin = C2 // 2
    Ho = y_ref.shape[0]

    # --- fused 2x2 maxpool: max over the W pair (lane slice), then the H pair ---
    xv = x_ref[...]
    xw = jnp.maximum(xv[..., :Cin], xv[..., Cin:])            # (H, Wo, Cin)
    pooled = jnp.max(xw.reshape(Ho, 2, Wo, Cin), axis=1)      # (Ho, Wo, Cin)

    # --- zero-haloed tile in VMEM (conv zero padding = 1) ---
    pad_ref[...] = jnp.zeros_like(pad_ref)
    pad_ref[1:Ho + 1, 1:Wo + 1, :] = pooled

    _conv3x3_bias_stats(pad_ref, w_ref, b_ref, y_ref, s_ref, q_ref)


def _bnrelu_conv_bnstats_kernel(a_ref, sc_ref, sh_ref, w_ref, b_ref,
                                y_ref, s_ref, q_ref, pad_ref):
    """Fused BN1 affine + ReLU (consumer-side) + conv2 + bias + BN2 partial stats."""
    Ho, Wo, Cin = a_ref.shape

    a = jnp.maximum(a_ref[...] * sc_ref[...].reshape(1, 1, Cin)
                    + sh_ref[...].reshape(1, 1, Cin), 0.0)

    pad_ref[...] = jnp.zeros_like(pad_ref)
    pad_ref[1:Ho + 1, 1:Wo + 1, :] = a                        # zero halo == conv padding

    _conv3x3_bias_stats(pad_ref, w_ref, b_ref, y_ref, s_ref, q_ref)


def _affine_relu_kernel(y_ref, sc_ref, sh_ref, o_ref):
    """Final BN affine + ReLU (in place via input_output_aliases)."""
    C = y_ref.shape[-1]
    o_ref[...] = jnp.maximum(
        y_ref[...] * sc_ref[...].reshape(1, 1, C) + sh_ref[...].reshape(1, 1, C), 0.0)


# ------------------------------ host wrappers ------------------------------ #

def pool_conv_bnstats(x_nhwc, w, b):
    N, Hi, Wi, Cin = x_nhwc.shape
    Ho, Wo = Hi // 2, Wi // 2
    Cp = w.shape[-1]

    # Zero-copy view: fold W pairs into the lane dim (contiguous NHWC bitcast).
    xr = x_nhwc.reshape(N, Hi, Wo, 2 * Cin)

    flops = 2 * N * Ho * Wo * 9 * Cin * Cp
    bytes_accessed = 4 * (x_nhwc.size + w.size + b.size + N * Ho * Wo * Cp + 2 * N * Cp)

    return pl.pallas_call(
        _pool_conv_bnstats_kernel,
        out_shape=(jax.ShapeDtypeStruct((N, Ho, Wo, Cp), jnp.float32),
                   jax.ShapeDtypeStruct((N, 1, Cp), jnp.float32),
                   jax.ShapeDtypeStruct((N, 1, Cp), jnp.float32)),
        grid=(N,),
        in_specs=[pl.BlockSpec((None, Hi, Wo, 2 * Cin), lambda n: (n, 0, 0, 0)),
                  pl.BlockSpec((9, Cin, Cp), lambda n: (0, 0, 0)),   # VMEM-resident
                  pl.BlockSpec((1, Cp), lambda n: (0, 0))],
        out_specs=(pl.BlockSpec((None, Ho, Wo, Cp), lambda n: (n, 0, 0, 0)),
                   pl.BlockSpec((None, 1, Cp), lambda n: (n, 0, 0)),
                   pl.BlockSpec((None, 1, Cp), lambda n: (n, 0, 0))),
        scratch_shapes=[pltpu.VMEM((Ho + 2, Wo + 2, Cin), jnp.float32)],
        compiler_params=pltpu.CompilerParams(dimension_semantics=("parallel",)),
        cost_estimate=pl.CostEstimate(flops=flops, transcendentals=0,
                                      bytes_accessed=bytes_accessed),
    )(xr, w, b)


def bnrelu_conv_bnstats(y_pre, scale, shift, w, b):
    N, Ho, Wo, Cin = y_pre.shape
    Cp = w.shape[-1]

    flops = 2 * N * Ho * Wo * 9 * Cin * Cp
    bytes_accessed = 4 * (y_pre.size + w.size + b.size + N * Ho * Wo * Cp + 2 * N * Cp)

    return pl.pallas_call(
        _bnrelu_conv_bnstats_kernel,
        out_shape=(jax.ShapeDtypeStruct((N, Ho, Wo, Cp), jnp.float32),
                   jax.ShapeDtypeStruct((N, 1, Cp), jnp.float32),
                   jax.ShapeDtypeStruct((N, 1, Cp), jnp.float32)),
        grid=(N,),
        in_specs=[pl.BlockSpec((None, Ho, Wo, Cin), lambda n: (n, 0, 0, 0)),
                  pl.BlockSpec((1, Cin), lambda n: (0, 0)),
                  pl.BlockSpec((1, Cin), lambda n: (0, 0)),
                  pl.BlockSpec((9, Cin, Cp), lambda n: (0, 0, 0)),
                  pl.BlockSpec((1, Cp), lambda n: (0, 0))],
        out_specs=(pl.BlockSpec((None, Ho, Wo, Cp), lambda n: (n, 0, 0, 0)),
                   pl.BlockSpec((None, 1, Cp), lambda n: (n, 0, 0)),
                   pl.BlockSpec((None, 1, Cp), lambda n: (n, 0, 0))),
        scratch_shapes=[pltpu.VMEM((Ho + 2, Wo + 2, Cin), jnp.float32)],
        compiler_params=pltpu.CompilerParams(dimension_semantics=("parallel",)),
        cost_estimate=pl.CostEstimate(flops=flops, transcendentals=0,
                                      bytes_accessed=bytes_accessed),
    )(y_pre, scale, shift, w, b)


def affine_relu_inplace(y_pre, scale, shift):
    N, Ho, Wo, C = y_pre.shape
    return pl.pallas_call(
        _affine_relu_kernel,
        out_shape=jax.ShapeDtypeStruct((N, Ho, Wo, C), jnp.float32),
        grid=(N,),
        in_specs=[pl.BlockSpec((None, Ho, Wo, C), lambda n: (n, 0, 0, 0)),
                  pl.BlockSpec((1, C), lambda n: (0, 0)),
                  pl.BlockSpec((1, C), lambda n: (0, 0))],
        out_specs=pl.BlockSpec((None, Ho, Wo, C), lambda n: (n, 0, 0, 0)),
        input_output_aliases={0: 0},   # update y in place, no extra HBM buffer
        compiler_params=pltpu.CompilerParams(dimension_semantics=("parallel",)),
    )(y_pre, scale, shift)


# ----------------------------- parameter prep ------------------------------ #

def _prep_conv(w_oihw, bias, cin_pad, cout_pad):
    O, I, KH, KW = w_oihw.shape
    w = jnp.transpose(w_oihw, (2, 3, 1, 0)).reshape(KH * KW, I, O)   # (9, I, O)
    w = jnp.pad(w, ((0, 0), (0, cin_pad - I), (0, cout_pad - O)))
    b = jnp.pad(bias, (0, cout_pad - O)).reshape(1, cout_pad)
    return w.astype(jnp.float32), b.astype(jnp.float32)


def _pad_vec(v, cp):
    return jnp.pad(v, (0, cp - v.shape[0])).astype(jnp.float32)


def _bn_scale_shift(s, q, count, gamma_p, beta_p, eps):
    ssum = jnp.sum(s, axis=0).reshape(-1)                     # (Cp,)
    sqsum = jnp.sum(q, axis=0).reshape(-1)
    mean = ssum / count
    var = jnp.maximum(sqsum / count - mean * mean, 0.0)       # clamp cancellation
    inv = lax.rsqrt(var + eps)
    scale = gamma_p * inv
    shift = beta_p - mean * scale
    return scale.reshape(1, -1), shift.reshape(1, -1)


# ------------------------------- down module -------------------------------- #

def init_down_params(key, in_ch, out_ch):
    ks = jax.random.split(key, 8)
    return {
        "w1": jax.random.normal(ks[0], (out_ch, in_ch, 3, 3), jnp.float32) / jnp.sqrt(9.0 * in_ch),
        "b1": 0.01 * jax.random.normal(ks[1], (out_ch,), jnp.float32),
        "gamma1": 1.0 + 0.1 * jax.random.normal(ks[2], (out_ch,), jnp.float32),
        "beta1": 0.1 * jax.random.normal(ks[3], (out_ch,), jnp.float32),
        "w2": jax.random.normal(ks[4], (out_ch, out_ch, 3, 3), jnp.float32) / jnp.sqrt(9.0 * out_ch),
        "b2": 0.01 * jax.random.normal(ks[5], (out_ch,), jnp.float32),
        "gamma2": 1.0 + 0.1 * jax.random.normal(ks[6], (out_ch,), jnp.float32),
        "beta2": 0.1 * jax.random.normal(ks[7], (out_ch,), jnp.float32),
    }


def down_forward(params, x_nchw, eps=1e-5):
    N, Cin, Hi, Wi = x_nchw.shape
    assert Hi % 2 == 0 and Wi % 2 == 0, "MaxPool2d(2) path assumes even H, W"
    Ho, Wo = Hi // 2, Wi // 2
    out_ch = params["w1"].shape[0]
    Cp = _round_up(out_ch, _LANE)     # lane-dense channel padding (multiple of 128)

    x = jnp.transpose(x_nchw, (0, 2, 3, 1)).astype(jnp.float32)     # NCHW -> NHWC

    w1, b1 = _prep_conv(params["w1"], params["b1"], Cin, Cp)
    w2, b2 = _prep_conv(params["w2"], params["b2"], Cp, Cp)
    g1, be1 = _pad_vec(params["gamma1"], Cp), _pad_vec(params["beta1"], Cp)
    g2, be2 = _pad_vec(params["gamma2"], Cp), _pad_vec(params["beta2"], Cp)

    cnt = N * Ho * Wo

    # stage 1: maxpool + conv1 + bias (+ BN1 partial stats), all fused
    y1, s1, q1 = pool_conv_bnstats(x, w1, b1)
    sc1, sh1 = _bn_scale_shift(s1, q1, cnt, g1, be1, eps)

    # stage 2: BN1 affine + ReLU fused into conv2 (+ BN2 partial stats)
    y2, s2, q2 = bnrelu_conv_bnstats(y1, sc1, sh1, w2, b2)
    sc2, sh2 = _bn_scale_shift(s2, q2, cnt, g2, be2, eps)

    # stage 3: final BN2 affine + ReLU, in place
    out = affine_relu_inplace(y2, sc2, sh2)

    out = out[..., :out_ch]                        # drop channel padding
    return jnp.transpose(out, (0, 3, 1, 2))        # NHWC -> NCHW


# ---------------------- pure-JAX reference (for checking) ------------------- #

def _reference_down(params, x_nchw, eps=1e-5):
    x = jnp.transpose(x_nchw, (0, 2, 3, 1)).astype(jnp.float32)
    x = lax.reduce_window(x, -jnp.inf, lax.max, (1, 2, 2, 1), (1, 2, 2, 1), "VALID")

    def conv_bn_relu(x, w, b, g, be):
        wh = jnp.transpose(w, (2, 3, 1, 0))        # HWIO
        y = lax.conv_general_dilated(x, wh, (1, 1), "SAME",
                                     dimension_numbers=("NHWC", "HWIO", "NHWC"))
        y = y + b.reshape(1, 1, 1, -1)
        mean = y.mean(axis=(0, 1, 2))
        var = y.var(axis=(0, 1, 2))                # biased, as PyTorch BN training uses
        y = (y - mean) * lax.rsqrt(var + eps) * g + be
        return jnp.maximum(y, 0.0)

    y = conv_bn_relu(x, params["w1"], params["b1"], params["gamma1"], params["beta1"])
    y = conv_bn_relu(y, params["w2"], params["b2"], params["gamma2"], params["beta2"])
    return jnp.transpose(y, (0, 3, 1, 2))


if __name__ == "__main__":
    key = jax.random.PRNGKey(0)
    kx, kp = jax.random.split(key)

    in_ch, out_ch = 4, 8
    N, H, W = 2, 16, 16
    x = jax.random.normal(kx, (N, in_ch, H, W), jnp.float32)     # NCHW, like PyTorch
    params = init_down_params(kp, in_ch, out_ch)

    fwd = jax.jit(functools.partial(down_forward, params))
    out = fwd(x)
    jax.block_until_ready(out)

    assert out.shape == (N, out_ch, H // 2, W // 2), out.shape
    assert bool(jnp.all(jnp.isfinite(out)))
    assert bool(jnp.all(out >= 0.0))   # final ReLU

    ref = _reference_down(params, x)
    max_err = float(jnp.max(jnp.abs(out - ref)))
    assert max_err < 1e-1, f"mismatch vs JAX reference: {max_err}"

    print("KERNEL_OK")
</pallas_src>

<mosaic_0001>
module attributes {stable_mosaic.version = 11 : i64} {
  func.func @_pool_conv_bnstats_kernel(%arg0: i32, %arg1: memref<1x16x8x8xf32, #tpu.memory_space<vmem>>, %arg2: memref<9x4x128xf32, #tpu.memory_space<vmem>>, %arg3: memref<1x128xf32, #tpu.memory_space<vmem>>, %arg4: memref<1x8x8x128xf32, #tpu.memory_space<vmem>>, %arg5: memref<1x1x128xf32, #tpu.memory_space<vmem>>, %arg6: memref<1x1x128xf32, #tpu.memory_space<vmem>>, %arg7: memref<10x10x4xf32, #tpu.memory_space<vmem>>) attributes {dimension_semantics = [#tpu.dimension_semantics<parallel>], iteration_bounds = array<i64: 2>, scalar_prefetch = 0 : i64, scratch_operands = 1 : i64, tpu.core_type = #tpu.core_type<tc>, window_params = [{transform_indices = @transform_0, window_bounds = array<i64: 1, 16, 8, 8>}, {pipeline_mode = #tpu.pipeline_mode<synchronous>, transform_indices = @transform_1, window_bounds = array<i64: 9, 4, 128>}, {pipeline_mode = #tpu.pipeline_mode<synchronous>, transform_indices = @transform_2, window_bounds = array<i64: 1, 128>}, {transform_indices = @transform_3, window_bounds = array<i64: 1, 8, 8, 128>}, {transform_indices = @transform_4, window_bounds = array<i64: 1, 1, 128>}, {transform_indices = @transform_5, window_bounds = array<i64: 1, 1, 128>}]} {
    %c0 = arith.constant 0 : index
    %c0_0 = arith.constant 0 : index
    %c0_1 = arith.constant 0 : index
    %c0_2 = arith.constant 0 : index
    %0 = vector.load %arg1[%c0, %c0_0, %c0_1, %c0_2] : memref<1x16x8x8xf32, #tpu.memory_space<vmem>>, vector<1x16x8x8xf32>
    %1 = vector.shape_cast %0 : vector<1x16x8x8xf32> to vector<16x8x8xf32>
    %2 = vector.extract_strided_slice %1 {offsets = [0, 0, 0], sizes = [16, 8, 4], strides = [1, 1, 1]} : vector<16x8x8xf32> to vector<16x8x4xf32>
    %3 = vector.extract_strided_slice %1 {offsets = [0, 0, 4], sizes = [16, 8, 4], strides = [1, 1, 1]} : vector<16x8x8xf32> to vector<16x8x4xf32>
    %4 = arith.maximumf %2, %3 : vector<16x8x4xf32>
    %5 = vector.shape_cast %4 : vector<16x8x4xf32> to vector<8x2x8x4xf32>
    %cst = arith.constant dense<0xFF800000> : vector<8x8x4xf32>
    %6 = vector.multi_reduction <maximumf>, %5, %cst [1] : vector<8x2x8x4xf32> to vector<8x8x4xf32>
    %cst_3 = arith.constant 0.000000e+00 : f32
    %7 = vector.broadcast %cst_3 : f32 to vector<10x10x4xf32>
    %c0_4 = arith.constant 0 : index
    %c0_5 = arith.constant 0 : index
    %c0_6 = arith.constant 0 : index
    %8 = vector.load %arg7[%c0_4, %c0_5, %c0_6] : memref<10x10x4xf32, #tpu.memory_space<vmem>>, vector<10x10x4xf32>
    tpu.vector_store %arg7[%c0_4, %c0_5, %c0_6], %7 {strides = array<i32>} : memref<10x10x4xf32, #tpu.memory_space<vmem>>, vector<10x10x4xf32>,
    %c1 = arith.constant 1 : index
    %c1_7 = arith.constant 1 : index
    %c0_8 = arith.constant 0 : index
    %9 = vector.load %arg7[%c1, %c1_7, %c0_8] : memref<10x10x4xf32, #tpu.memory_space<vmem>>, vector<8x8x4xf32>
    tpu.vector_store %arg7[%c1, %c1_7, %c0_8], %6 {strides = array<i32>} : memref<10x10x4xf32, #tpu.memory_space<vmem>>, vector<8x8x4xf32>,
    %c0_9 = arith.constant 0 : index
    %c0_10 = arith.constant 0 : index
    %c0_11 = arith.constant 0 : index
    %10 = vector.load %arg7[%c0_9, %c0_10, %c0_11] : memref<10x10x4xf32, #tpu.memory_space<vmem>>, vector<10x10x4xf32>
    %cst_12 = arith.constant 0.000000e+00 : f32
    %11 = vector.broadcast %cst_12 : f32 to vector<64x128xf32>
    %12 = vector.extract_strided_slice %10 {offsets = [0, 0, 0], sizes = [8, 8, 4], strides = [1, 1, 1]} : vector<10x10x4xf32> to vector<8x8x4xf32>
    %13 = vector.shape_cast %12 : vector<8x8x4xf32> to vector<64x4xf32>
    %c0_13 = arith.constant 0 : index
    %c0_14 = arith.constant 0 : index
    %c0_15 = arith.constant 0 : index
    %14 = vector.load %arg2[%c0_13, %c0_14, %c0_15] : memref<9x4x128xf32, #tpu.memory_space<vmem>>, vector<1x4x128xf32>
    %15 = vector.shape_cast %14 : vector<1x4x128xf32> to vector<4x128xf32>
    %cst_16 = arith.constant dense<0.000000e+00> : vector<64x128xf32>
    %16 = tpu.matmul %13, %15, %cst_16 {dimension_numbers = #tpu.dot_dimension_numbers<[1], [0], [0], [1], [0, 0, 1, 1], [], []>} : vector<64x4xf32>, vector<4x128xf32>, vector<64x128xf32> -> vector<64x128xf32>
    %17 = arith.addf %11, %16 : vector<64x128xf32>
    %18 = vector.extract_strided_slice %10 {offsets = [0, 1, 0], sizes = [8, 8, 4], strides = [1, 1, 1]} : vector<10x10x4xf32> to vector<8x8x4xf32>
    %19 = vector.shape_cast %18 : vector<8x8x4xf32> to vector<64x4xf32>
    %c1_17 = arith.constant 1 : index
    %c0_18 = arith.constant 0 : index
    %c0_19 = arith.constant 0 : index
    %20 = vector.load %arg2[%c1_17, %c0_18, %c0_19] : memref<9x4x128xf32, #tpu.memory_space<vmem>>, vector<1x4x128xf32>
    %21 = vector.shape_cast %20 : vector<1x4x128xf32> to vector<4x128xf32>
    %cst_20 = arith.constant dense<0.000000e+00> : vector<64x128xf32>
    %22 = tpu.matmul %19, %21, %cst_20 {dimension_numbers = #tpu.dot_dimension_numbers<[1], [0], [0], [1], [0, 0, 1, 1], [], []>} : vector<64x4xf32>, vector<4x128xf32>, vector<64x128xf32> -> vector<64x128xf32>
    %23 = arith.addf %17, %22 : vector<64x128xf32>
    %24 = vector.extract_strided_slice %10 {offsets = [0, 2, 0], sizes = [8, 8, 4], strides = [1, 1, 1]} : vector<10x10x4xf32> to vector<8x8x4xf32>
    %25 = vector.shape_cast %24 : vector<8x8x4xf32> to vector<64x4xf32>
    %c2 = arith.constant 2 : index
    %c0_21 = arith.constant 0 : index
    %c0_22 = arith.constant 0 : index
    %26 = vector.load %arg2[%c2, %c0_21, %c0_22] : memref<9x4x128xf32, #tpu.memory_space<vmem>>, vector<1x4x128xf32>
    %27 = vector.shape_cast %26 : vector<1x4x128xf32> to vector<4x128xf32>
    %cst_23 = arith.constant dense<0.000000e+00> : vector<64x128xf32>
    %28 = tpu.matmul %25, %27, %cst_23 {dimension_numbers = #tpu.dot_dimension_numbers<[1], [0], [0], [1], [0, 0, 1, 1], [], []>} : vector<64x4xf32>, vector<4x128xf32>, vector<64x128xf32> -> vector<64x128xf32>
    %29 = arith.addf %23, %28 : vector<64x128xf32>
    %30 = vector.extract_strided_slice %10 {offsets = [1, 0, 0], sizes = [8, 8, 4], strides = [1, 1, 1]} : vector<10x10x4xf32> to vector<8x8x4xf32>
    %31 = vector.shape_cast %30 : vector<8x8x4xf32> to vector<64x4xf32>
    %c3 = arith.constant 3 : index
    %c0_24 = arith.constant 0 : index
    %c0_25 = arith.constant 0 : index
    %32 = vector.load %arg2[%c3, %c0_24, %c0_25] : memref<9x4x128xf32, #tpu.memory_space<vmem>>, vector<1x4x128xf32>
    %33 = vector.shape_cast %32 : vector<1x4x128xf32> to vector<4x128xf32>
    %cst_26 = arith.constant dense<0.000000e+00> : vector<64x128xf32>
    %34 = tpu.matmul %31, %33, %cst_26 {dimension_numbers = #tpu.dot_dimension_numbers<[1], [0], [0], [1], [0, 0, 1, 1], [], []>} : vector<64x4xf32>, vector<4x128xf32>, vector<64x128xf32> -> vector<64x128xf32>
    %35 = arith.addf %29, %34 : vector<64x128xf32>
    %36 = vector.extract_strided_slice %10 {offsets = [1, 1, 0], sizes = [8, 8, 4], strides = [1, 1, 1]} : vector<10x10x4xf32> to vector<8x8x4xf32>
    %37 = vector.shape_cast %36 : vector<8x8x4xf32> to vector<64x4xf32>
    %c4 = arith.constant 4 : index
    %c0_27 = arith.constant 0 : index
    %c0_28 = arith.constant 0 : index
    %38 = vector.load %arg2[%c4, %c0_27, %c0_28] : memref<9x4x128xf32, #tpu.memory_space<vmem>>, vector<1x4x128xf32>
    %39 = vector.shape_cast %38 : vector<1x4x128xf32> to vector<4x128xf32>
    %cst_29 = arith.constant dense<0.000000e+00> : vector<64x128xf32>
    %40 = tpu.matmul %37, %39, %cst_29 {dimension_numbers = #tpu.dot_dimension_numbers<[1], [0], [0], [1], [0, 0, 1, 1], [], []>} : vector<64x4xf32>, vector<4x128xf32>, vector<64x128xf32> -> vector<64x128xf32>
    %41 = arith.addf %35, %40 : vector<64x128xf32>
    %42 = vector.extract_strided_slice %10 {offsets = [1, 2, 0], sizes = [8, 8, 4], strides = [1, 1, 1]} : vector<10x10x4xf32> to vector<8x8x4xf32>
    %43 = vector.shape_cast %42 : vector<8x8x4xf32> to vector<64x4xf32>
    %c5 = arith.constant 5 : index
    %c0_30 = arith.constant 0 : index
    %c0_31 = arith.constant 0 : index
    %44 = vector.load %arg2[%c5, %c0_30, %c0_31] : memref<9x4x128xf32, #tpu.memory_space<vmem>>, vector<1x4x128xf32>
    %45 = vector.shape_cast %44 : vector<1x4x128xf32> to vector<4x128xf32>
    %cst_32 = arith.constant dense<0.000000e+00> : vector<64x128xf32>
    %46 = tpu.matmul %43, %45, %cst_32 {dimension_numbers = #tpu.dot_dimension_numbers<[1], [0], [0], [1], [0, 0, 1, 1], [], []>} : vector<64x4xf32>, vector<4x128xf32>, vector<64x128xf32> -> vector<64x128xf32>
    %47 = arith.addf %41, %46 : vector<64x128xf32>
    %48 = vector.extract_strided_slice %10 {offsets = [2, 0, 0], sizes = [8, 8, 4], strides = [1, 1, 1]} : vector<10x10x4xf32> to vector<8x8x4xf32>
    %49 = vector.shape_cast %48 : vector<8x8x4xf32> to vector<64x4xf32>
    %c6 = arith.constant 6 : index
    %c0_33 = arith.constant 0 : index
    %c0_34 = arith.constant 0 : index
    %50 = vector.load %arg2[%c6, %c0_33, %c0_34] : memref<9x4x128xf32, #tpu.memory_space<vmem>>, vector<1x4x128xf32>
    %51 = vector.shape_cast %50 : vector<1x4x128xf32> to vector<4x128xf32>
    %cst_35 = arith.constant dense<0.000000e+00> : vector<64x128xf32>
    %52 = tpu.matmul %49, %51, %cst_35 {dimension_numbers = #tpu.dot_dimension_numbers<[1], [0], [0], [1], [0, 0, 1, 1], [], []>} : vector<64x4xf32>, vector<4x128xf32>, vector<64x128xf32> -> vector<64x128xf32>
    %53 = arith.addf %47, %52 : vector<64x128xf32>
    %54 = vector.extract_strided_slice %10 {offsets = [2, 1, 0], sizes = [8, 8, 4], strides = [1, 1, 1]} : vector<10x10x4xf32> to vector<8x8x4xf32>
    %55 = vector.shape_cast %54 : vector<8x8x4xf32> to vector<64x4xf32>
    %c7 = arith.constant 7 : index
    %c0_36 = arith.constant 0 : index
    %c0_37 = arith.constant 0 : index
    %56 = vector.load %arg2[%c7, %c0_36, %c0_37] : memref<9x4x128xf32, #tpu.memory_space<vmem>>, vector<1x4x128xf32>
    %57 = vector.shape_cast %56 : vector<1x4x128xf32> to vector<4x128xf32>
    %cst_38 = arith.constant dense<0.000000e+00> : vector<64x128xf32>
    %58 = tpu.matmul %55, %57, %cst_38 {dimension_numbers = #tpu.dot_dimension_numbers<[1], [0], [0], [1], [0, 0, 1, 1], [], []>} : vector<64x4xf32>, vector<4x128xf32>, vector<64x128xf32> -> vector<64x128xf32>
    %59 = arith.addf %53, %58 : vector<64x128xf32>
    %60 = vector.extract_strided_slice %10 {offsets = [2, 2, 0], sizes = [8, 8, 4], strides = [1, 1, 1]} : vector<10x10x4xf32> to vector<8x8x4xf32>
    %61 = vector.shape_cast %60 : vector<8x8x4xf32> to vector<64x4xf32>
    %c8 = arith.constant 8 : index
    %c0_39 = arith.constant 0 : index
    %c0_40 = arith.constant 0 : index
    %62 = vector.load %arg2[%c8, %c0_39, %c0_40] : memref<9x4x128xf32, #tpu.memory_space<vmem>>, vector<1x4x128xf32>
    %63 = vector.shape_cast %62 : vector<1x4x128xf32> to vector<4x128xf32>
    %cst_41 = arith.constant dense<0.000000e+00> : vector<64x128xf32>
    %64 = tpu.matmul %61, %63, %cst_41 {dimension_numbers = #tpu.dot_dimension_numbers<[1], [0], [0], [1], [0, 0, 1, 1], [], []>} : vector<64x4xf32>, vector<4x128xf32>, vector<64x128xf32> -> vector<64x128xf32>
    %65 = arith.addf %59, %64 : vector<64x128xf32>
    %c0_42 = arith.constant 0 : index
    %c0_43 = arith.constant 0 : index
    %66 = vector.load %arg3[%c0_42, %c0_43] : memref<1x128xf32, #tpu.memory_space<vmem>>, vector<1x128xf32>
    %67 = vector.broadcast %66 : vector<1x128xf32> to vector<64x128xf32>
    %68 = arith.addf %65, %67 : vector<64x128xf32>
    %69 = vector.shape_cast %68 : vector<64x128xf32> to vector<8x8x128xf32>
    %c0_44 = arith.constant 0 : index
    %c0_45 = arith.constant 0 : index
    %c0_46 = arith.constant 0 : index
    %c0_47 = arith.constant 0 : index
    %70 = vector.load %arg4[%c0_44, %c0_45, %c0_46, %c0_47] : memref<1x8x8x128xf32, #tpu.memory_space<vmem>>, vector<1x8x8x128xf32>
    %71 = vector.shape_cast %70 : vector<1x8x8x128xf32> to vector<8x8x128xf32>
    %72 = vector.shape_cast %69 : vector<8x8x128xf32> to vector<1x8x8x128xf32>
    tpu.vector_store %arg4[%c0_44, %c0_45, %c0_46, %c0_47], %72 {strides = array<i32>} : memref<1x8x8x128xf32, #tpu.memory_space<vmem>>, vector<1x8x8x128xf32>,
    %cst_48 = arith.constant dense<0.000000e+00> : vector<128xf32>
    %73 = vector.multi_reduction <add>, %68, %cst_48 [0] : vector<64x128xf32> to vector<128xf32>
    %74 = vector.shape_cast %73 : vector<128xf32> to vector<1x128xf32>
    %c0_49 = arith.constant 0 : index
    %c0_50 = arith.constant 0 : index
    %c0_51 = arith.constant 0 : index
    %75 = vector.load %arg5[%c0_49, %c0_50, %c0_51] : memref<1x1x128xf32, #tpu.memory_space<vmem>>, vector<1x1x128xf32>
    %76 = vector.shape_cast %75 : vector<1x1x128xf32> to vector<1x128xf32>
    %77 = vector.shape_cast %74 : vector<1x128xf32> to vector<1x1x128xf32>
    tpu.vector_store %arg5[%c0_49, %c0_50, %c0_51], %77 {strides = array<i32>} : memref<1x1x128xf32, #tpu.memory_space<vmem>>, vector<1x1x128xf32>,
    %78 = arith.mulf %68, %68 : vector<64x128xf32>
    %cst_52 = arith.constant dense<0.000000e+00> : vector<128xf32>
    %79 = vector.multi_reduction <add>, %78, %cst_52 [0] : vector<64x128xf32> to vector<128xf32>
    %80 = vector.shape_cast %79 : vector<128xf32> to vector<1x128xf32>
    %c0_53 = arith.constant 0 : index
    %c0_54 = arith.constant 0 : index
    %c0_55 = arith.constant 0 : index
    %81 = vector.load %arg6[%c0_53, %c0_54, %c0_55] : memref<1x1x128xf32, #tpu.memory_space<vmem>>, vector<1x1x128xf32>
    %82 = vector.shape_cast %81 : vector<1x1x128xf32> to vector<1x128xf32>
    %83 = vector.shape_cast %80 : vector<1x128xf32> to vector<1x1x128xf32>
    tpu.vector_store %arg6[%c0_53, %c0_54, %c0_55], %83 {strides = array<i32>} : memref<1x1x128xf32, #tpu.memory_space<vmem>>, vector<1x1x128xf32>,
    return
  }
  func.func @transform_0(%arg0: i32) -> (i32, i32, i32, i32) {
    %c0_i32 = arith.constant 0 : i32
    %c0_i32_0 = arith.constant 0 : i32
    %c0_i32_1 = arith.constant 0 : i32
    %c0_i32_2 = arith.constant 0 : i32
    return %arg0, %c0_i32, %c0_i32_0, %c0_i32_1 : i32, i32, i32, i32
  }
  func.func @transform_1(%arg0: i32) -> (i32, i32, i32) {
    %c0_i32 = arith.constant 0 : i32
    %c0_i32_0 = arith.constant 0 : i32
    %c0_i32_1 = arith.constant 0 : i32
    %c0_i32_2 = arith.constant 0 : i32
    return %c0_i32, %c0_i32_0, %c0_i32_1 : i32, i32, i32
  }
  func.func @transform_2(%arg0: i32) -> (i32, i32) {
    %c0_i32 = arith.constant 0 : i32
    %c0_i32_0 = arith.constant 0 : i32
    %c0_i32_1 = arith.constant 0 : i32
    return %c0_i32, %c0_i32_0 : i32, i32
  }
  func.func @transform_3(%arg0: i32) -> (i32, i32, i32, i32) {
    %c0_i32 = arith.constant 0 : i32
    %c0_i32_0 = arith.constant 0 : i32
    %c0_i32_1 = arith.constant 0 : i32
    %c0_i32_2 = arith.constant 0 : i32
    return %arg0, %c0_i32, %c0_i32_0, %c0_i32_1 : i32, i32, i32, i32
  }
  func.func @transform_4(%arg0: i32) -> (i32, i32, i32) {
    %c0_i32 = arith.constant 0 : i32
    %c0_i32_0 = arith.constant 0 : i32
    %c0_i32_1 = arith.constant 0 : i32
    return %arg0, %c0_i32, %c0_i32_0 : i32, i32, i32
  }
  func.func @transform_5(%arg0: i32) -> (i32, i32, i32) {
    %c0_i32 = arith.constant 0 : i32
    %c0_i32_0 = arith.constant 0 : i32
    %c0_i32_1 = arith.constant 0 : i32
    return %arg0, %c0_i32, %c0_i32_0 : i32, i32, i32
  }
}

module attributes {stable_mosaic.version = 11 : i64} {
  func.func @_bnrelu_conv_bnstats_kernel(%arg0: i32, %arg1: memref<1x8x8x128xf32, #tpu.memory_space<vmem>>, %arg2: memref<1x128xf32, #tpu.memory_space<vmem>>, %arg3: memref<1x128xf32, #tpu.memory_space<vmem>>, %arg4: memref<9x128x128xf32, #tpu.memory_space<vmem>>, %arg5: memref<1x128xf32, #tpu.memory_space<vmem>>, %arg6: memref<1x8x8x128xf32, #tpu.memory_space<vmem>>, %arg7: memref<1x1x128xf32, #tpu.memory_space<vmem>>, %arg8: memref<1x1x128xf32, #tpu.memory_space<vmem>>, %arg9: memref<10x10x128xf32, #tpu.memory_space<vmem>>) attributes {dimension_semantics = [#tpu.dimension_semantics<parallel>], iteration_bounds = array<i64: 2>, scalar_prefetch = 0 : i64, scratch_operands = 1 : i64, tpu.core_type = #tpu.core_type<tc>, window_params = [{transform_indices = @transform_0, window_bounds = array<i64: 1, 8, 8, 128>}, {pipeline_mode = #tpu.pipeline_mode<synchronous>, transform_indices = @transform_1, window_bounds = array<i64: 1, 128>}, {pipeline_mode = #tpu.pipeline_mode<synchronous>, transform_indices = @transform_2, window_bounds = array<i64: 1, 128>}, {pipeline_mode = #tpu.pipeline_mode<synchronous>, transform_indices = @transform_3, window_bounds = array<i64: 9, 128, 128>}, {pipeline_mode = #tpu.pipeline_mode<synchronous>, transform_indices = @transform_4, window_bounds = array<i64: 1, 128>}, {transform_indices = @transform_5, window_bounds = array<i64: 1, 8, 8, 128>}, {transform_indices = @transform_6, window_bounds = array<i64: 1, 1, 128>}, {transform_indices = @transform_7, window_bounds = array<i64: 1, 1, 128>}]} {
    %c0 = arith.constant 0 : index
    %c0_0 = arith.constant 0 : index
    %c0_1 = arith.constant 0 : index
    %c0_2 = arith.constant 0 : index
    %0 = vector.load %arg1[%c0, %c0_0, %c0_1, %c0_2] : memref<1x8x8x128xf32, #tpu.memory_space<vmem>>, vector<1x8x8x128xf32>
    %1 = vector.shape_cast %0 : vector<1x8x8x128xf32> to vector<8x8x128xf32>
    %c0_3 = arith.constant 0 : index
    %c0_4 = arith.constant 0 : index
    %2 = vector.load %arg2[%c0_3, %c0_4] : memref<1x128xf32, #tpu.memory_space<vmem>>, vector<1x128xf32>
    %3 = vector.shape_cast %2 : vector<1x128xf32> to vector<1x1x128xf32>
    %4 = vector.broadcast %3 : vector<1x1x128xf32> to vector<8x8x128xf32>
    %5 = arith.mulf %1, %4 : vector<8x8x128xf32>
    %c0_5 = arith.constant 0 : index
    %c0_6 = arith.constant 0 : index
    %6 = vector.load %arg3[%c0_5, %c0_6] : memref<1x128xf32, #tpu.memory_space<vmem>>, vector<1x128xf32>
    %7 = vector.shape_cast %6 : vector<1x128xf32> to vector<1x1x128xf32>
    %8 = vector.broadcast %7 : vector<1x1x128xf32> to vector<8x8x128xf32>
    %9 = arith.addf %5, %8 : vector<8x8x128xf32>
    %cst = arith.constant 0.000000e+00 : f32
    %10 = vector.broadcast %cst : f32 to vector<8x8x128xf32>
    %11 = arith.maximumf %9, %10 : vector<8x8x128xf32>
    %cst_7 = arith.constant 0.000000e+00 : f32
    %12 = vector.broadcast %cst_7 : f32 to vector<10x10x128xf32>
    %c0_8 = arith.constant 0 : index
    %c0_9 = arith.constant 0 : index
    %c0_10 = arith.constant 0 : index
    %13 = vector.load %arg9[%c0_8, %c0_9, %c0_10] : memref<10x10x128xf32, #tpu.memory_space<vmem>>, vector<10x10x128xf32>
    tpu.vector_store %arg9[%c0_8, %c0_9, %c0_10], %12 {strides = array<i32>} : memref<10x10x128xf32, #tpu.memory_space<vmem>>, vector<10x10x128xf32>,
    %c1 = arith.constant 1 : index
    %c1_11 = arith.constant 1 : index
    %c0_12 = arith.constant 0 : index
    %14 = vector.load %arg9[%c1, %c1_11, %c0_12] : memref<10x10x128xf32, #tpu.memory_space<vmem>>, vector<8x8x128xf32>
    tpu.vector_store %arg9[%c1, %c1_11, %c0_12], %11 {strides = array<i32>} : memref<10x10x128xf32, #tpu.memory_space<vmem>>, vector<8x8x128xf32>,
    %c0_13 = arith.constant 0 : index
    %c0_14 = arith.constant 0 : index
    %c0_15 = arith.constant 0 : index
    %15 = vector.load %arg9[%c0_13, %c0_14, %c0_15] : memref<10x10x128xf32, #tpu.memory_space<vmem>>, vector<10x10x128xf32>
    %cst_16 = arith.constant 0.000000e+00 : f32
    %16 = vector.broadcast %cst_16 : f32 to vector<64x128xf32>
    %17 = vector.extract_strided_slice %15 {offsets = [0, 0, 0], sizes = [8, 8, 128], strides = [1, 1, 1]} : vector<10x10x128xf32> to vector<8x8x128xf32>
    %18 = vector.shape_cast %17 : vector<8x8x128xf32> to vector<64x128xf32>
    %c0_17 = arith.constant 0 : index
    %c0_18 = arith.constant 0 : index
    %c0_19 = arith.constant 0 : index
    %19 = vector.load %arg4[%c0_17, %c0_18, %c0_19] : memref<9x128x128xf32, #tpu.memory_space<vmem>>, vector<1x128x128xf32>
    %20 = vector.shape_cast %19 : vector<1x128x128xf32> to vector<128x128xf32>
    %cst_20 = arith.constant dense<0.000000e+00> : vector<64x128xf32>
    %21 = tpu.matmul %18, %20, %cst_20 {dimension_numbers = #tpu.dot_dimension_numbers<[1], [0], [0], [1], [0, 0, 1, 1], [], []>} : vector<64x128xf32>, vector<128x128xf32>, vector<64x128xf32> -> vector<64x128xf32>
    %22 = arith.addf %16, %21 : vector<64x128xf32>
    %23 = vector.extract_strided_slice %15 {offsets = [0, 1, 0], sizes = [8, 8, 128], strides = [1, 1, 1]} : vector<10x10x128xf32> to vector<8x8x128xf32>
    %24 = vector.shape_cast %23 : vector<8x8x128xf32> to vector<64x128xf32>
    %c1_21 = arith.constant 1 : index
    %c0_22 = arith.constant 0 : index
    %c0_23 = arith.constant 0 : index
    %25 = vector.load %arg4[%c1_21, %c0_22, %c0_23] : memref<9x128x128xf32, #tpu.memory_space<vmem>>, vector<1x128x128xf32>
    %26 = vector.shape_cast %25 : vector<1x128x128xf32> to vector<128x128xf32>
    %cst_24 = arith.constant dense<0.000000e+00> : vector<64x128xf32>
    %27 = tpu.matmul %24, %26, %cst_24 {dimension_numbers = #tpu.dot_dimension_numbers<[1], [0], [0], [1], [0, 0, 1, 1], [], []>} : vector<64x128xf32>, vector<128x128xf32>, vector<64x128xf32> -> vector<64x128xf32>
    %28 = arith.addf %22, %27 : vector<64x128xf32>
    %29 = vector.extract_strided_slice %15 {offsets = [0, 2, 0], sizes = [8, 8, 128], strides = [1, 1, 1]} : vector<10x10x128xf32> to vector<8x8x128xf32>
    %30 = vector.shape_cast %29 : vector<8x8x128xf32> to vector<64x128xf32>
    %c2 = arith.constant 2 : index
    %c0_25 = arith.constant 0 : index
    %c0_26 = arith.constant 0 : index
    %31 = vector.load %arg4[%c2, %c0_25, %c0_26] : memref<9x128x128xf32, #tpu.memory_space<vmem>>, vector<1x128x128xf32>
    %32 = vector.shape_cast %31 : vector<1x128x128xf32> to vector<128x128xf32>
    %cst_27 = arith.constant dense<0.000000e+00> : vector<64x128xf32>
    %33 = tpu.matmul %30, %32, %cst_27 {dimension_numbers = #tpu.dot_dimension_numbers<[1], [0], [0], [1], [0, 0, 1, 1], [], []>} : vector<64x128xf32>, vector<128x128xf32>, vector<64x128xf32> -> vector<64x128xf32>
    %34 = arith.addf %28, %33 : vector<64x128xf32>
    %35 = vector.extract_strided_slice %15 {offsets = [1, 0, 0], sizes = [8, 8, 128], strides = [1, 1, 1]} : vector<10x10x128xf32> to vector<8x8x128xf32>
    %36 = vector.shape_cast %35 : vector<8x8x128xf32> to vector<64x128xf32>
    %c3 = arith.constant 3 : index
    %c0_28 = arith.constant 0 : index
    %c0_29 = arith.constant 0 : index
    %37 = vector.load %arg4[%c3, %c0_28, %c0_29] : memref<9x128x128xf32, #tpu.memory_space<vmem>>, vector<1x128x128xf32>
    %38 = vector.shape_cast %37 : vector<1x128x128xf32> to vector<128x128xf32>
    %cst_30 = arith.constant dense<0.000000e+00> : vector<64x128xf32>
    %39 = tpu.matmul %36, %38, %cst_30 {dimension_numbers = #tpu.dot_dimension_numbers<[1], [0], [0], [1], [0, 0, 1, 1], [], []>} : vector<64x128xf32>, vector<128x128xf32>, vector<64x128xf32> -> vector<64x128xf32>
    %40 = arith.addf %34, %39 : vector<64x128xf32>
    %41 = vector.extract_strided_slice %15 {offsets = [1, 1, 0], sizes = [8, 8, 128], strides = [1, 1, 1]} : vector<10x10x128xf32> to vector<8x8x128xf32>
    %42 = vector.shape_cast %41 : vector<8x8x128xf32> to vector<64x128xf32>
    %c4 = arith.constant 4 : index
    %c0_31 = arith.constant 0 : index
    %c0_32 = arith.constant 0 : index
    %43 = vector.load %arg4[%c4, %c0_31, %c0_32] : memref<9x128x128xf32, #tpu.memory_space<vmem>>, vector<1x128x128xf32>
    %44 = vector.shape_cast %43 : vector<1x128x128xf32> to vector<128x128xf32>
    %cst_33 = arith.constant dense<0.000000e+00> : vector<64x128xf32>
    %45 = tpu.matmul %42, %44, %cst_33 {dimension_numbers = #tpu.dot_dimension_numbers<[1], [0], [0], [1], [0, 0, 1, 1], [], []>} : vector<64x128xf32>, vector<128x128xf32>, vector<64x128xf32> -> vector<64x128xf32>
    %46 = arith.addf %40, %45 : vector<64x128xf32>
    %47 = vector.extract_strided_slice %15 {offsets = [1, 2, 0], sizes = [8, 8, 128], strides = [1, 1, 1]} : vector<10x10x128xf32> to vector<8x8x128xf32>
    %48 = vector.shape_cast %47 : vector<8x8x128xf32> to vector<64x128xf32>
    %c5 = arith.constant 5 : index
    %c0_34 = arith.constant 0 : index
    %c0_35 = arith.constant 0 : index
    %49 = vector.load %arg4[%c5, %c0_34, %c0_35] : memref<9x128x128xf32, #tpu.memory_space<vmem>>, vector<1x128x128xf32>
    %50 = vector.shape_cast %49 : vector<1x128x128xf32> to vector<128x128xf32>
    %cst_36 = arith.constant dense<0.000000e+00> : vector<64x128xf32>
    %51 = tpu.matmul %48, %50, %cst_36 {dimension_numbers = #tpu.dot_dimension_numbers<[1], [0], [0], [1], [0, 0, 1, 1], [], []>} : vector<64x128xf32>, vector<128x128xf32>, vector<64x128xf32> -> vector<64x128xf32>
    %52 = arith.addf %46, %51 : vector<64x128xf32>
    %53 = vector.extract_strided_slice %15 {offsets = [2, 0, 0], sizes = [8, 8, 128], strides = [1, 1, 1]} : vector<10x10x128xf32> to vector<8x8x128xf32>
    %54 = vector.shape_cast %53 : vector<8x8x128xf32> to vector<64x128xf32>
    %c6 = arith.constant 6 : index
    %c0_37 = arith.constant 0 : index
    %c0_38 = arith.constant 0 : index
    %55 = vector.load %arg4[%c6, %c0_37, %c0_38] : memref<9x128x128xf32, #tpu.memory_space<vmem>>, vector<1x128x128xf32>
    %56 = vector.shape_cast %55 : vector<1x128x128xf32> to vector<128x128xf32>
    %cst_39 = arith.constant dense<0.000000e+00> : vector<64x128xf32>
    %57 = tpu.matmul %54, %56, %cst_39 {dimension_numbers = #tpu.dot_dimension_numbers<[1], [0], [0], [1], [0, 0, 1, 1], [], []>} : vector<64x128xf32>, vector<128x128xf32>, vector<64x128xf32> -> vector<64x128xf32>
    %58 = arith.addf %52, %57 : vector<64x128xf32>
    %59 = vector.extract_strided_slice %15 {offsets = [2, 1, 0], sizes = [8, 8, 128], strides = [1, 1, 1]} : vector<10x10x128xf32> to vector<8x8x128xf32>
    %60 = vector.shape_cast %59 : vector<8x8x128xf32> to vector<64x128xf32>
    %c7 = arith.constant 7 : index
    %c0_40 = arith.constant 0 : index
    %c0_41 = arith.constant 0 : index
    %61 = vector.load %arg4[%c7, %c0_40, %c0_41] : memref<9x128x128xf32, #tpu.memory_space<vmem>>, vector<1x128x128xf32>
    %62 = vector.shape_cast %61 : vector<1x128x128xf32> to vector<128x128xf32>
    %cst_42 = arith.constant dense<0.000000e+00> : vector<64x128xf32>
    %63 = tpu.matmul %60, %62, %cst_42 {dimension_numbers = #tpu.dot_dimension_numbers<[1], [0], [0], [1], [0, 0, 1, 1], [], []>} : vector<64x128xf32>, vector<128x128xf32>, vector<64x128xf32> -> vector<64x128xf32>
    %64 = arith.addf %58, %63 : vector<64x128xf32>
    %65 = vector.extract_strided_slice %15 {offsets = [2, 2, 0], sizes = [8, 8, 128], strides = [1, 1, 1]} : vector<10x10x128xf32> to vector<8x8x128xf32>
    %66 = vector.shape_cast %65 : vector<8x8x128xf32> to vector<64x128xf32>
    %c8 = arith.constant 8 : index
    %c0_43 = arith.constant 0 : index
    %c0_44 = arith.constant 0 : index
    %67 = vector.load %arg4[%c8, %c0_43, %c0_44] : memref<9x128x128xf32, #tpu.memory_space<vmem>>, vector<1x128x128xf32>
    %68 = vector.shape_cast %67 : vector<1x128x128xf32> to vector<128x128xf32>
    %cst_45 = arith.constant dense<0.000000e+00> : vector<64x128xf32>
    %69 = tpu.matmul %66, %68, %cst_45 {dimension_numbers = #tpu.dot_dimension_numbers<[1], [0], [0], [1], [0, 0, 1, 1], [], []>} : vector<64x128xf32>, vector<128x128xf32>, vector<64x128xf32> -> vector<64x128xf32>
    %70 = arith.addf %64, %69 : vector<64x128xf32>
    %c0_46 = arith.constant 0 : index
    %c0_47 = arith.constant 0 : index
    %71 = vector.load %arg5[%c0_46, %c0_47] : memref<1x128xf32, #tpu.memory_space<vmem>>, vector<1x128xf32>
    %72 = vector.broadcast %71 : vector<1x128xf32> to vector<64x128xf32>
    %73 = arith.addf %70, %72 : vector<64x128xf32>
    %74 = vector.shape_cast %73 : vector<64x128xf32> to vector<8x8x128xf32>
    %c0_48 = arith.constant 0 : index
    %c0_49 = arith.constant 0 : index
    %c0_50 = arith.constant 0 : index
    %c0_51 = arith.constant 0 : index
    %75 = vector.load %arg6[%c0_48, %c0_49, %c0_50, %c0_51] : memref<1x8x8x128xf32, #tpu.memory_space<vmem>>, vector<1x8x8x128xf32>
    %76 = vector.shape_cast %75 : vector<1x8x8x128xf32> to vector<8x8x128xf32>
    %77 = vector.shape_cast %74 : vector<8x8x128xf32> to vector<1x8x8x128xf32>
    tpu.vector_store %arg6[%c0_48, %c0_49, %c0_50, %c0_51], %77 {strides = array<i32>} : memref<1x8x8x128xf32, #tpu.memory_space<vmem>>, vector<1x8x8x128xf32>,
    %cst_52 = arith.constant dense<0.000000e+00> : vector<128xf32>
    %78 = vector.multi_reduction <add>, %73, %cst_52 [0] : vector<64x128xf32> to vector<128xf32>
    %79 = vector.shape_cast %78 : vector<128xf32> to vector<1x128xf32>
    %c0_53 = arith.constant 0 : index
    %c0_54 = arith.constant 0 : index
    %c0_55 = arith.constant 0 : index
    %80 = vector.load %arg7[%c0_53, %c0_54, %c0_55] : memref<1x1x128xf32, #tpu.memory_space<vmem>>, vector<1x1x128xf32>
    %81 = vector.shape_cast %80 : vector<1x1x128xf32> to vector<1x128xf32>
    %82 = vector.shape_cast %79 : vector<1x128xf32> to vector<1x1x128xf32>
    tpu.vector_store %arg7[%c0_53, %c0_54, %c0_55], %82 {strides = array<i32>} : memref<1x1x128xf32, #tpu.memory_space<vmem>>, vector<1x1x128xf32>,
    %83 = arith.mulf %73, %73 : vector<64x128xf32>
    %cst_56 = arith.constant dense<0.000000e+00> : vector<128xf32>
    %84 = vector.multi_reduction <add>, %83, %cst_56 [0] : vector<64x128xf32> to vector<128xf32>
    %85 = vector.shape_cast %84 : vector<128xf32> to vector<1x128xf32>
    %c0_57 = arith.constant 0 : index
    %c0_58 = arith.constant 0 : index
    %c0_59 = arith.constant 0 : index
    %86 = vector.load %arg8[%c0_57, %c0_58, %c0_59] : memref<1x1x128xf32, #tpu.memory_space<vmem>>, vector<1x1x128xf32>
    %87 = vector.shape_cast %86 : vector<1x1x128xf32> to vector<1x128xf32>
    %88 = vector.shape_cast %85 : vector<1x128xf32> to vector<1x1x128xf32>
    tpu.vector_store %arg8[%c0_57, %c0_58, %c0_59], %88 {strides = array<i32>} : memref<1x1x128xf32, #tpu.memory_space<vmem>>, vector<1x1x128xf32>,
    return
  }
  func.func @transform_0(%arg0: i32) -> (i32, i32, i32, i32) {
    %c0_i32 = arith.constant 0 : i32
    %c0_i32_0 = arith.constant 0 : i32
    %c0_i32_1 = arith.constant 0 : i32
    %c0_i32_2 = arith.constant 0 : i32
    return %arg0, %c0_i32, %c0_i32_0, %c0_i32_1 : i32, i32, i32, i32
  }
  func.func @transform_1(%arg0: i32) -> (i32, i32) {
    %c0_i32 = arith.constant 0 : i32
    %c0_i32_0 = arith.constant 0 : i32
    %c0_i32_1 = arith.constant 0 : i32
    return %c0_i32, %c0_i32_0 : i32, i32
  }
  func.func @transform_2(%arg0: i32) -> (i32, i32) {
    %c0_i32 = arith.constant 0 : i32
    %c0_i32_0 = arith.constant 0 : i32
    %c0_i32_1 = arith.constant 0 : i32
    return %c0_i32, %c0_i32_0 : i32, i32
  }
  func.func @transform_3(%arg0: i32) -> (i32, i32, i32) {
    %c0_i32 = arith.constant 0 : i32
    %c0_i32_0 = arith.constant 0 : i32
    %c0_i32_1 = arith.constant 0 : i32
    %c0_i32_2 = arith.constant 0 : i32
    return %c0_i32, %c0_i32_0, %c0_i32_1 : i32, i32, i32
  }
  func.func @transform_4(%arg0: i32) -> (i32, i32) {
    %c0_i32 = arith.constant 0 : i32
    %c0_i32_0 = arith.constant 0 : i32
    %c0_i32_1 = arith.constant 0 : i32
    return %c0_i32, %c0_i32_0 : i32, i32
  }
  func.func @transform_5(%arg0: i32) -> (i32, i32, i32, i32) {
    %c0_i32 = arith.constant 0 : i32
    %c0_i32_0 = arith.constant 0 : i32
    %c0_i32_1 = arith.constant 0 : i32
    %c0_i32_2 = arith.constant 0 : i32
    return %arg0, %c0_i32, %c0_i32_0, %c0_i32_1 : i32, i32, i32, i32
  }
  func.func @transform_6(%arg0: i32) -> (i32, i32, i32) {
    %c0_i32 = arith.constant 0 : i32
    %c0_i32_0 = arith.constant 0 : i32
    %c0_i32_1 = arith.constant 0 : i32
    return %arg0, %c0_i32, %c0_i32_0 : i32, i32, i32
  }
  func.func @transform_7(%arg0: i32) -> (i32, i32, i32) {
    %c0_i32 = arith.constant 0 : i32
    %c0_i32_0 = arith.constant 0 : i32
    %c0_i32_1 = arith.constant 0 : i32
    return %arg0, %c0_i32, %c0_i32_0 : i32, i32, i32
  }
}

module attributes {stable_mosaic.version = 11 : i64} {
  func.func @_affine_relu_kernel(%arg0: i32, %arg1: memref<1x8x8x128xf32, #tpu.memory_space<vmem>>, %arg2: memref<1x128xf32, #tpu.memory_space<vmem>>, %arg3: memref<1x128xf32, #tpu.memory_space<vmem>>, %arg4: memref<1x8x8x128xf32, #tpu.memory_space<vmem>>) attributes {dimension_semantics = [#tpu.dimension_semantics<parallel>], iteration_bounds = array<i64: 2>, scalar_prefetch = 0 : i64, scratch_operands = 0 : i64, tpu.core_type = #tpu.core_type<tc>, window_params = [{transform_indices = @transform_0, window_bounds = array<i64: 1, 8, 8, 128>}, {pipeline_mode = #tpu.pipeline_mode<synchronous>, transform_indices = @transform_1, window_bounds = array<i64: 1, 128>}, {pipeline_mode = #tpu.pipeline_mode<synchronous>, transform_indices = @transform_2, window_bounds = array<i64: 1, 128>}, {transform_indices = @transform_3, window_bounds = array<i64: 1, 8, 8, 128>}]} {
    %c0 = arith.constant 0 : index
    %c0_0 = arith.constant 0 : index
    %c0_1 = arith.constant 0 : index
    %c0_2 = arith.constant 0 : index
    %0 = vector.load %arg1[%c0, %c0_0, %c0_1, %c0_2] : memref<1x8x8x128xf32, #tpu.memory_space<vmem>>, vector<1x8x8x128xf32>
    %1 = vector.shape_cast %0 : vector<1x8x8x128xf32> to vector<8x8x128xf32>
    %c0_3 = arith.constant 0 : index
    %c0_4 = arith.constant 0 : index
    %2 = vector.load %arg2[%c0_3, %c0_4] : memref<1x128xf32, #tpu.memory_space<vmem>>, vector<1x128xf32>
    %3 = vector.shape_cast %2 : vector<1x128xf32> to vector<1x1x128xf32>
    %4 = vector.broadcast %3 : vector<1x1x128xf32> to vector<8x8x128xf32>
    %5 = arith.mulf %1, %4 : vector<8x8x128xf32>
    %c0_5 = arith.constant 0 : index
    %c0_6 = arith.constant 0 : index
    %6 = vector.load %arg3[%c0_5, %c0_6] : memref<1x128xf32, #tpu.memory_space<vmem>>, vector<1x128xf32>
    %7 = vector.shape_cast %6 : vector<1x128xf32> to vector<1x1x128xf32>
    %8 = vector.broadcast %7 : vector<1x1x128xf32> to vector<8x8x128xf32>
    %9 = arith.addf %5, %8 : vector<8x8x128xf32>
    %cst = arith.constant 0.000000e+00 : f32
    %10 = vector.broadcast %cst : f32 to vector<8x8x128xf32>
    %11 = arith.maximumf %9, %10 : vector<8x8x128xf32>
    %c0_7 = arith.constant 0 : index
    %c0_8 = arith.constant 0 : index
    %c0_9 = arith.constant 0 : index
    %c0_10 = arith.constant 0 : index
    %12 = vector.load %arg4[%c0_7, %c0_8, %c0_9, %c0_10] : memref<1x8x8x128xf32, #tpu.memory_space<vmem>>, vector<1x8x8x128xf32>
    %13 = vector.shape_cast %12 : vector<1x8x8x128xf32> to vector<8x8x128xf32>
    %14 = vector.shape_cast %11 : vector<8x8x128xf32> to vector<1x8x8x128xf32>
    tpu.vector_store %arg4[%c0_7, %c0_8, %c0_9, %c0_10], %14 {strides = array<i32>} : memref<1x8x8x128xf32, #tpu.memory_space<vmem>>, vector<1x8x8x128xf32>,
    return
  }
  func.func @transform_0(%arg0: i32) -> (i32, i32, i32, i32) {
    %c0_i32 = arith.constant 0 : i32
    %c0_i32_0 = arith.constant 0 : i32
    %c0_i32_1 = arith.constant 0 : i32
    %c0_i32_2 = arith.constant 0 : i32
    return %arg0, %c0_i32, %c0_i32_0, %c0_i32_1 : i32, i32, i32, i32
  }
  func.func @transform_1(%arg0: i32) -> (i32, i32) {
    %c0_i32 = arith.constant 0 : i32
    %c0_i32_0 = arith.constant 0 : i32
    %c0_i32_1 = arith.constant 0 : i32
    return %c0_i32, %c0_i32_0 : i32, i32
  }
  func.func @transform_2(%arg0: i32) -> (i32, i32) {
    %c0_i32 = arith.constant 0 : i32
    %c0_i32_0 = arith.constant 0 : i32
    %c0_i32_1 = arith.constant 0 : i32
    return %c0_i32, %c0_i32_0 : i32, i32
  }
  func.func @transform_3(%arg0: i32) -> (i32, i32, i32, i32) {
    %c0_i32 = arith.constant 0 : i32
    %c0_i32_0 = arith.constant 0 : i32
    %c0_i32_1 = arith.constant 0 : i32
    %c0_i32_2 = arith.constant 0 : i32
    return %arg0, %c0_i32, %c0_i32_0, %c0_i32_1 : i32, i32, i32, i32
  }
}

</mosaic_0001>

<llo_original>
// kernel: down_forward.5
$region0: #{down_forward.5}
  #allocation0 [shape = 'u32[]', space=smem, size = 0x4, offset = 0x4, fixed_abs, tag = 'smem constant byte address 0x4 - core index']
  #allocation1 [shape = 'u32[144,128]{1,0:T(1,128)}', space=vmem, size = 0x12000, scoped, tag = 'internal scratch']
  %s0 = inlined_call_operand.vmem [shape: f32[2,8,8,128], index: 0, kind: input, shape index: {}, may-alias: {0,3}]
  %s1 = inlined_call_operand.vmem [shape: f32[1,128], index: 1, kind: input, shape index: {}]
  %s2 = inlined_call_operand.vmem [shape: f32[1,128], index: 2, kind: input, shape index: {}]
  %s3 = inlined_call_operand.vmem [shape: f32[2,8,8,128], index: 3, kind: output, shape index: {}, may-alias: {0,3}]
  %s4 = sld [smem:[#allocation0]]
  $region45: #{down_forward.5} parent=0
    _
  %s6 = ssub.s32 1, %s4
  %s7 = scalar_select 0, %s6, %s4
  loop: start=0, step=1, limit=4
  $region2: #{down_forward.5} parent=0 // loop_pre_header
    _
  $region3: #{down_forward.5} parent=0 // loop_header
    %s9 = sphi 0, %s13
    %p10 = scmp.ge.s32.totalorder %s9, 4
    %s19 = sphi 0, %s21
    %s22 = sphi 0, %s19
    %s23 = sphi 0, %s22
    %s39 = sphi 0, %s23
    %s43 = sphi 0, %s43
    %s45 = sphi 0, %s43
    %s46 = sphi 0, %s45
    %s60 = sphi 0, %s46
    %s64 = sphi 0, %s64
    %s66 = sphi 0, %s64
    %s67 = sphi 0, %s66
    %s81 = sphi 0, %s67
    %s87 = sphi 0, %s89
    %s90 = sphi 0, %s87
    %s91 = sphi 0, %s90
    %s107 = sphi 0, %s91
  $region4: #{down_forward.5} parent=0 // loop_header_branch
    %12 = sbr.rel (%p10) target = $region8
  $region5: #{down_forward.5} parent=0 // loop_body
    %s14 = ssub.s32 %s9, 1
    %s15 = ssub.s32 %s9, 2
    %s16 = sadd.s32 %s9, 1
    %s17 = ssub.s32 %s9, %s16
    %p18 = scmp.eq.s32.totalorder %s17, 0
    %s20 = sadd.s32 %s19, 1
    %s21 = scalar_select %p18, %s19, %s20
    %p24 = pneg %p18
    %p25 = scmp.eq.s32.totalorder %s9, 1
    %p26 = por %p24, %p25
    %p27 = scmp.ne.s32.totalorder %s19, %s22
    %p28 = scmp.eq.s32.totalorder %s9, 0
    %p29 = por %p27, %p28
    %p30 = scmp.ne.s32.totalorder %s19, %s22
    %p31 = scmp.eq.s32.totalorder %s14, 1
    %p32 = por %p30, %p31
    %p33 = scmp.ne.s32.totalorder %s22, %s23
    %p34 = scmp.eq.s32.totalorder %s14, 0
    %p35 = por %p33, %p34
    %p36 = scmp.ne.s32.totalorder %s22, %s23
    %p37 = scmp.eq.s32.totalorder %s15, 1
    %p38 = por %p36, %p37
    %p40 = scmp.ne.s32.totalorder %s23, %s39
    %p41 = scmp.eq.s32.totalorder %s15, 0
    %p42 = por %p40, %p41
    %s44 = sadd.s32 %s43, 1
    %p47 = scmp.eq.s32.totalorder %s9, 1
    %p48 = scmp.ne.s32.totalorder %s43, %s45
    %p49 = scmp.eq.s32.totalorder %s9, 0
    %p50 = por %p48, %p49
    %p51 = scmp.ne.s32.totalorder %s43, %s45
    %p52 = scmp.eq.s32.totalorder %s14, 1
    %p53 = por %p51, %p52
    %p54 = scmp.ne.s32.totalorder %s45, %s46
    %p55 = scmp.eq.s32.totalorder %s14, 0
    %p56 = por %p54, %p55
    %p57 = scmp.ne.s32.totalorder %s45, %s46
    %p58 = scmp.eq.s32.totalorder %s15, 1
    %p59 = por %p57, %p58
    %p61 = scmp.ne.s32.totalorder %s46, %s60
    %p62 = scmp.eq.s32.totalorder %s15, 0
    %p63 = por %p61, %p62
    %s65 = sadd.s32 %s64, 1
    %p68 = scmp.eq.s32.totalorder %s9, 1
    %p69 = scmp.ne.s32.totalorder %s64, %s66
    %p70 = scmp.eq.s32.totalorder %s9, 0
    %p71 = por %p69, %p70
    %p72 = scmp.ne.s32.totalorder %s64, %s66
    %p73 = scmp.eq.s32.totalorder %s14, 1
    %p74 = por %p72, %p73
    %p75 = scmp.ne.s32.totalorder %s66, %s67
    %p76 = scmp.eq.s32.totalorder %s14, 0
    %p77 = por %p75, %p76
    %p78 = scmp.ne.s32.totalorder %s66, %s67
    %p79 = scmp.eq.s32.totalorder %s15, 1
    %p80 = por %p78, %p79
    %p82 = scmp.ne.s32.totalorder %s67, %s81
    %p83 = scmp.eq.s32.totalorder %s15, 0
    %p84 = por %p82, %p83
    %s85 = ssub.s32 %s9, %s16
    %p86 = scmp.eq.s32.totalorder %s85, 0
    %s88 = sadd.s32 %s87, 1
    %s89 = scalar_select %p86, %s87, %s88
    %p92 = pneg %p86
    %p93 = scmp.eq.s32.totalorder %s9, 1
    %p94 = por %p92, %p93
    %p95 = scmp.ne.s32.totalorder %s87, %s90
    %p96 = scmp.eq.s32.totalorder %s9, 0
    %p97 = por %p95, %p96
    %p98 = scmp.ne.s32.totalorder %s87, %s90
    %p99 = scmp.eq.s32.totalorder %s14, 1
    %p100 = por %p98, %p99
    %p101 = scmp.ne.s32.totalorder %s90, %s91
    %p102 = scmp.eq.s32.totalorder %s14, 0
    %p103 = por %p101, %p102
    %p104 = scmp.ne.s32.totalorder %s90, %s91
    %p105 = scmp.eq.s32.totalorder %s15, 1
    %p106 = por %p104, %p105
    %p108 = scmp.ne.s32.totalorder %s91, %s107
    %p109 = scmp.eq.s32.totalorder %s15, 0
    %p110 = por %p108, %p109
    %p111 = scmp.le.s32.totalorder 1, %s9
    %p112 = scmp.lt.s32.totalorder %s9, 3
    %p113 = pnand %p111, %p112
    %p114 = pneg %p113
    // Predicated region
    $region9: #{down_forward.5} parent=5 // pred_check
      _
    $region10: #{down_forward.5} parent=5 // pred_check_branch
      %116 = sbr.rel (%p113) target = $region12
    $region11: #{down_forward.5} parent=5 // pred_region
      %s117 = ssub.s32 %s9, 1
      // Predicated region
      $region13: #{down_forward.5} parent=11 // pred_check
        %p118 = pneg %p56
      $region14: #{down_forward.5} parent=11 // pred_check_branch
        %120 = sbr.rel (%p118) target = $region16
      $region15: #{down_forward.5} parent=11 // pred_region
        _
      $region16: #{down_forward.5} parent=11 // pred_fallthru
        _
      // Predicated region
      $region17: #{down_forward.5} parent=11 // pred_check
        %p121 = pneg %p77
      $region18: #{down_forward.5} parent=11 // pred_check_branch
        %123 = sbr.rel (%p121) target = $region20
      $region19: #{down_forward.5} parent=11 // pred_region
        _
      $region20: #{down_forward.5} parent=11 // pred_fallthru
        _
    $region12: #{down_forward.5} parent=5 // pred_fallthru
      _
    %p124 = scmp.lt.s32.totalorder %s9, 2
    // Predicated region
    $region21: #{down_forward.5} parent=5 // pred_check
      %p125 = pneg %p124
    $region22: #{down_forward.5} parent=5 // pred_check_branch
      %127 = sbr.rel (%p125) target = $region24
    $region23: #{down_forward.5} parent=5 // pred_region
      // Predicated region
      $region25: #{down_forward.5} parent=23 // pred_check
        %p128 = pneg %p29
      $region26: #{down_forward.5} parent=23 // pred_check_branch
        %130 = sbr.rel (%p128) target = $region28
      $region27: #{down_forward.5} parent=23 // pred_region
        %p131 = scmp.lt.s32.totalorder %s9, 1
        %s132 = scalar_select %p131, %s9, 1
        %s133 = smul.addr %s132, 8
        %s134 = smul.addr %s133, 8
        %s135 = scalar_lea.vmem %s0, %s134
      $region28: #{down_forward.5} parent=23 // pred_fallthru
        _
    $region24: #{down_forward.5} parent=5 // pred_fallthru
      _
    %p136 = scmp.le.s32.totalorder 1, %s9
    %p137 = scmp.lt.s32.totalorder %s9, 3
    %p138 = pnand %p136, %p137
    %p139 = pneg %p138
    // Predicated region
    $region29: #{down_forward.5} parent=5 // pred_check
      _
    $region30: #{down_forward.5} parent=5 // pred_check_branch
      %141 = sbr.rel (%p138) target = $region32
    $region31: #{down_forward.5} parent=5 // pred_region
      %s142 = ssub.s32 %s9, 1
      %p143 = scmp.lt.s32.totalorder %s14, 1
      %s144 = scalar_select %p143, %s14, 1
      %s145 = smul.addr %s144, 8
      %s146 = smul.addr %s145, 8
      %s147 = scalar_lea.vmem %s0, %s146
      %p148 = pneg %p35
      %p149 = pneg %p32
      %p150 = pneg %p56
      %p151 = pneg %p53
      %p152 = pneg %p77
      %p153 = pneg %p74
      %p154 = pneg %p103
      %p155 = pneg %p100
      %p156 = scmp.lt.s32.totalorder %s14, 1
      %s157 = scalar_select %p156, %s14, 1
      %s158 = smul.addr %s157, 8
      %s159 = smul.addr %s158, 8
      %s160 = scalar_lea.vmem %s3, %s159
      %p161 = scmp.lt.s32.totalorder %s14, 1
      %s162 = scalar_select %p161, %s14, 1
      %s163 = smul.addr %s162, 8
      %s164 = smul.addr %s163, 8
      %s165 = scalar_lea.vmem %s0, %s164
      %p166 = scmp.lt.s32.totalorder %s14, 1
      %s167 = scalar_select %p166, %s14, 1
      %s168 = smul.addr %s167, 8
      %s169 = smul.addr %s168, 8
      %s170 = scalar_lea.vmem %s3, %s169
      %v171 = vld [vmem:[%s165] sm:$0xff]
      %v172 = vld [vmem:[%s165 + $0x8] sm:$0xff]
      %v173 = vld [vmem:[%s165 + $0x10] sm:$0xff]
      %v174 = vld [vmem:[%s165 + $0x18] sm:$0xff]
      %v175 = vld [vmem:[%s165 + $0x20] sm:$0xff]
      %v176 = vld [vmem:[%s165 + $0x28] sm:$0xff]
      %v177 = vld [vmem:[%s165 + $0x30] sm:$0xff]
      %v178 = vld [vmem:[%s165 + $0x38] sm:$0xff]
      %v179 = vld [vmem:[%s1] sm:$0x1]
      %v181 = vlaneseq
      %v182 = vshrl.u32 %v181, 7
      %v183 = vsub.s32 0, %v182
      %v184 = vrot.slane %v179, %v183
      %v186 = vmul.f32 %v171, %v184
      %v187 = vmul.f32 %v172, %v184
      %v188 = vmul.f32 %v173, %v184
      %v189 = vmul.f32 %v174, %v184
      %v190 = vmul.f32 %v175, %v184
      %v191 = vmul.f32 %v176, %v184
      %v192 = vmul.f32 %v177, %v184
      %v193 = vmul.f32 %v178, %v184
      %v194 = vld [vmem:[%s2] sm:$0x1]
      %v196 = vlaneseq
      %v197 = vshrl.u32 %v196, 7
      %v198 = vsub.s32 0, %v197
      %v199 = vrot.slane %v194, %v198
      %v201 = vadd.f32 %v186, %v199
      %v202 = vadd.f32 %v187, %v199
      %v203 = vadd.f32 %v188, %v199
      %v204 = vadd.f32 %v189, %v199
      %v205 = vadd.f32 %v190, %v199
      %v206 = vadd.f32 %v191, %v199
      %v207 = vadd.f32 %v192, %v199
      %v208 = vadd.f32 %v193, %v199
      %v209 = vmax.f32 %v201, 0.0
      %v210 = vmax.f32 %v202, 0.0
      %v211 = vmax.f32 %v203, 0.0
      %v212 = vmax.f32 %v204, 0.0
      %v213 = vmax.f32 %v205, 0.0
      %v214 = vmax.f32 %v206, 0.0
      %v215 = vmax.f32 %v207, 0.0
      %v216 = vmax.f32 %v208, 0.0
      %217 = vst [vmem:[%s170] sm:$0xff] %v209
      %218 = vst [vmem:[%s170 + $0x8] sm:$0xff] %v210
      %219 = vst [vmem:[%s170 + $0x10] sm:$0xff] %v211
      %220 = vst [vmem:[%s170 + $0x18] sm:$0xff] %v212
      %221 = vst [vmem:[%s170 + $0x20] sm:$0xff] %v213
      %222 = vst [vmem:[%s170 + $0x28] sm:$0xff] %v214
      %223 = vst [vmem:[%s170 + $0x30] sm:$0xff] %v215
      %224 = vst [vmem:[%s170 + $0x38] sm:$0xff] %v216
      %p225 = scmp.lt.s32.totalorder %s14, 1
      %s226 = scalar_select %p225, %s14, 1
      %s227 = smul.addr %s226, 8
      %s228 = smul.addr %s227, 8
      %s229 = scalar_lea.vmem %s3, %s228
      // Predicated region
      $region33: #{down_forward.5} parent=31 // pred_check
        %p230 = pneg %p100
      $region34: #{down_forward.5} parent=31 // pred_check_branch
        %232 = sbr.rel (%p230) target = $region36
      $region35: #{down_forward.5} parent=31 // pred_region
        _
      $region36: #{down_forward.5} parent=31 // pred_fallthru
        _
    $region32: #{down_forward.5} parent=5 // pred_fallthru
      _
    %p233 = scmp.le.s32.totalorder 2, %s9
    // Predicated region
    $region37: #{down_forward.5} parent=5 // pred_check
      %p234 = pneg %p233
    $region38: #{down_forward.5} parent=5 // pred_check_branch
      %236 = sbr.rel (%p234) target = $region40
    $region39: #{down_forward.5} parent=5 // pred_region
      %s237 = ssub.s32 %s9, 2
      // Predicated region
      $region41: #{down_forward.5} parent=39 // pred_check
        %p238 = pneg %p106
      $region42: #{down_forward.5} parent=39 // pred_check_branch
        %240 = sbr.rel (%p238) target = $region44
      $region43: #{down_forward.5} parent=39 // pred_region
        %p241 = scmp.lt.s32.totalorder %s15, 1
        %s242 = scalar_select %p241, %s15, 1
        %s243 = smul.addr %s242, 8
        %s244 = smul.addr %s243, 8
        %s245 = scalar_lea.vmem %s3, %s244
      $region44: #{down_forward.5} parent=39 // pred_fallthru
        _
    $region40: #{down_forward.5} parent=5 // pred_fallthru
      _
  $region6: #{down_forward.5} parent=0 // loop_footer
    %s13 = sadd.s32 1, %s9
  $region7: #{down_forward.5} parent=0 // loop_footer_branch
    %8 = sbr.rel target = $region3
  $region8: #{down_forward.5} parent=0 // loop_exit
    _

// kernel: down_forward.3
$region0: #{down_forward.3}
  #allocation0 [shape = 'u32[]', space=smem, size = 0x4, offset = 0x4, fixed_abs, tag = 'smem constant byte address 0x4 - core index']
  #allocation1 [shape = 'u32[144,128]{1,0:T(1,128)}', space=vmem, size = 0x12000, scoped, tag = 'internal scratch']
  #allocation2 [shape = 'f32[10,10,4]{2,1,0:T(8,128)}', space=vmem, size = 0x14000, scoped, tag = 'scratch operand']
  %s0 = inlined_call_operand.vmem [shape: f32[2,16,8,8], index: 0, kind: input, shape index: {}]
  %s1 = inlined_call_operand.vmem [shape: f32[9,4,128], index: 1, kind: input, shape index: {}]
  %s2 = inlined_call_operand.vmem [shape: f32[1,128], index: 2, kind: input, shape index: {}]
  %s3 = inlined_call_operand.vmem [shape: f32[2,8,8,128], index: 3, kind: output, shape index: {0}]
  %s4 = inlined_call_operand.vmem [shape: f32[2,1,128], index: 4, kind: output, shape index: {1}]
  %s5 = inlined_call_operand.vmem [shape: f32[2,1,128], index: 5, kind: output, shape index: {2}]
  %6 = xla_tuple %s3, %s4, %s5
  %s7 = sld [smem:[#allocation0]]
  $region61: #{down_forward.3} parent=0
    _
  %s9 = ssub.s32 1, %s7
  %s10 = scalar_select 0, %s9, %s7
  loop: start=0, step=1, limit=4
  $region2: #{down_forward.3} parent=0 // loop_pre_header
    _
  $region3: #{down_forward.3} parent=0 // loop_header
    %s12 = sphi 0, %s16
    %p13 = scmp.ge.s32.totalorder %s12, 4
    %s22 = sphi 0, %s24
    %s25 = sphi 0, %s22
    %s26 = sphi 0, %s25
    %s42 = sphi 0, %s26
    %s46 = sphi 0, %s46
    %s48 = sphi 0, %s46
    %s49 = sphi 0, %s48
    %s63 = sphi 0, %s49
    %s67 = sphi 0, %s67
    %s69 = sphi 0, %s67
    %s70 = sphi 0, %s69
    %s84 = sphi 0, %s70
    %s90 = sphi 0, %s92
    %s93 = sphi 0, %s90
    %s94 = sphi 0, %s93
    %s110 = sphi 0, %s94
    %s116 = sphi 0, %s118
    %s119 = sphi 0, %s116
    %s120 = sphi 0, %s119
    %s136 = sphi 0, %s120
    %s142 = sphi 0, %s144
    %s145 = sphi 0, %s142
    %s146 = sphi 0, %s145
    %s162 = sphi 0, %s146
  $region4: #{down_forward.3} parent=0 // loop_header_branch
    %15 = sbr.rel (%p13) target = $region8
  $region5: #{down_forward.3} parent=0 // loop_body
    %s17 = ssub.s32 %s12, 1
    %s18 = ssub.s32 %s12, 2
    %s19 = sadd.s32 %s12, 1
    %s20 = ssub.s32 %s12, %s19
    %p21 = scmp.eq.s32.totalorder %s20, 0
    %s23 = sadd.s32 %s22, 1
    %s24 = scalar_select %p21, %s22, %s23
    %p27 = pneg %p21
    %p28 = scmp.eq.s32.totalorder %s12, 1
    %p29 = por %p27, %p28
    %p30 = scmp.ne.s32.totalorder %s22, %s25
    %p31 = scmp.eq.s32.totalorder %s12, 0
    %p32 = por %p30, %p31
    %p33 = scmp.ne.s32.totalorder %s22, %s25
    %p34 = scmp.eq.s32.totalorder %s17, 1
    %p35 = por %p33, %p34
    %p36 = scmp.ne.s32.totalorder %s25, %s26
    %p37 = scmp.eq.s32.totalorder %s17, 0
    %p38 = por %p36, %p37
    %p39 = scmp.ne.s32.totalorder %s25, %s26
    %p40 = scmp.eq.s32.totalorder %s18, 1
    %p41 = por %p39, %p40
    %p43 = scmp.ne.s32.totalorder %s26, %s42
    %p44 = scmp.eq.s32.totalorder %s18, 0
    %p45 = por %p43, %p44
    %s47 = sadd.s32 %s46, 1
    %p50 = scmp.eq.s32.totalorder %s12, 1
    %p51 = scmp.ne.s32.totalorder %s46, %s48
    %p52 = scmp.eq.s32.totalorder %s12, 0
    %p53 = por %p51, %p52
    %p54 = scmp.ne.s32.totalorder %s46, %s48
    %p55 = scmp.eq.s32.totalorder %s17, 1
    %p56 = por %p54, %p55
    %p57 = scmp.ne.s32.totalorder %s48, %s49
    %p58 = scmp.eq.s32.totalorder %s17, 0
    %p59 = por %p57, %p58
    %p60 = scmp.ne.s32.totalorder %s48, %s49
    %p61 = scmp.eq.s32.totalorder %s18, 1
    %p62 = por %p60, %p61
    %p64 = scmp.ne.s32.totalorder %s49, %s63
    %p65 = scmp.eq.s32.totalorder %s18, 0
    %p66 = por %p64, %p65
    %s68 = sadd.s32 %s67, 1
    %p71 = scmp.eq.s32.totalorder %s12, 1
    %p72 = scmp.ne.s32.totalorder %s67, %s69
    %p73 = scmp.eq.s32.totalorder %s12, 0
    %p74 = por %p72, %p73
    %p75 = scmp.ne.s32.totalorder %s67, %s69
    %p76 = scmp.eq.s32.totalorder %s17, 1
    %p77 = por %p75, %p76
    %p78 = scmp.ne.s32.totalorder %s69, %s70
    %p79 = scmp.eq.s32.totalorder %s17, 0
    %p80 = por %p78, %p79
    %p81 = scmp.ne.s32.totalorder %s69, %s70
    %p82 = scmp.eq.s32.totalorder %s18, 1
    %p83 = por %p81, %p82
    %p85 = scmp.ne.s32.totalorder %s70, %s84
    %p86 = scmp.eq.s32.totalorder %s18, 0
    %p87 = por %p85, %p86
    %s88 = ssub.s32 %s12, %s19
    %p89 = scmp.eq.s32.totalorder %s88, 0
    %s91 = sadd.s32 %s90, 1
    %s92 = scalar_select %p89, %s90, %s91
    %p95 = pneg %p89
    %p96 = scmp.eq.s32.totalorder %s12, 1
    %p97 = por %p95, %p96
    %p98 = scmp.ne.s32.totalorder %s90, %s93
    %p99 = scmp.eq.s32.totalorder %s12, 0
    %p100 = por %p98, %p99
    %p101 = scmp.ne.s32.totalorder %s90, %s93
    %p102 = scmp.eq.s32.totalorder %s17, 1
    %p103 = por %p101, %p102
    %p104 = scmp.ne.s32.totalorder %s93, %s94
    %p105 = scmp.eq.s32.totalorder %s17, 0
    %p106 = por %p104, %p105
    %p107 = scmp.ne.s32.totalorder %s93, %s94
    %p108 = scmp.eq.s32.totalorder %s18, 1
    %p109 = por %p107, %p108
    %p111 = scmp.ne.s32.totalorder %s94, %s110
    %p112 = scmp.eq.s32.totalorder %s18, 0
    %p113 = por %p111, %p112
    %s114 = ssub.s32 %s12, %s19
    %p115 = scmp.eq.s32.totalorder %s114, 0
    %s117 = sadd.s32 %s116, 1
    %s118 = scalar_select %p115, %s116, %s117
    %p121 = pneg %p115
    %p122 = scmp.eq.s32.totalorder %s12, 1
    %p123 = por %p121, %p122
    %p124 = scmp.ne.s32.totalorder %s116, %s119
    %p125 = scmp.eq.s32.totalorder %s12, 0
    %p126 = por %p124, %p125
    %p127 = scmp.ne.s32.totalorder %s116, %s119
    %p128 = scmp.eq.s32.totalorder %s17, 1
    %p129 = por %p127, %p128
    %p130 = scmp.ne.s32.totalorder %s119, %s120
    %p131 = scmp.eq.s32.totalorder %s17, 0
    %p132 = por %p130, %p131
    %p133 = scmp.ne.s32.totalorder %s119, %s120
    %p134 = scmp.eq.s32.totalorder %s18, 1
    %p135 = por %p133, %p134
    %p137 = scmp.ne.s32.totalorder %s120, %s136
    %p138 = scmp.eq.s32.totalorder %s18, 0
    %p139 = por %p137, %p138
    %s140 = ssub.s32 %s12, %s19
    %p141 = scmp.eq.s32.totalorder %s140, 0
    %s143 = sadd.s32 %s142, 1
    %s144 = scalar_select %p141, %s142, %s143
    %p147 = pneg %p141
    %p148 = scmp.eq.s32.totalorder %s12, 1
    %p149 = por %p147, %p148
    %p150 = scmp.ne.s32.totalorder %s142, %s145
    %p151 = scmp.eq.s32.totalorder %s12, 0
    %p152 = por %p150, %p151
    %p153 = scmp.ne.s32.totalorder %s142, %s145
    %p154 = scmp.eq.s32.totalorder %s17, 1
    %p155 = por %p153, %p154
    %p156 = scmp.ne.s32.totalorder %s145, %s146
    %p157 = scmp.eq.s32.totalorder %s17, 0
    %p158 = por %p156, %p157
    %p159 = scmp.ne.s32.totalorder %s145, %s146
    %p160 = scmp.eq.s32.totalorder %s18, 1
    %p161 = por %p159, %p160
    %p163 = scmp.ne.s32.totalorder %s146, %s162
    %p164 = scmp.eq.s32.totalorder %s18, 0
    %p165 = por %p163, %p164
    %p166 = scmp.le.s32.totalorder 1, %s12
    %p167 = scmp.lt.s32.totalorder %s12, 3
    %p168 = pnand %p166, %p167
    %p169 = pneg %p168
    // Predicated region
    $region9: #{down_forward.3} parent=5 // pred_check
      _
    $region10: #{down_forward.3} parent=5 // pred_check_branch
      %171 = sbr.rel (%p168) target = $region12
    $region11: #{down_forward.3} parent=5 // pred_region
      %s172 = ssub.s32 %s12, 1
      // Predicated region
      $region13: #{down_forward.3} parent=11 // pred_check
        %p173 = pneg %p59
      $region14: #{down_forward.3} parent=11 // pred_check_branch
        %175 = sbr.rel (%p173) target = $region16
      $region15: #{down_forward.3} parent=11 // pred_region
        _
      $region16: #{down_forward.3} parent=11 // pred_fallthru
        _
      // Predicated region
      $region17: #{down_forward.3} parent=11 // pred_check
        %p176 = pneg %p80
      $region18: #{down_forward.3} parent=11 // pred_check_branch
        %178 = sbr.rel (%p176) target = $region20
      $region19: #{down_forward.3} parent=11 // pred_region
        _
      $region20: #{down_forward.3} parent=11 // pred_fallthru
        _
    $region12: #{down_forward.3} parent=5 // pred_fallthru
      _
    %p179 = scmp.lt.s32.totalorder %s12, 2
    // Predicated region
    $region21: #{down_forward.3} parent=5 // pred_check
      %p180 = pneg %p179
    $region22: #{down_forward.3} parent=5 // pred_check_branch
      %182 = sbr.rel (%p180) target = $region24
    $region23: #{down_forward.3} parent=5 // pred_region
      // Predicated region
      $region25: #{down_forward.3} parent=23 // pred_check
        %p183 = pneg %p32
      $region26: #{down_forward.3} parent=23 // pred_check_branch
        %185 = sbr.rel (%p183) target = $region28
      $region27: #{down_forward.3} parent=23 // pred_region
        %p186 = scmp.lt.s32.totalorder %s12, 1
        %s187 = scalar_select %p186, %s12, 1
        %s188 = smul.addr %s187, 16
        %s189 = smul.addr %s188, 8
        %s190 = scalar_lea.vmem %s0, %s189
      $region28: #{down_forward.3} parent=23 // pred_fallthru
        _
    $region24: #{down_forward.3} parent=5 // pred_fallthru
      _
    %p191 = scmp.le.s32.totalorder 1, %s12
    %p192 = scmp.lt.s32.totalorder %s12, 3
    %p193 = pnand %p191, %p192
    %p194 = pneg %p193
    // Predicated region
    $region29: #{down_forward.3} parent=5 // pred_check
      _
    $region30: #{down_forward.3} parent=5 // pred_check_branch
      %196 = sbr.rel (%p193) target = $region32
    $region31: #{down_forward.3} parent=5 // pred_region
      %s197 = ssub.s32 %s12, 1
      %p198 = scmp.lt.s32.totalorder %s17, 1
      %s199 = scalar_select %p198, %s17, 1
      %s200 = smul.addr %s199, 16
      %s201 = smul.addr %s200, 8
      %s202 = scalar_lea.vmem %s0, %s201
      %p203 = pneg %p38
      %p204 = pneg %p35
      %p205 = pneg %p59
      %p206 = pneg %p56
      %p207 = pneg %p80
      %p208 = pneg %p77
      %p209 = pneg %p106
      %p210 = pneg %p103
      %p211 = scmp.lt.s32.totalorder %s17, 1
      %s212 = scalar_select %p211, %s17, 1
      %s213 = smul.addr %s212, 8
      %s214 = smul.addr %s213, 8
      %s215 = scalar_lea.vmem %s3, %s214
      %p216 = pneg %p132
      %p217 = pneg %p129
      %p218 = scmp.lt.s32.totalorder %s17, 1
      %s219 = scalar_select %p218, %s17, 1
      %s220 = scalar_lea.vmem %s4, %s219
      %p221 = pneg %p158
      %p222 = pneg %p155
      %p223 = scmp.lt.s32.totalorder %s17, 1
      %s224 = scalar_select %p223, %s17, 1
      %s225 = scalar_lea.vmem %s5, %s224
      %p226 = scmp.lt.s32.totalorder %s17, 1
      %s227 = scalar_select %p226, %s17, 1
      %s228 = smul.addr %s227, 16
      %s229 = smul.addr %s228, 8
      %s230 = scalar_lea.vmem %s0, %s229
      %p231 = scmp.lt.s32.totalorder %s17, 1
      %s232 = scalar_select %p231, %s17, 1
      %s233 = smul.addr %s232, 8
      %s234 = smul.addr %s233, 8
      %s235 = scalar_lea.vmem %s3, %s234
      %p236 = scmp.lt.s32.totalorder %s17, 1
      %s237 = scalar_select %p236, %s17, 1
      %s238 = scalar_lea.vmem %s4, %s237
      %p239 = scmp.lt.s32.totalorder %s17, 1
      %s240 = scalar_select %p239, %s17, 1
      %s241 = scalar_lea.vmem %s5, %s240
      %v242 = vld [vmem:[%s230] sm:$0xff]
      %v243 = vld [vmem:[%s230 + $0x8] sm:$0xff]
      %v244 = vld [vmem:[%s230 + $0x10] sm:$0xff]
      %v245 = vld [vmem:[%s230 + $0x18] sm:$0xff]
      %v246 = vld [vmem:[%s230 + $0x20] sm:$0xff]
      %v247 = vld [vmem:[%s230 + $0x28] sm:$0xff]
      %v248 = vld [vmem:[%s230 + $0x30] sm:$0xff]
      %v249 = vld [vmem:[%s230 + $0x38] sm:$0xff]
      %v250 = vld [vmem:[%s230 + $0x40] sm:$0xff]
      %v251 = vld [vmem:[%s230 + $0x48] sm:$0xff]
      %v252 = vld [vmem:[%s230 + $0x50] sm:$0xff]
      %v253 = vld [vmem:[%s230 + $0x58] sm:$0xff]
      %v254 = vld [vmem:[%s230 + $0x60] sm:$0xff]
      %v255 = vld [vmem:[%s230 + $0x68] sm:$0xff]
      %v256 = vld [vmem:[%s230 + $0x70] sm:$0xff]
      %v257 = vld [vmem:[%s230 + $0x78] sm:$0xff]
      %274 = vrot.lane.b32.xlu0 %v242, 124
      %v275 = vpop.permute.xlu0 %274
      %276 = vrot.lane.b32.xlu0 %v243, 124
      %v277 = vpop.permute.xlu0 %276
      %278 = vrot.lane.b32.xlu0 %v244, 124
      %v279 = vpop.permute.xlu0 %278
      %280 = vrot.lane.b32.xlu0 %v245, 124
      %v281 = vpop.permute.xlu0 %280
      %282 = vrot.lane.b32.xlu0 %v246, 124
      %v283 = vpop.permute.xlu0 %282
      %284 = vrot.lane.b32.xlu0 %v247, 124
      %v285 = vpop.permute.xlu0 %284
      %286 = vrot.lane.b32.xlu0 %v248, 124
      %v287 = vpop.permute.xlu0 %286
      %288 = vrot.lane.b32.xlu0 %v249, 124
      %v289 = vpop.permute.xlu0 %288
      %290 = vrot.lane.b32.xlu0 %v250, 124
      %v291 = vpop.permute.xlu0 %290
      %292 = vrot.lane.b32.xlu0 %v251, 124
      %v293 = vpop.permute.xlu0 %292
      %294 = vrot.lane.b32.xlu0 %v252, 124
      %v295 = vpop.permute.xlu0 %294
      %296 = vrot.lane.b32.xlu0 %v253, 124
      %v297 = vpop.permute.xlu0 %296
      %298 = vrot.lane.b32.xlu0 %v254, 124
      %v299 = vpop.permute.xlu0 %298
      %300 = vrot.lane.b32.xlu0 %v255, 124
      %v301 = vpop.permute.xlu0 %300
      %302 = vrot.lane.b32.xlu0 %v256, 124
      %v303 = vpop.permute.xlu0 %302
      %304 = vrot.lane.b32.xlu0 %v257, 124
      %v305 = vpop.permute.xlu0 %304
      %v322 = vmax.f32 %v242, %v275
      %v323 = vmax.f32 %v243, %v277
      %v324 = vmax.f32 %v244, %v279
      %v325 = vmax.f32 %v245, %v281
      %v326 = vmax.f32 %v246, %v283
      %v327 = vmax.f32 %v247, %v285
      %v328 = vmax.f32 %v248, %v287
      %v329 = vmax.f32 %v249, %v289
      %v330 = vmax.f32 %v250, %v291
      %v331 = vmax.f32 %v251, %v293
      %v332 = vmax.f32 %v252, %v295
      %v333 = vmax.f32 %v253, %v297
      %v334 = vmax.f32 %v254, %v299
      %v335 = vmax.f32 %v255, %v301
      %v336 = vmax.f32 %v256, %v303
      %v337 = vmax.f32 %v257, %v305
      %vm338 = vcmask 31744
      %v339 = vsel %vm338, %v322, -inf
      %v340 = vsel %vm338, %v323, -inf
      %v341 = vmax.f32 %v339, %v340
      %v342 = vsel %vm338, %v324, -inf
      %v343 = vsel %vm338, %v325, -inf
      %v344 = vmax.f32 %v342, %v343
      %v345 = vsel %vm338, %v326, -inf
      %v346 = vsel %vm338, %v327, -inf
      %v347 = vmax.f32 %v345, %v346
      %v348 = vsel %vm338, %v328, -inf
      %v349 = vsel %vm338, %v329, -inf
      %v350 = vmax.f32 %v348, %v349
      %v351 = vsel %vm338, %v330, -inf
      %v352 = vsel %vm338, %v331, -inf
      %v353 = vmax.f32 %v351, %v352
      %v354 = vsel %vm338, %v332, -inf
      %v355 = vsel %vm338, %v333, -inf
      %v356 = vmax.f32 %v354, %v355
      %v357 = vsel %vm338, %v334, -inf
      %v358 = vsel %vm338, %v335, -inf
      %v359 = vmax.f32 %v357, %v358
      %v360 = vsel %vm338, %v336, -inf
      %v361 = vsel %vm338, %v337, -inf
      %v362 = vmax.f32 %v360, %v361
      %363 = vst.msk [vmem:[#allocation2] sm:$0xff] %vm338, 0.0
      %vm364 = vcmask 25600
      %365 = vst.msk [vmem:[#allocation2 + $0x8] sm:$0x3] %vm364, 0.0
      %366 = vst.msk [vmem:[#allocation2 + $0x10] sm:$0xff] %vm338, 0.0
      %367 = vst.msk [vmem:[#allocation2 + $0x18] sm:$0x3] %vm364, 0.0
      %368 = vst.msk [vmem:[#allocation2 + $0x20] sm:$0xff] %vm338, 0.0
      %369 = vst.msk [vmem:[#allocation2 + $0x28] sm:$0x3] %vm364, 0.0
      %370 = vst.msk [vmem:[#allocation2 + $0x30] sm:$0xff] %vm338, 0.0
      %371 = vst.msk [vmem:[#allocation2 + $0x38] sm:$0x3] %vm364, 0.0
      %372 = vst.msk [vmem:[#allocation2 + $0x40] sm:$0xff] %vm338, 0.0
      %373 = vst.msk [vmem:[#allocation2 + $0x48] sm:$0x3] %vm364, 0.0
      %374 = vst.msk [vmem:[#allocation2 + $0x50] sm:$0xff] %vm338, 0.0
      %375 = vst.msk [vmem:[#allocation2 + $0x58] sm:$0x3] %vm364, 0.0
      %376 = vst.msk [vmem:[#allocation2 + $0x60] sm:$0xff] %vm338, 0.0
      %377 = vst.msk [vmem:[#allocation2 + $0x68] sm:$0x3] %vm364, 0.0
      %378 = vst.msk [vmem:[#allocation2 + $0x70] sm:$0xff] %vm338, 0.0
      %379 = vst.msk [vmem:[#allocation2 + $0x78] sm:$0x3] %vm364, 0.0
      %380 = vst.msk [vmem:[#allocation2 + $0x80] sm:$0xff] %vm338, 0.0
      %381 = vst.msk [vmem:[#allocation2 + $0x88] sm:$0x3] %vm364, 0.0
      %382 = vst.msk [vmem:[#allocation2 + $0x90] sm:$0xff] %vm338, 0.0
      %383 = vst.msk [vmem:[#allocation2 + $0x98] sm:$0x3] %vm364, 0.0
      %s384 = scalar_lea.vmem [#allocation2], 16
      %385 = vst.msk [vmem:[%s384 + $0x1] sm:$0xff] %vm338, %v341
      %386 = vst.msk [vmem:[%s384 + $0x11] sm:$0xff] %vm338, %v344
      %387 = vst.msk [vmem:[%s384 + $0x21] sm:$0xff] %vm338, %v347
      %388 = vst.msk [vmem:[%s384 + $0x31] sm:$0xff] %vm338, %v350
      %389 = vst.msk [vmem:[%s384 + $0x41] sm:$0xff] %vm338, %v353
      %390 = vst.msk [vmem:[%s384 + $0x51] sm:$0xff] %vm338, %v356
      %391 = vst.msk [vmem:[%s384 + $0x61] sm:$0xff] %vm338, %v359
      %392 = vst.msk [vmem:[%s384 + $0x71] sm:$0xff] %vm338, %v362
      %v393 = vld [vmem:[#allocation2] sm:$0xff]
      %v394 = vld [vmem:[#allocation2 + $0x8] sm:$0x3]
      %v395 = vld [vmem:[#allocation2 + $0x10] sm:$0xff]
      %v396 = vld [vmem:[#allocation2 + $0x18] sm:$0x3]
      %v397 = vld [vmem:[#allocation2 + $0x20] sm:$0xff]
      %v398 = vld [vmem:[#allocation2 + $0x28] sm:$0x3]
      %v399 = vld [vmem:[#allocation2 + $0x30] sm:$0xff]
      %v400 = vld [vmem:[#allocation2 + $0x38] sm:$0x3]
      %v401 = vld [vmem:[#allocation2 + $0x40] sm:$0xff]
      %v402 = vld [vmem:[#allocation2 + $0x48] sm:$0x3]
      %v403 = vld [vmem:[#allocation2 + $0x50] sm:$0xff]
      %v404 = vld [vmem:[#allocation2 + $0x58] sm:$0x3]
      %v405 = vld [vmem:[#allocation2 + $0x60] sm:$0xff]
      %v406 = vld [vmem:[#allocation2 + $0x68] sm:$0x3]
      %v407 = vld [vmem:[#allocation2 + $0x70] sm:$0xff]
      %v408 = vld [vmem:[#allocation2 + $0x78] sm:$0x3]
      %v409 = vld [vmem:[#allocation2 + $0x80] sm:$0xff]
      %v410 = vld [vmem:[#allocation2 + $0x88] sm:$0x3]
      %v411 = vld [vmem:[#allocation2 + $0x90] sm:$0xff]
      %v412 = vld [vmem:[#allocation2 + $0x98] sm:$0x3]
      %v413 = vld [vmem:[%s1] sm:$0xf]
      %vm430 = vcmask 1046528
      %v431 = vrot.slane %v393, 1
      %v432 = vrot.slane %v394, 1
      %v433 = vsel %vm430, %v431, %v432
      %v434 = vrot.slane %v395, 1
      %v435 = vrot.slane %v396, 1
      %v436 = vsel %vm430, %v434, %v435
      %v437 = vrot.slane %v397, 1
      %v438 = vrot.slane %v398, 1
      %v439 = vsel %vm430, %v437, %v438
      %v440 = vrot.slane %v399, 1
      %v441 = vrot.slane %v400, 1
      %v442 = vsel %vm430, %v440, %v441
      %v443 = vrot.slane %v401, 1
      %v444 = vrot.slane %v402, 1
      %v445 = vsel %vm430, %v443, %v444
      %v446 = vrot.slane %v403, 1
      %v447 = vrot.slane %v404, 1
      %v448 = vsel %vm430, %v446, %v447
      %v449 = vrot.slane %v405, 1
      %v450 = vrot.slane %v406, 1
      %v451 = vsel %vm430, %v449, %v450
      %v452 = vrot.slane %v407, 1
      %v453 = vrot.slane %v408, 1
      %v454 = vsel %vm430, %v452, %v453
      %s455 = scalar_lea.vmem %s1, 4
      %v456 = vld [vmem:[%s455] sm:$0xf]
      %v457 = vsel %vm338, %v433, 0
      %v459 = vsel %vm338, %v436, 0
      %v461 = vsel %vm338, %v439, 0
      %v463 = vsel %vm338, %v442, 0
      %v465 = vsel %vm338, %v445, 0
      %v467 = vsel %vm338, %v448, 0
      %v469 = vsel %vm338, %v451, 0
      %v471 = vsel %vm338, %v454, 0
      %vm473 = vcmask 1043456
      %v475 = vsel %vm473, %v456, 0
      %477 = vmatprep.subr.mxu0 0.0
      %478 = vmatpush1.msra.mxu0 %v475
      %479 = vmatprep.subr.mxu0 0.0
      %480 = vmatpush1.msra.mxu0 0.0
      %481 = vmatprep.subr.mxu0 0.0
      %482 = vmatpush1.msra.mxu0 0.0
      %483 = vmatprep.subr.mxu0 0.0
      %484 = vmatpush1.msra.mxu0 0.0
      %485 = vmatprep.subr.mxu0 0.0
      %486 = vmatpush1.msra.mxu0 0.0
      %487 = vmatprep.subr.mxu0 0.0
      %488 = vmatpush1.msra.mxu0 0.0
      %489 = vmatprep.subr.mxu0 0.0
      %490 = vmatpush1.msra.mxu0 0.0
      %491 = vmatprep.subr.mxu0 0.0
      %492 = vmatpush1.msra.mxu0 0.0
      %493 = vmatprep.subr.mxu0 0.0
      %494 = vmatpush1.msra.mxu0 0.0
      %495 = vmatprep.subr.mxu0 0.0
      %496 = vmatpush1.msra.mxu0 0.0
      %497 = vmatprep.subr.mxu0 0.0
      %498 = vmatpush1.msra.mxu0 0.0
      %499 = vmatprep.subr.mxu0 0.0
      %500 = vmatpush1.msra.mxu0 0.0
      %501 = vmatprep.subr.mxu0 0.0
      %502 = vmatpush1.msra.mxu0 0.0
      %503 = vmatprep.subr.mxu0 0.0
      %504 = vmatpush1.msra.mxu0 0.0
      %505 = vmatprep.subr.mxu0 0.0
      %506 = vmatpush1.msra.mxu0 0.0
      %507 = vmatprep.subr.mxu0 0.0
      %508 = vmatpush1.msra.mxu0 0.0
      %509 = vmatprep.subr.mxu0 0.0
      %510 = vmatpush1.msra.mxu0 0.0
      %511 = vmatprep.subr.mxu0 0.0
      %512 = vmatpush1.msra.mxu0 0.0
      %513 = vmatprep.subr.mxu0 0.0
      %514 = vmatpush1.msra.mxu0 0.0
      %515 = vmatprep.subr.mxu0 0.0
      %516 = vmatpush1.msra.mxu0 0.0
      %517 = vmatprep.subr.mxu0 0.0
      %518 = vmatpush1.msra.mxu0 0.0
      %519 = vmatprep.subr.mxu0 0.0
      %520 = vmatpush1.msra.mxu0 0.0
      %521 = vmatprep.subr.mxu0 0.0
      %522 = vmatpush1.msra.mxu0 0.0
      %523 = vmatprep.subr.mxu0 0.0
      %524 = vmatpush1.msra.mxu0 0.0
      %525 = vmatprep.subr.mxu0 0.0
      %526 = vmatpush1.msra.mxu0 0.0
      %527 = vmatprep.subr.mxu0 0.0
      %528 = vmatpush1.msra.mxu0 0.0
      %529 = vmatprep.subr.mxu0 0.0
      %530 = vmatpush1.msra.mxu0 0.0
      %531 = vmatprep.subr.mxu0 0.0
      %532 = vmatpush1.msra.mxu0 0.0
      %533 = vmatprep.subr.mxu0 0.0
      %534 = vmatpush1.msra.mxu0 0.0
      %535 = vmatprep.subr.mxu0 0.0
      %536 = vmatpush1.msra.mxu0 0.0
      %537 = vmatprep.subr.mxu0 0.0
      %538 = vmatpush1.msra.mxu0 0.0
      %539 = vmatprep.subr.mxu0 0.0
      %540 = vmatpush1.msra.mxu0 0.0
      %541 = vmatprep.mubr.f32.mxu0 0.0
      %542 = vmatmul.mubr.f32.gmra.mrb[0].mxu0 %v457
      %v543 = vpop.f32.mrb[0].mxu0
      %v544 = vadd.f32 0.0, %v543
      %v545 = vpop.f32.mrb[0].mxu0
      %546 = vmatprep.mubr.f32.mxu0 0.0
      %547 = vmatmul.mubr.f32.gmra.mrb[0].mxu0 %v459
      %v548 = vpop.f32.mrb[0].mxu0
      %v549 = vadd.f32 0.0, %v548
      %v550 = vpop.f32.mrb[0].mxu0
      %551 = vmatprep.mubr.f32.mxu0 0.0
      %552 = vmatmul.mubr.f32.gmra.mrb[0].mxu0 %v461
      %v553 = vpop.f32.mrb[0].mxu0
      %v554 = vadd.f32 0.0, %v553
      %v555 = vpop.f32.mrb[0].mxu0
      %556 = vmatprep.mubr.f32.mxu0 0.0
      %557 = vmatmul.mubr.f32.gmra.mrb[0].mxu0 %v463
      %v558 = vpop.f32.mrb[0].mxu0
      %v559 = vadd.f32 0.0, %v558
      %v560 = vpop.f32.mrb[0].mxu0
      %561 = vmatprep.mubr.f32.mxu0 0.0
      %562 = vmatmul.mubr.f32.gmra.mrb[0].mxu0 %v465
      %v563 = vpop.f32.mrb[0].mxu0
      %v564 = vadd.f32 0.0, %v563
      %v565 = vpop.f32.mrb[0].mxu0
      %566 = vmatprep.mubr.f32.mxu0 0.0
      %567 = vmatmul.mubr.f32.gmra.mrb[0].mxu0 %v467
      %v568 = vpop.f32.mrb[0].mxu0
      %v569 = vadd.f32 0.0, %v568
      %v570 = vpop.f32.mrb[0].mxu0
      %571 = vmatprep.mubr.f32.mxu0 0.0
      %572 = vmatmul.mubr.f32.gmra.mrb[0].mxu0 %v469
      %v573 = vpop.f32.mrb[0].mxu0
      %v574 = vadd.f32 0.0, %v573
      %v575 = vpop.f32.mrb[0].mxu0
      %576 = vmatprep.mubr.f32.mxu0 0.0
      %577 = vmatmul.mubr.f32.gmra.mrb[0].mxu0 %v471
      %v578 = vpop.f32.mrb[0].mxu0
      %v579 = vadd.f32 0.0, %v578
      %v580 = vpop.f32.mrb[0].mxu0
      %581 = vdwg.mxu0
      %v582 = vsel %vm338, %v393, 0
      %v584 = vsel %vm338, %v395, 0
      %v586 = vsel %vm338, %v397, 0
      %v588 = vsel %vm338, %v399, 0
      %v590 = vsel %vm338, %v401, 0
      %v592 = vsel %vm338, %v403, 0
      %v594 = vsel %vm338, %v405, 0
      %v596 = vsel %vm338, %v407, 0
      %v599 = vsel %vm473, %v413, 0
      %601 = vmatprep.subr.mxu0 0.0
      %602 = vmatpush1.msra.mxu0 %v599
      %603 = vmatprep.subr.mxu0 0.0
      %604 = vmatpush1.msra.mxu0 0.0
      %605 = vmatprep.subr.mxu0 0.0
      %606 = vmatpush1.msra.mxu0 0.0
      %607 = vmatprep.subr.mxu0 0.0
      %608 = vmatpush1.msra.mxu0 0.0
      %609 = vmatprep.subr.mxu0 0.0
      %610 = vmatpush1.msra.mxu0 0.0
      %611 = vmatprep.subr.mxu0 0.0
      %612 = vmatpush1.msra.mxu0 0.0
      %613 = vmatprep.subr.mxu0 0.0
      %614 = vmatpush1.msra.mxu0 0.0
      %615 = vmatprep.subr.mxu0 0.0
      %616 = vmatpush1.msra.mxu0 0.0
      %617 = vmatprep.subr.mxu0 0.0
      %618 = vmatpush1.msra.mxu0 0.0
      %619 = vmatprep.subr.mxu0 0.0
      %620 = vmatpush1.msra.mxu0 0.0
      %621 = vmatprep.subr.mxu0 0.0
      %622 = vmatpush1.msra.mxu0 0.0
      %623 = vmatprep.subr.mxu0 0.0
      %624 = vmatpush1.msra.mxu0 0.0
      %625 = vmatprep.subr.mxu0 0.0
      %626 = vmatpush1.msra.mxu0 0.0
      %627 = vmatprep.subr.mxu0 0.0
      %628 = vmatpush1.msra.mxu0 0.0
      %629 = vmatprep.subr.mxu0 0.0
      %630 = vmatpush1.msra.mxu0 0.0
      %631 = vmatprep.subr.mxu0 0.0
      %632 = vmatpush1.msra.mxu0 0.0
      %633 = vmatprep.subr.mxu0 0.0
      %634 = vmatpush1.msra.mxu0 0.0
      %635 = vmatprep.subr.mxu0 0.0
      %636 = vmatpush1.msra.mxu0 0.0
      %637 = vmatprep.subr.mxu0 0.0
      %638 = vmatpush1.msra.mxu0 0.0
      %639 = vmatprep.subr.mxu0 0.0
      %640 = vmatpush1.msra.mxu0 0.0
      %641 = vmatprep.subr.mxu0 0.0
      %642 = vmatpush1.msra.mxu0 0.0
      %643 = vmatprep.subr.mxu0 0.0
      %644 = vmatpush1.msra.mxu0 0.0
      %645 = vmatprep.subr.mxu0 0.0
      %646 = vmatpush1.msra.mxu0 0.0
      %647 = vmatprep.subr.mxu0 0.0
      %648 = vmatpush1.msra.mxu0 0.0
      %649 = vmatprep.subr.mxu0 0.0
      %650 = vmatpush1.msra.mxu0 0.0
      %651 = vmatprep.subr.mxu0 0.0
      %652 = vmatpush1.msra.mxu0 0.0
      %653 = vmatprep.subr.mxu0 0.0
      %654 = vmatpush1.msra.mxu0 0.0
      %655 = vmatprep.subr.mxu0 0.0
      %656 = vmatpush1.msra.mxu0 0.0
      %657 = vmatprep.subr.mxu0 0.0
      %658 = vmatpush1.msra.mxu0 0.0
      %659 = vmatprep.subr.mxu0 0.0
      %660 = vmatpush1.msra.mxu0 0.0
      %661 = vmatprep.subr.mxu0 0.0
      %662 = vmatpush1.msra.mxu0 0.0
      %663 = vmatprep.subr.mxu0 0.0
      %664 = vmatpush1.msra.mxu0 0.0
      %665 = vmatprep.mubr.f32.mxu0 0.0
      %666 = vmatmul.mubr.f32.gmra.mrb[0].mxu0 %v582
      %v667 = vpop.f32.mrb[0].mxu0
      %v668 = vadd.f32 %v544, %v667
      %v669 = vpop.f32.mrb[0].mxu0
      %670 = vmatprep.mubr.f32.mxu0 0.0
      %671 = vmatmul.mubr.f32.gmra.mrb[0].mxu0 %v584
      %v672 = vpop.f32.mrb[0].mxu0
      %v673 = vadd.f32 %v549, %v672
      %v674 = vpop.f32.mrb[0].mxu0
      %675 = vmatprep.mubr.f32.mxu0 0.0
      %676 = vmatmul.mubr.f32.gmra.mrb[0].mxu0 %v586
      %v677 = vpop.f32.mrb[0].mxu0
      %v678 = vadd.f32 %v554, %v677
      %v679 = vpop.f32.mrb[0].mxu0
      %680 = vmatprep.mubr.f32.mxu0 0.0
      %681 = vmatmul.mubr.f32.gmra.mrb[0].mxu0 %v588
      %v682 = vpop.f32.mrb[0].mxu0
      %v683 = vadd.f32 %v559, %v682
      %v684 = vpop.f32.mrb[0].mxu0
      %685 = vmatprep.mubr.f32.mxu0 0.0
      %686 = vmatmul.mubr.f32.gmra.mrb[0].mxu0 %v590
      %v687 = vpop.f32.mrb[0].mxu0
      %v688 = vadd.f32 %v564, %v687
      %v689 = vpop.f32.mrb[0].mxu0
      %690 = vmatprep.mubr.f32.mxu0 0.0
      %691 = vmatmul.mubr.f32.gmra.mrb[0].mxu0 %v592
      %v692 = vpop.f32.mrb[0].mxu0
      %v693 = vadd.f32 %v569, %v692
      %v694 = vpop.f32.mrb[0].mxu0
      %695 = vmatprep.mubr.f32.mxu0 0.0
      %696 = vmatmul.mubr.f32.gmra.mrb[0].mxu0 %v594
      %v697 = vpop.f32.mrb[0].mxu0
      %v698 = vadd.f32 %v574, %v697
      %v699 = vpop.f32.mrb[0].mxu0
      %700 = vmatprep.mubr.f32.mxu0 0.0
      %701 = vmatmul.mubr.f32.gmra.mrb[0].mxu0 %v596
      %v702 = vpop.f32.mrb[0].mxu0
      %v703 = vadd.f32 %v579, %v702
      %v704 = vpop.f32.mrb[0].mxu0
      %705 = vdwg.mxu0
      %vm706 = vcmask 1045504
      %v707 = vrot.slane %v393, 2
      %v708 = vrot.slane %v394, 2
      %v709 = vsel %vm706, %v707, %v708
      %v710 = vrot.slane %v395, 2
      %v711 = vrot.slane %v396, 2
      %v712 = vsel %vm706, %v710, %v711
      %v713 = vrot.slane %v397, 2
      %v714 = vrot.slane %v398, 2
      %v715 = vsel %vm706, %v713, %v714
      %v716 = vrot.slane %v399, 2
      %v717 = vrot.slane %v400, 2
      %v718 = vsel %vm706, %v716, %v717
      %v719 = vrot.slane %v401, 2
      %v720 = vrot.slane %v402, 2
      %v721 = vsel %vm706, %v719, %v720
      %v722 = vrot.slane %v403, 2
      %v723 = vrot.slane %v404, 2
      %v724 = vsel %vm706, %v722, %v723
      %v725 = vrot.slane %v405, 2
      %v726 = vrot.slane %v406, 2
      %v727 = vsel %vm706, %v725, %v726
      %v728 = vrot.slane %v407, 2
      %v729 = vrot.slane %v408, 2
      %v730 = vsel %vm706, %v728, %v729
      %s731 = scalar_lea.vmem %s1, 8
      %v732 = vld [vmem:[%s731] sm:$0xf]
      %v733 = vsel %vm338, %v709, 0
      %v735 = vsel %vm338, %v712, 0
      %v737 = vsel %vm338, %v715, 0
      %v739 = vsel %vm338, %v718, 0
      %v741 = vsel %vm338, %v721, 0
      %v743 = vsel %vm338, %v724, 0
      %v745 = vsel %vm338, %v727, 0
      %v747 = vsel %vm338, %v730, 0
      %v750 = vsel %vm473, %v732, 0
      %752 = vmatprep.subr.mxu0 0.0
      %753 = vmatpush1.msra.mxu0 %v750
      %754 = vmatprep.subr.mxu0 0.0
      %755 = vmatpush1.msra.mxu0 0.0
      %756 = vmatprep.subr.mxu0 0.0
      %757 = vmatpush1.msra.mxu0 0.0
      %758 = vmatprep.subr.mxu0 0.0
      %759 = vmatpush1.msra.mxu0 0.0
      %760 = vmatprep.subr.mxu0 0.0
      %761 = vmatpush1.msra.mxu0 0.0
      %762 = vmatprep.subr.mxu0 0.0
      %763 = vmatpush1.msra.mxu0 0.0
      %764 = vmatprep.subr.mxu0 0.0
      %765 = vmatpush1.msra.mxu0 0.0
      %766 = vmatprep.subr.mxu0 0.0
      %767 = vmatpush1.msra.mxu0 0.0
      %768 = vmatprep.subr.mxu0 0.0
      %769 = vmatpush1.msra.mxu0 0.0
      %770 = vmatprep.subr.mxu0 0.0
      %771 = vmatpush1.msra.mxu0 0.0
      %772 = vmatprep.subr.mxu0 0.0
      %773 = vmatpush1.msra.mxu0 0.0
      %774 = vmatprep.subr.mxu0 0.0
      %775 = vmatpush1.msra.mxu0 0.0
      %776 = vmatprep.subr.mxu0 0.0
      %777 = vmatpush1.msra.mxu0 0.0
      %778 = vmatprep.subr.mxu0 0.0
      %779 = vmatpush1.msra.mxu0 0.0
      %780 = vmatprep.subr.mxu0 0.0
      %781 = vmatpush1.msra.mxu0 0.0
      %782 = vmatprep.subr.mxu0 0.0
      %783 = vmatpush1.msra.mxu0 0.0
      %784 = vmatprep.subr.mxu0 0.0
      %785 = vmatpush1.msra.mxu0 0.0
      %786 = vmatprep.subr.mxu0 0.0
      %787 = vmatpush1.msra.mxu0 0.0
      %788 = vmatprep.subr.mxu0 0.0
      %789 = vmatpush1.msra.mxu0 0.0
      %790 = vmatprep.subr.mxu0 0.0
      %791 = vmatpush1.msra.mxu0 0.0
      %792 = vmatprep.subr.mxu0 0.0
      %793 = vmatpush1.msra.mxu0 0.0
      %794 = vmatprep.subr.mxu0 0.0
      %795 = vmatpush1.msra.mxu0 0.0
      %796 = vmatprep.subr.mxu0 0.0
      %797 = vmatpush1.msra.mxu0 0.0
      %798 = vmatprep.subr.mxu0 0.0
      %799 = vmatpush1.msra.mxu0 0.0
      %800 = vmatprep.subr.mxu0 0.0
      %801 = vmatpush1.msra.mxu0 0.0
      %802 = vmatprep.subr.mxu0 0.0
      %803 = vmatpush1.msra.mxu0 0.0
      %804 = vmatprep.subr.mxu0 0.0
      %805 = vmatpush1.msra.mxu0 0.0
      %806 = vmatprep.subr.mxu0 0.0
      %807 = vmatpush1.msra.mxu0 0.0
      %808 = vmatprep.subr.mxu0 0.0
      %809 = vmatpush1.msra.mxu0 0.0
      %810 = vmatprep.subr.mxu0 0.0
      %811 = vmatpush1.msra.mxu0 0.0
      %812 = vmatprep.subr.mxu0 0.0
      %813 = vmatpush1.msra.mxu0 0.0
      %814 = vmatprep.subr.mxu0 0.0
      %815 = vmatpush1.msra.mxu0 0.0
      %816 = vmatprep.mubr.f32.mxu0 0.0
      %817 = vmatmul.mubr.f32.gmra.mrb[0].mxu0 %v733
      %v818 = vpop.f32.mrb[0].mxu0
      %v819 = vadd.f32 0.0, %v818
      %v820 = vpop.f32.mrb[0].mxu0
      %821 = vmatprep.mubr.f32.mxu0 0.0
      %822 = vmatmul.mubr.f32.gmra.mrb[0].mxu0 %v735
      %v823 = vpop.f32.mrb[0].mxu0
      %v824 = vadd.f32 0.0, %v823
      %v825 = vpop.f32.mrb[0].mxu0
      %826 = vmatprep.mubr.f32.mxu0 0.0
      %827 = vmatmul.mubr.f32.gmra.mrb[0].mxu0 %v737
      %v828 = vpop.f32.mrb[0].mxu0
      %v829 = vadd.f32 0.0, %v828
      %v830 = vpop.f32.mrb[0].mxu0
      %831 = vmatprep.mubr.f32.mxu0 0.0
      %832 = vmatmul.mubr.f32.gmra.mrb[0].mxu0 %v739
      %v833 = vpop.f32.mrb[0].mxu0
      %v834 = vadd.f32 0.0, %v833
      %v835 = vpop.f32.mrb[0].mxu0
      %836 = vmatprep.mubr.f32.mxu0 0.0
      %837 = vmatmul.mubr.f32.gmra.mrb[0].mxu0 %v741
      %v838 = vpop.f32.mrb[0].mxu0
      %v839 = vadd.f32 0.0, %v838
      %v840 = vpop.f32.mrb[0].mxu0
      %841 = vmatprep.mubr.f32.mxu0 0.0
      %842 = vmatmul.mubr.f32.gmra.mrb[0].mxu0 %v743
      %v843 = vpop.f32.mrb[0].mxu0
      %v844 = vadd.f32 0.0, %v843
      %v845 = vpop.f32.mrb[0].mxu0
      %846 = vmatprep.mubr.f32.mxu0 0.0
      %847 = vmatmul.mubr.f32.gmra.mrb[0].mxu0 %v745
      %v848 = vpop.f32.mrb[0].mxu0
      %v849 = vadd.f32 0.0, %v848
      %v850 = vpop.f32.mrb[0].mxu0
      %851 = vmatprep.mubr.f32.mxu0 0.0
      %852 = vmatmul.mubr.f32.gmra.mrb[0].mxu0 %v747
      %v853 = vpop.f32.mrb[0].mxu0
      %v854 = vadd.f32 0.0, %v853
      %v855 = vpop.f32.mrb[0].mxu0
      %856 = vdwg.mxu0
      %v857 = vadd.f32 %v668, %v819
      %v858 = vadd.f32 %v673, %v824
      %v859 = vadd.f32 %v678, %v829
      %v860 = vadd.f32 %v683, %v834
      %v861 = vadd.f32 %v688, %v839
      %v862 = vadd.f32 %v693, %v844
      %v863 = vadd.f32 %v698, %v849
      %v864 = vadd.f32 %v703, %v854
      %s865 = scalar_lea.vmem %s1, 12
      %v866 = vld [vmem:[%s865] sm:$0xf]
      %v868 = vsel %vm338, %v409, 0
      %v871 = vsel %vm473, %v866, 0
      %873 = vmatprep.subr.mxu0 0.0
      %874 = vmatpush1.msra.mxu0 %v871
      %875 = vmatprep.subr.mxu0 0.0
      %876 = vmatpush1.msra.mxu0 0.0
      %877 = vmatprep.subr.mxu0 0.0
      %878 = vmatpush1.msra.mxu0 0.0
      %879 = vmatprep.subr.mxu0 0.0
      %880 = vmatpush1.msra.mxu0 0.0
      %881 = vmatprep.subr.mxu0 0.0
      %882 = vmatpush1.msra.mxu0 0.0
      %883 = vmatprep.subr.mxu0 0.0
      %884 = vmatpush1.msra.mxu0 0.0
      %885 = vmatprep.subr.mxu0 0.0
      %886 = vmatpush1.msra.mxu0 0.0
      %887 = vmatprep.subr.mxu0 0.0
      %888 = vmatpush1.msra.mxu0 0.0
      %889 = vmatprep.subr.mxu0 0.0
      %890 = vmatpush1.msra.mxu0 0.0
      %891 = vmatprep.subr.mxu0 0.0
      %892 = vmatpush1.msra.mxu0 0.0
      %893 = vmatprep.subr.mxu0 0.0
      %894 = vmatpush1.msra.mxu0 0.0
      %895 = vmatprep.subr.mxu0 0.0
      %896 = vmatpush1.msra.mxu0 0.0
      %897 = vmatprep.subr.mxu0 0.0
      %898 = vmatpush1.msra.mxu0 0.0
      %899 = vmatprep.subr.mxu0 0.0
      %900 = vmatpush1.msra.mxu0 0.0
      %901 = vmatprep.subr.mxu0 0.0
      %902 = vmatpush1.msra.mxu0 0.0
      %903 = vmatprep.subr.mxu0 0.0
      %904 = vmatpush1.msra.mxu0 0.0
      %905 = vmatprep.subr.mxu0 0.0
      %906 = vmatpush1.msra.mxu0 0.0
      %907 = vmatprep.subr.mxu0 0.0
      %908 = vmatpush1.msra.mxu0 0.0
      %909 = vmatprep.subr.mxu0 0.0
      %910 = vmatpush1.msra.mxu0 0.0
      %911 = vmatprep.subr.mxu0 0.0
      %912 = vmatpush1.msra.mxu0 0.0
      %913 = vmatprep.subr.mxu0 0.0
      %914 = vmatpush1.msra.mxu0 0.0
      %915 = vmatprep.subr.mxu0 0.0
      %916 = vmatpush1.msra.mxu0 0.0
      %917 = vmatprep.subr.mxu0 0.0
      %918 = vmatpush1.msra.mxu0 0.0
      %919 = vmatprep.subr.mxu0 0.0
      %920 = vmatpush1.msra.mxu0 0.0
      %921 = vmatprep.subr.mxu0 0.0
      %922 = vmatpush1.msra.mxu0 0.0
      %923 = vmatprep.subr.mxu0 0.0
      %924 = vmatpush1.msra.mxu0 0.0
      %925 = vmatprep.subr.mxu0 0.0
      %926 = vmatpush1.msra.mxu0 0.0
      %927 = vmatprep.subr.mxu0 0.0
      %928 = vmatpush1.msra.mxu0 0.0
      %929 = vmatprep.subr.mxu0 0.0
      %930 = vmatpush1.msra.mxu0 0.0
      %931 = vmatprep.subr.mxu0 0.0
      %932 = vmatpush1.msra.mxu0 0.0
      %933 = vmatprep.subr.mxu0 0.0
      %934 = vmatpush1.msra.mxu0 0.0
      %935 = vmatprep.subr.mxu0 0.0
      %936 = vmatpush1.msra.mxu0 0.0
      %937 = vmatprep.mubr.f32.mxu0 0.0
      %938 = vmatmul.mubr.f32.gmra.mrb[0].mxu0 %v584
      %v939 = vpop.f32.mrb[0].mxu0
      %v940 = vadd.f32 0.0, %v939
      %v941 = vpop.f32.mrb[0].mxu0
      %942 = vmatprep.mubr.f32.mxu0 0.0
      %943 = vmatmul.mubr.f32.gmra.mrb[0].mxu0 %v586
      %v944 = vpop.f32.mrb[0].mxu0
      %v945 = vadd.f32 0.0, %v944
      %v946 = vpop.f32.mrb[0].mxu0
      %947 = vmatprep.mubr.f32.mxu0 0.0
      %948 = vmatmul.mubr.f32.gmra.mrb[0].mxu0 %v588
      %v949 = vpop.f32.mrb[0].mxu0
      %v950 = vadd.f32 0.0, %v949
      %v951 = vpop.f32.mrb[0].mxu0
      %952 = vmatprep.mubr.f32.mxu0 0.0
      %953 = vmatmul.mubr.f32.gmra.mrb[0].mxu0 %v590
      %v954 = vpop.f32.mrb[0].mxu0
      %v955 = vadd.f32 0.0, %v954
      %v956 = vpop.f32.mrb[0].mxu0
      %957 = vmatprep.mubr.f32.mxu0 0.0
      %958 = vmatmul.mubr.f32.gmra.mrb[0].mxu0 %v592
      %v959 = vpop.f32.mrb[0].mxu0
      %v960 = vadd.f32 0.0, %v959
      %v961 = vpop.f32.mrb[0].mxu0
      %962 = vmatprep.mubr.f32.mxu0 0.0
      %963 = vmatmul.mubr.f32.gmra.mrb[0].mxu0 %v594
      %v964 = vpop.f32.mrb[0].mxu0
      %v965 = vadd.f32 0.0, %v964
      %v966 = vpop.f32.mrb[0].mxu0
      %967 = vmatprep.mubr.f32.mxu0 0.0
      %968 = vmatmul.mubr.f32.gmra.mrb[0].mxu0 %v596
      %v969 = vpop.f32.mrb[0].mxu0
      %v970 = vadd.f32 0.0, %v969
      %v971 = vpop.f32.mrb[0].mxu0
      %972 = vmatprep.mubr.f32.mxu0 0.0
      %973 = vmatmul.mubr.f32.gmra.mrb[0].mxu0 %v868
      %v974 = vpop.f32.mrb[0].mxu0
      %v975 = vadd.f32 0.0, %v974
      %v976 = vpop.f32.mrb[0].mxu0
      %977 = vdwg.mxu0
      %v978 = vadd.f32 %v857, %v940
      %v979 = vadd.f32 %v858, %v945
      %v980 = vadd.f32 %v859, %v950
      %v981 = vadd.f32 %v860, %v955
      %v982 = vadd.f32 %v861, %v960
      %v983 = vadd.f32 %v862, %v965
      %v984 = vadd.f32 %v863, %v970
      %v985 = vadd.f32 %v864, %v975
      %v987 = vrot.slane %v409, 1
      %v988 = vrot.slane %v410, 1
      %v989 = vsel %vm430, %v987, %v988
      %s990 = scalar_lea.vmem %s1, 16
      %v991 = vld [vmem:[%s990] sm:$0xf]
      %v992 = vsel %vm338, %v989, 0
      %v995 = vsel %vm473, %v991, 0
      %997 = vmatprep.subr.mxu0 0.0
      %998 = vmatpush1.msra.mxu0 %v995
      %999 = vmatprep.subr.mxu0 0.0
      %1000 = vmatpush1.msra.mxu0 0.0
      %1001 = vmatprep.subr.mxu0 0.0
      %1002 = vmatpush1.msra.mxu0 0.0
      %1003 = vmatprep.subr.mxu0 0.0
      %1004 = vmatpush1.msra.mxu0 0.0
      %1005 = vmatprep.subr.mxu0 0.0
      %1006 = vmatpush1.msra.mxu0 0.0
      %1007 = vmatprep.subr.mxu0 0.0
      %1008 = vmatpush1.msra.mxu0 0.0
      %1009 = vmatprep.subr.mxu0 0.0
      %1010 = vmatpush1.msra.mxu0 0.0
      %1011 = vmatprep.subr.mxu0 0.0
      %1012 = vmatpush1.msra.mxu0 0.0
      %1013 = vmatprep.subr.mxu0 0.0
      %1014 = vmatpush1.msra.mxu0 0.0
      %1015 = vmatprep.subr.mxu0 0.0
      %1016 = vmatpush1.msra.mxu0 0.0
      %1017 = vmatprep.subr.mxu0 0.0
      %1018 = vmatpush1.msra.mxu0 0.0
      %1019 = vmatprep.subr.mxu0 0.0
      %1020 = vmatpush1.msra.mxu0 0.0
      %1021 = vmatprep.subr.mxu0 0.0
      %1022 = vmatpush1.msra.mxu0 0.0
      %1023 = vmatprep.subr.mxu0 0.0
      %1024 = vmatpush1.msra.mxu0 0.0
      %1025 = vmatprep.subr.mxu0 0.0
      %1026 = vmatpush1.msra.mxu0 0.0
      %1027 = vmatprep.subr.mxu0 0.0
      %1028 = vmatpush1.msra.mxu0 0.0
      %1029 = vmatprep.subr.mxu0 0.0
      %1030 = vmatpush1.msra.mxu0 0.0
      %1031 = vmatprep.subr.mxu0 0.0
      %1032 = vmatpush1.msra.mxu0 0.0
      %1033 = vmatprep.subr.mxu0 0.0
      %1034 = vmatpush1.msra.mxu0 0.0
      %1035 = vmatprep.subr.mxu0 0.0
      %1036 = vmatpush1.msra.mxu0 0.0
      %1037 = vmatprep.subr.mxu0 0.0
      %1038 = vmatpush1.msra.mxu0 0.0
      %1039 = vmatprep.subr.mxu0 0.0
      %1040 = vmatpush1.msra.mxu0 0.0
      %1041 = vmatprep.subr.mxu0 0.0
      %1042 = vmatpush1.msra.mxu0 0.0
      %1043 = vmatprep.subr.mxu0 0.0
      %1044 = vmatpush1.msra.mxu0 0.0
      %1045 = vmatprep.subr.mxu0 0.0
      %1046 = vmatpush1.msra.mxu0 0.0
      %1047 = vmatprep.subr.mxu0 0.0
      %1048 = vmatpush1.msra.mxu0 0.0
      %1049 = vmatprep.subr.mxu0 0.0
      %1050 = vmatpush1.msra.mxu0 0.0
      %1051 = vmatprep.subr.mxu0 0.0
      %1052 = vmatpush1.msra.mxu0 0.0
      %1053 = vmatprep.subr.mxu0 0.0
      %1054 = vmatpush1.msra.mxu0 0.0
      %1055 = vmatprep.subr.mxu0 0.0
      %1056 = vmatpush1.msra.mxu0 0.0
      %1057 = vmatprep.subr.mxu0 0.0
      %1058 = vmatpush1.msra.mxu0 0.0
      %1059 = vmatprep.subr.mxu0 0.0
      %1060 = vmatpush1.msra.mxu0 0.0
      %1061 = vmatprep.mubr.f32.mxu0 0.0
      %1062 = vmatmul.mubr.f32.gmra.mrb[0].mxu0 %v459
      %v1063 = vpop.f32.mrb[0].mxu0
      %v1064 = vadd.f32 0.0, %v1063
      %v1065 = vpop.f32.mrb[0].mxu0
      %1066 = vmatprep.mubr.f32.mxu0 0.0
      %1067 = vmatmul.mubr.f32.gmra.mrb[0].mxu0 %v461
      %v1068 = vpop.f32.mrb[0].mxu0
      %v1069 = vadd.f32 0.0, %v1068
      %v1070 = vpop.f32.mrb[0].mxu0
      %1071 = vmatprep.mubr.f32.mxu0 0.0
      %1072 = vmatmul.mubr.f32.gmra.mrb[0].mxu0 %v463
      %v1073 = vpop.f32.mrb[0].mxu0
      %v1074 = vadd.f32 0.0, %v1073
      %v1075 = vpop.f32.mrb[0].mxu0
      %1076 = vmatprep.mubr.f32.mxu0 0.0
      %1077 = vmatmul.mubr.f32.gmra.mrb[0].mxu0 %v465
      %v1078 = vpop.f32.mrb[0].mxu0
      %v1079 = vadd.f32 0.0, %v1078
      %v1080 = vpop.f32.mrb[0].mxu0
      %1081 = vmatprep.mubr.f32.mxu0 0.0
      %1082 = vmatmul.mubr.f32.gmra.mrb[0].mxu0 %v467
      %v1083 = vpop.f32.mrb[0].mxu0
      %v1084 = vadd.f32 0.0, %v1083
      %v1085 = vpop.f32.mrb[0].mxu0
      %1086 = vmatprep.mubr.f32.mxu0 0.0
      %1087 = vmatmul.mubr.f32.gmra.mrb[0].mxu0 %v469
      %v1088 = vpop.f32.mrb[0].mxu0
      %v1089 = vadd.f32 0.0, %v1088
      %v1090 = vpop.f32.mrb[0].mxu0
      %1091 = vmatprep.mubr.f32.mxu0 0.0
      %1092 = vmatmul.mubr.f32.gmra.mrb[0].mxu0 %v471
      %v1093 = vpop.f32.mrb[0].mxu0
      %v1094 = vadd.f32 0.0, %v1093
      %v1095 = vpop.f32.mrb[0].mxu0
      %1096 = vmatprep.mubr.f32.mxu0 0.0
      %1097 = vmatmul.mubr.f32.gmra.mrb[0].mxu0 %v992
      %v1098 = vpop.f32.mrb[0].mxu0
      %v1099 = vadd.f32 0.0, %v1098
      %v1100 = vpop.f32.mrb[0].mxu0
      %1101 = vdwg.mxu0
      %v1102 = vadd.f32 %v978, %v1064
      %v1103 = vadd.f32 %v979, %v1069
      %v1104 = vadd.f32 %v980, %v1074
      %v1105 = vadd.f32 %v981, %v1079
      %v1106 = vadd.f32 %v982, %v1084
      %v1107 = vadd.f32 %v983, %v1089
      %v1108 = vadd.f32 %v984, %v1094
      %v1109 = vadd.f32 %v985, %v1099
      %v1110 = vrot.slane %v409, 2
      %v1111 = vrot.slane %v410, 2
      %v1112 = vsel %vm706, %v1110, %v1111
      %s1113 = scalar_lea.vmem %s1, 20
      %v1114 = vld [vmem:[%s1113] sm:$0xf]
      %v1115 = vsel %vm338, %v1112, 0
      %v1118 = vsel %vm473, %v1114, 0
      %1120 = vmatprep.subr.mxu0 0.0
      %1121 = vmatpush1.msra.mxu0 %v1118
      %1122 = vmatprep.subr.mxu0 0.0
      %1123 = vmatpush1.msra.mxu0 0.0
      %1124 = vmatprep.subr.mxu0 0.0
      %1125 = vmatpush1.msra.mxu0 0.0
      %1126 = vmatprep.subr.mxu0 0.0
      %1127 = vmatpush1.msra.mxu0 0.0
      %1128 = vmatprep.subr.mxu0 0.0
      %1129 = vmatpush1.msra.mxu0 0.0
      %1130 = vmatprep.subr.mxu0 0.0
      %1131 = vmatpush1.msra.mxu0 0.0
      %1132 = vmatprep.subr.mxu0 0.0
      %1133 = vmatpush1.msra.mxu0 0.0
      %1134 = vmatprep.subr.mxu0 0.0
      %1135 = vmatpush1.msra.mxu0 0.0
      %1136 = vmatprep.subr.mxu0 0.0
      %1137 = vmatpush1.msra.mxu0 0.0
      %1138 = vmatprep.subr.mxu0 0.0
      %1139 = vmatpush1.msra.mxu0 0.0
      %1140 = vmatprep.subr.mxu0 0.0
      %1141 = vmatpush1.msra.mxu0 0.0
      %1142 = vmatprep.subr.mxu0 0.0
      %1143 = vmatpush1.msra.mxu0 0.0
      %1144 = vmatprep.subr.mxu0 0.0
      %1145 = vmatpush1.msra.mxu0 0.0
      %1146 = vmatprep.subr.mxu0 0.0
      %1147 = vmatpush1.msra.mxu0 0.0
      %1148 = vmatprep.subr.mxu0 0.0
      %1149 = vmatpush1.msra.mxu0 0.0
      %1150 = vmatprep.subr.mxu0 0.0
      %1151 = vmatpush1.msra.mxu0 0.0
      %1152 = vmatprep.subr.mxu0 0.0
      %1153 = vmatpush1.msra.mxu0 0.0
      %1154 = vmatprep.subr.mxu0 0.0
      %1155 = vmatpush1.msra.mxu0 0.0
      %1156 = vmatprep.subr.mxu0 0.0
      %1157 = vmatpush1.msra.mxu0 0.0
      %1158 = vmatprep.subr.mxu0 0.0
      %1159 = vmatpush1.msra.mxu0 0.0
      %1160 = vmatprep.subr.mxu0 0.0
      %1161 = vmatpush1.msra.mxu0 0.0
      %1162 = vmatprep.subr.mxu0 0.0
      %1163 = vmatpush1.msra.mxu0 0.0
      %1164 = vmatprep.subr.mxu0 0.0
      %1165 = vmatpush1.msra.mxu0 0.0
      %1166 = vmatprep.subr.mxu0 0.0
      %1167 = vmatpush1.msra.mxu0 0.0
      %1168 = vmatprep.subr.mxu0 0.0
      %1169 = vmatpush1.msra.mxu0 0.0
      %1170 = vmatprep.subr.mxu0 0.0
      %1171 = vmatpush1.msra.mxu0 0.0
      %1172 = vmatprep.subr.mxu0 0.0
      %1173 = vmatpush1.msra.mxu0 0.0
      %1174 = vmatprep.subr.mxu0 0.0
      %1175 = vmatpush1.msra.mxu0 0.0
      %1176 = vmatprep.subr.mxu0 0.0
      %1177 = vmatpush1.msra.mxu0 0.0
      %1178 = vmatprep.subr.mxu0 0.0
      %1179 = vmatpush1.msra.mxu0 0.0
      %1180 = vmatprep.subr.mxu0 0.0
      %1181 = vmatpush1.msra.mxu0 0.0
      %1182 = vmatprep.subr.mxu0 0.0
      %1183 = vmatpush1.msra.mxu0 0.0
      %1184 = vmatprep.mubr.f32.mxu0 0.0
      %1185 = vmatmul.mubr.f32.gmra.mrb[0].mxu0 %v735
      %v1186 = vpop.f32.mrb[0].mxu0
      %v1187 = vadd.f32 0.0, %v1186
      %v1188 = vpop.f32.mrb[0].mxu0
      %1189 = vmatprep.mubr.f32.mxu0 0.0
      %1190 = vmatmul.mubr.f32.gmra.mrb[0].mxu0 %v737
      %v1191 = vpop.f32.mrb[0].mxu0
      %v1192 = vadd.f32 0.0, %v1191
      %v1193 = vpop.f32.mrb[0].mxu0
      %1194 = vmatprep.mubr.f32.mxu0 0.0
      %1195 = vmatmul.mubr.f32.gmra.mrb[0].mxu0 %v739
      %v1196 = vpop.f32.mrb[0].mxu0
      %v1197 = vadd.f32 0.0, %v1196
      %v1198 = vpop.f32.mrb[0].mxu0
      %1199 = vmatprep.mubr.f32.mxu0 0.0
      %1200 = vmatmul.mubr.f32.gmra.mrb[0].mxu0 %v741
      %v1201 = vpop.f32.mrb[0].mxu0
      %v1202 = vadd.f32 0.0, %v1201
      %v1203 = vpop.f32.mrb[0].mxu0
      %1204 = vmatprep.mubr.f32.mxu0 0.0
      %1205 = vmatmul.mubr.f32.gmra.mrb[0].mxu0 %v743
      %v1206 = vpop.f32.mrb[0].mxu0
      %v1207 = vadd.f32 0.0, %v1206
      %v1208 = vpop.f32.mrb[0].mxu0
      %1209 = vmatprep.mubr.f32.mxu0 0.0
      %1210 = vmatmul.mubr.f32.gmra.mrb[0].mxu0 %v745
      %v1211 = vpop.f32.mrb[0].mxu0
      %v1212 = vadd.f32 0.0, %v1211
      %v1213 = vpop.f32.mrb[0].mxu0
      %1214 = vmatprep.mubr.f32.mxu0 0.0
      %1215 = vmatmul.mubr.f32.gmra.mrb[0].mxu0 %v747
      %v1216 = vpop.f32.mrb[0].mxu0
      %v1217 = vadd.f32 0.0, %v1216
      %v1218 = vpop.f32.mrb[0].mxu0
      %1219 = vmatprep.mubr.f32.mxu0 0.0
      %1220 = vmatmul.mubr.f32.gmra.mrb[0].mxu0 %v1115
      %v1221 = vpop.f32.mrb[0].mxu0
      %v1222 = vadd.f32 0.0, %v1221
      %v1223 = vpop.f32.mrb[0].mxu0
      %1224 = vdwg.mxu0
      %v1225 = vadd.f32 %v1102, %v1187
      %v1226 = vadd.f32 %v1103, %v1192
      %v1227 = vadd.f32 %v1104, %v1197
      %v1228 = vadd.f32 %v1105, %v1202
      %v1229 = vadd.f32 %v1106, %v1207
      %v1230 = vadd.f32 %v1107, %v1212
      %v1231 = vadd.f32 %v1108, %v1217
      %v1232 = vadd.f32 %v1109, %v1222
      %s1233 = scalar_lea.vmem %s1, 24
      %v1234 = vld [vmem:[%s1233] sm:$0xf]
      %v1236 = vsel %vm338, %v411, 0
      %v1239 = vsel %vm473, %v1234, 0
      %1241 = vmatprep.subr.mxu0 0.0
      %1242 = vmatpush1.msra.mxu0 %v1239
      %1243 = vmatprep.subr.mxu0 0.0
      %1244 = vmatpush1.msra.mxu0 0.0
      %1245 = vmatprep.subr.mxu0 0.0
      %1246 = vmatpush1.msra.mxu0 0.0
      %1247 = vmatprep.subr.mxu0 0.0
      %1248 = vmatpush1.msra.mxu0 0.0
      %1249 = vmatprep.subr.mxu0 0.0
      %1250 = vmatpush1.msra.mxu0 0.0
      %1251 = vmatprep.subr.mxu0 0.0
      %1252 = vmatpush1.msra.mxu0 0.0
      %1253 = vmatprep.subr.mxu0 0.0
      %1254 = vmatpush1.msra.mxu0 0.0
      %1255 = vmatprep.subr.mxu0 0.0
      %1256 = vmatpush1.msra.mxu0 0.0
      %1257 = vmatprep.subr.mxu0 0.0
      %1258 = vmatpush1.msra.mxu0 0.0
      %1259 = vmatprep.subr.mxu0 0.0
      %1260 = vmatpush1.msra.mxu0 0.0
      %1261 = vmatprep.subr.mxu0 0.0
      %1262 = vmatpush1.msra.mxu0 0.0
      %1263 = vmatprep.subr.mxu0 0.0
      %1264 = vmatpush1.msra.mxu0 0.0
      %1265 = vmatprep.subr.mxu0 0.0
      %1266 = vmatpush1.msra.mxu0 0.0
      %1267 = vmatprep.subr.mxu0 0.0
      %1268 = vmatpush1.msra.mxu0 0.0
      %1269 = vmatprep.subr.mxu0 0.0
      %1270 = vmatpush1.msra.mxu0 0.0
      %1271 = vmatprep.subr.mxu0 0.0
      %1272 = vmatpush1.msra.mxu0 0.0
      %1273 = vmatprep.subr.mxu0 0.0
      %1274 = vmatpush1.msra.mxu0 0.0
      %1275 = vmatprep.subr.mxu0 0.0
      %1276 = vmatpush1.msra.mxu0 0.0
      %1277 = vmatprep.subr.mxu0 0.0
      %1278 = vmatpush1.msra.mxu0 0.0
      %1279 = vmatprep.subr.mxu0 0.0
      %1280 = vmatpush1.msra.mxu0 0.0
      %1281 = vmatprep.subr.mxu0 0.0
      %1282 = vmatpush1.msra.mxu0 0.0
      %1283 = vmatprep.subr.mxu0 0.0
      %1284 = vmatpush1.msra.mxu0 0.0
      %1285 = vmatprep.subr.mxu0 0.0
      %1286 = vmatpush1.msra.mxu0 0.0
      %1287 = vmatprep.subr.mxu0 0.0
      %1288 = vmatpush1.msra.mxu0 0.0
      %1289 = vmatprep.subr.mxu0 0.0
      %1290 = vmatpush1.msra.mxu0 0.0
      %1291 = vmatprep.subr.mxu0 0.0
      %1292 = vmatpush1.msra.mxu0 0.0
      %1293 = vmatprep.subr.mxu0 0.0
      %1294 = vmatpush1.msra.mxu0 0.0
      %1295 = vmatprep.subr.mxu0 0.0
      %1296 = vmatpush1.msra.mxu0 0.0
      %1297 = vmatprep.subr.mxu0 0.0
      %1298 = vmatpush1.msra.mxu0 0.0
      %1299 = vmatprep.subr.mxu0 0.0
      %1300 = vmatpush1.msra.mxu0 0.0
      %1301 = vmatprep.subr.mxu0 0.0
      %1302 = vmatpush1.msra.mxu0 0.0
      %1303 = vmatprep.subr.mxu0 0.0
      %1304 = vmatpush1.msra.mxu0 0.0
      %1305 = vmatprep.mubr.f32.mxu0 0.0
      %1306 = vmatmul.mubr.f32.gmra.mrb[0].mxu0 %v586
      %v1307 = vpop.f32.mrb[0].mxu0
      %v1308 = vadd.f32 0.0, %v1307
      %v1309 = vpop.f32.mrb[0].mxu0
      %1310 = vmatprep.mubr.f32.mxu0 0.0
      %1311 = vmatmul.mubr.f32.gmra.mrb[0].mxu0 %v588
      %v1312 = vpop.f32.mrb[0].mxu0
      %v1313 = vadd.f32 0.0, %v1312
      %v1314 = vpop.f32.mrb[0].mxu0
      %1315 = vmatprep.mubr.f32.mxu0 0.0
      %1316 = vmatmul.mubr.f32.gmra.mrb[0].mxu0 %v590
      %v1317 = vpop.f32.mrb[0].mxu0
      %v1318 = vadd.f32 0.0, %v1317
      %v1319 = vpop.f32.mrb[0].mxu0
      %1320 = vmatprep.mubr.f32.mxu0 0.0
      %1321 = vmatmul.mubr.f32.gmra.mrb[0].mxu0 %v592
      %v1322 = vpop.f32.mrb[0].mxu0
      %v1323 = vadd.f32 0.0, %v1322
      %v1324 = vpop.f32.mrb[0].mxu0
      %1325 = vmatprep.mubr.f32.mxu0 0.0
      %1326 = vmatmul.mubr.f32.gmra.mrb[0].mxu0 %v594
      %v1327 = vpop.f32.mrb[0].mxu0
      %v1328 = vadd.f32 0.0, %v1327
      %v1329 = vpop.f32.mrb[0].mxu0
      %1330 = vmatprep.mubr.f32.mxu0 0.0
      %1331 = vmatmul.mubr.f32.gmra.mrb[0].mxu0 %v596
      %v1332 = vpop.f32.mrb[0].mxu0
      %v1333 = vadd.f32 0.0, %v1332
      %v1334 = vpop.f32.mrb[0].mxu0
      %1335 = vmatprep.mubr.f32.mxu0 0.0
      %1336 = vmatmul.mubr.f32.gmra.mrb[0].mxu0 %v868
      %v1337 = vpop.f32.mrb[0].mxu0
      %v1338 = vadd.f32 0.0, %v1337
      %v1339 = vpop.f32.mrb[0].mxu0
      %1340 = vmatprep.mubr.f32.mxu0 0.0
      %1341 = vmatmul.mubr.f32.gmra.mrb[0].mxu0 %v1236
      %v1342 = vpop.f32.mrb[0].mxu0
      %v1343 = vadd.f32 0.0, %v1342
      %v1344 = vpop.f32.mrb[0].mxu0
      %1345 = vdwg.mxu0
      %v1346 = vadd.f32 %v1225, %v1308
      %v1347 = vadd.f32 %v1226, %v1313
      %v1348 = vadd.f32 %v1227, %v1318
      %v1349 = vadd.f32 %v1228, %v1323
      %v1350 = vadd.f32 %v1229, %v1328
      %v1351 = vadd.f32 %v1230, %v1333
      %v1352 = vadd.f32 %v1231, %v1338
      %v1353 = vadd.f32 %v1232, %v1343
      %v1355 = vrot.slane %v411, 1
      %v1356 = vrot.slane %v412, 1
      %v1357 = vsel %vm430, %v1355, %v1356
      %s1358 = scalar_lea.vmem %s1, 28
      %v1359 = vld [vmem:[%s1358] sm:$0xf]
      %v1360 = vsel %vm338, %v1357, 0
      %v1363 = vsel %vm473, %v1359, 0
      %1365 = vmatprep.subr.mxu0 0.0
      %1366 = vmatpush1.msra.mxu0 %v1363
      %1367 = vmatprep.subr.mxu0 0.0
      %1368 = vmatpush1.msra.mxu0 0.0
      %1369 = vmatprep.subr.mxu0 0.0
      %1370 = vmatpush1.msra.mxu0 0.0
      %1371 = vmatprep.subr.mxu0 0.0
      %1372 = vmatpush1.msra.mxu0 0.0
      %1373 = vmatprep.subr.mxu0 0.0
      %1374 = vmatpush1.msra.mxu0 0.0
      %1375 = vmatprep.subr.mxu0 0.0
      %1376 = vmatpush1.msra.mxu0 0.0
      %1377 = vmatprep.subr.mxu0 0.0
      %1378 = vmatpush1.msra.mxu0 0.0
      %1379 = vmatprep.subr.mxu0 0.0
      %1380 = vmatpush1.msra.mxu0 0.0
      %1381 = vmatprep.subr.mxu0 0.0
      %1382 = vmatpush1.msra.mxu0 0.0
      %1383 = vmatprep.subr.mxu0 0.0
      %1384 = vmatpush1.msra.mxu0 0.0
      %1385 = vmatprep.subr.mxu0 0.0
      %1386 = vmatpush1.msra.mxu0 0.0
      %1387 = vmatprep.subr.mxu0 0.0
      %1388 = vmatpush1.msra.mxu0 0.0
      %1389 = vmatprep.subr.mxu0 0.0
      %1390 = vmatpush1.msra.mxu0 0.0
      %1391 = vmatprep.subr.mxu0 0.0
      %1392 = vmatpush1.msra.mxu0 0.0
      %1393 = vmatprep.subr.mxu0 0.0
      %1394 = vmatpush1.msra.mxu0 0.0
      %1395 = vmatprep.subr.mxu0 0.0
      %1396 = vmatpush1.msra.mxu0 0.0
      %1397 = vmatprep.subr.mxu0 0.0
      %1398 = vmatpush1.msra.mxu0 0.0
      %1399 = vmatprep.subr.mxu0 0.0
      %1400 = vmatpush1.msra.mxu0 0.0
      %1401 = vmatprep.subr.mxu0 0.0
      %1402 = vmatpush1.msra.mxu0 0.0
      %1403 = vmatprep.subr.mxu0 0.0
      %1404 = vmatpush1.msra.mxu0 0.0
      %1405 = vmatprep.subr.mxu0 0.0
      %1406 = vmatpush1.msra.mxu0 0.0
      %1407 = vmatprep.subr.mxu0 0.0
      %1408 = vmatpush1.msra.mxu0 0.0
      %1409 = vmatprep.subr.mxu0 0.0
      %1410 = vmatpush1.msra.mxu0 0.0
      %1411 = vmatprep.subr.mxu0 0.0
      %1412 = vmatpush1.msra.mxu0 0.0
      %1413 = vmatprep.subr.mxu0 0.0
      %1414 = vmatpush1.msra.mxu0 0.0
      %1415 = vmatprep.subr.mxu0 0.0
      %1416 = vmatpush1.msra.mxu0 0.0
      %1417 = vmatprep.subr.mxu0 0.0
      %1418 = vmatpush1.msra.mxu0 0.0
      %1419 = vmatprep.subr.mxu0 0.0
      %1420 = vmatpush1.msra.mxu0 0.0
      %1421 = vmatprep.subr.mxu0 0.0
      %1422 = vmatpush1.msra.mxu0 0.0
      %1423 = vmatprep.subr.mxu0 0.0
      %1424 = vmatpush1.msra.mxu0 0.0
      %1425 = vmatprep.subr.mxu0 0.0
      %1426 = vmatpush1.msra.mxu0 0.0
      %1427 = vmatprep.subr.mxu0 0.0
      %1428 = vmatpush1.msra.mxu0 0.0
      %1429 = vmatprep.mubr.f32.mxu0 0.0
      %1430 = vmatmul.mubr.f32.gmra.mrb[0].mxu0 %v461
      %v1431 = vpop.f32.mrb[0].mxu0
      %v1432 = vadd.f32 0.0, %v1431
      %v1433 = vpop.f32.mrb[0].mxu0
      %1434 = vmatprep.mubr.f32.mxu0 0.0
      %1435 = vmatmul.mubr.f32.gmra.mrb[0].mxu0 %v463
      %v1436 = vpop.f32.mrb[0].mxu0
      %v1437 = vadd.f32 0.0, %v1436
      %v1438 = vpop.f32.mrb[0].mxu0
      %1439 = vmatprep.mubr.f32.mxu0 0.0
      %1440 = vmatmul.mubr.f32.gmra.mrb[0].mxu0 %v465
      %v1441 = vpop.f32.mrb[0].mxu0
      %v1442 = vadd.f32 0.0, %v1441
      %v1443 = vpop.f32.mrb[0].mxu0
      %1444 = vmatprep.mubr.f32.mxu0 0.0
      %1445 = vmatmul.mubr.f32.gmra.mrb[0].mxu0 %v467
      %v1446 = vpop.f32.mrb[0].mxu0
      %v1447 = vadd.f32 0.0, %v1446
      %v1448 = vpop.f32.mrb[0].mxu0
      %1449 = vmatprep.mubr.f32.mxu0 0.0
      %1450 = vmatmul.mubr.f32.gmra.mrb[0].mxu0 %v469
      %v1451 = vpop.f32.mrb[0].mxu0
      %v1452 = vadd.f32 0.0, %v1451
      %v1453 = vpop.f32.mrb[0].mxu0
      %1454 = vmatprep.mubr.f32.mxu0 0.0
      %1455 = vmatmul.mubr.f32.gmra.mrb[0].mxu0 %v471
      %v1456 = vpop.f32.mrb[0].mxu0
      %v1457 = vadd.f32 0.0, %v1456
      %v1458 = vpop.f32.mrb[0].mxu0
      %1459 = vmatprep.mubr.f32.mxu0 0.0
      %1460 = vmatmul.mubr.f32.gmra.mrb[0].mxu0 %v992
      %v1461 = vpop.f32.mrb[0].mxu0
      %v1462 = vadd.f32 0.0, %v1461
      %v1463 = vpop.f32.mrb[0].mxu0
      %1464 = vmatprep.mubr.f32.mxu0 0.0
      %1465 = vmatmul.mubr.f32.gmra.mrb[0].mxu0 %v1360
      %v1466 = vpop.f32.mrb[0].mxu0
      %v1467 = vadd.f32 0.0, %v1466
      %v1468 = vpop.f32.mrb[0].mxu0
      %1469 = vdwg.mxu0
      %v1470 = vadd.f32 %v1346, %v1432
      %v1471 = vadd.f32 %v1347, %v1437
      %v1472 = vadd.f32 %v1348, %v1442
      %v1473 = vadd.f32 %v1349, %v1447
      %v1474 = vadd.f32 %v1350, %v1452
      %v1475 = vadd.f32 %v1351, %v1457
      %v1476 = vadd.f32 %v1352, %v1462
      %v1477 = vadd.f32 %v1353, %v1467
      %v1478 = vrot.slane %v411, 2
      %v1479 = vrot.slane %v412, 2
      %v1480 = vsel %vm706, %v1478, %v1479
      %s1481 = scalar_lea.vmem %s1, 32
      %v1482 = vld [vmem:[%s1481] sm:$0xf]
      %v1483 = vsel %vm338, %v1480, 0
      %v1486 = vsel %vm473, %v1482, 0
      %1488 = vmatprep.subr.mxu0 0.0
      %1489 = vmatpush1.msra.mxu0 %v1486
      %1490 = vmatprep.subr.mxu0 0.0
      %1491 = vmatpush1.msra.mxu0 0.0
      %1492 = vmatprep.subr.mxu0 0.0
      %1493 = vmatpush1.msra.mxu0 0.0
      %1494 = vmatprep.subr.mxu0 0.0
      %1495 = vmatpush1.msra.mxu0 0.0
      %1496 = vmatprep.subr.mxu0 0.0
      %1497 = vmatpush1.msra.mxu0 0.0
      %1498 = vmatprep.subr.mxu0 0.0
      %1499 = vmatpush1.msra.mxu0 0.0
      %1500 = vmatprep.subr.mxu0 0.0
      %1501 = vmatpush1.msra.mxu0 0.0
      %1502 = vmatprep.subr.mxu0 0.0
      %1503 = vmatpush1.msra.mxu0 0.0
      %1504 = vmatprep.subr.mxu0 0.0
      %1505 = vmatpush1.msra.mxu0 0.0
      %1506 = vmatprep.subr.mxu0 0.0
      %1507 = vmatpush1.msra.mxu0 0.0
      %1508 = vmatprep.subr.mxu0 0.0
      %1509 = vmatpush1.msra.mxu0 0.0
      %1510 = vmatprep.subr.mxu0 0.0
      %1511 = vmatpush1.msra.mxu0 0.0
      %1512 = vmatprep.subr.mxu0 0.0
      %1513 = vmatpush1.msra.mxu0 0.0
      %1514 = vmatprep.subr.mxu0 0.0
      %1515 = vmatpush1.msra.mxu0 0.0
      %1516 = vmatprep.subr.mxu0 0.0
      %1517 = vmatpush1.msra.mxu0 0.0
      %1518 = vmatprep.subr.mxu0 0.0
      %1519 = vmatpush1.msra.mxu0 0.0
      %1520 = vmatprep.subr.mxu0 0.0
      %1521 = vmatpush1.msra.mxu0 0.0
      %1522 = vmatprep.subr.mxu0 0.0
      %1523 = vmatpush1.msra.mxu0 0.0
      %1524 = vmatprep.subr.mxu0 0.0
      %1525 = vmatpush1.msra.mxu0 0.0
      %1526 = vmatprep.subr.mxu0 0.0
      %1527 = vmatpush1.msra.mxu0 0.0
      %1528 = vmatprep.subr.mxu0 0.0
      %1529 = vmatpush1.msra.mxu0 0.0
      %1530 = vmatprep.subr.mxu0 0.0
      %1531 = vmatpush1.msra.mxu0 0.0
      %1532 = vmatprep.subr.mxu0 0.0
      %1533 = vmatpush1.msra.mxu0 0.0
      %1534 = vmatprep.subr.mxu0 0.0
      %1535 = vmatpush1.msra.mxu0 0.0
      %1536 = vmatprep.subr.mxu0 0.0
      %1537 = vmatpush1.msra.mxu0 0.0
      %1538 = vmatprep.subr.mxu0 0.0
      %1539 = vmatpush1.msra.mxu0 0.0
      %1540 = vmatprep.subr.mxu0 0.0
      %1541 = vmatpush1.msra.mxu0 0.0
      %1542 = vmatprep.subr.mxu0 0.0
      %1543 = vmatpush1.msra.mxu0 0.0
      %1544 = vmatprep.subr.mxu0 0.0
      %1545 = vmatpush1.msra.mxu0 0.0
      %1546 = vmatprep.subr.mxu0 0.0
      %1547 = vmatpush1.msra.mxu0 0.0
      %1548 = vmatprep.subr.mxu0 0.0
      %1549 = vmatpush1.msra.mxu0 0.0
      %1550 = vmatprep.subr.mxu0 0.0
      %1551 = vmatpush1.msra.mxu0 0.0
      %1552 = vmatprep.mubr.f32.mxu0 0.0
      %1553 = vmatmul.mubr.f32.gmra.mrb[0].mxu0 %v737
      %v1554 = vpop.f32.mrb[0].mxu0
      %v1555 = vadd.f32 0.0, %v1554
      %v1556 = vpop.f32.mrb[0].mxu0
      %1557 = vmatprep.mubr.f32.mxu0 0.0
      %1558 = vmatmul.mubr.f32.gmra.mrb[0].mxu0 %v739
      %v1559 = vpop.f32.mrb[0].mxu0
      %v1560 = vadd.f32 0.0, %v1559
      %v1561 = vpop.f32.mrb[0].mxu0
      %1562 = vmatprep.mubr.f32.mxu0 0.0
      %1563 = vmatmul.mubr.f32.gmra.mrb[0].mxu0 %v741
      %v1564 = vpop.f32.mrb[0].mxu0
      %v1565 = vadd.f32 0.0, %v1564
      %v1566 = vpop.f32.mrb[0].mxu0
      %1567 = vmatprep.mubr.f32.mxu0 0.0
      %1568 = vmatmul.mubr.f32.gmra.mrb[0].mxu0 %v743
      %v1569 = vpop.f32.mrb[0].mxu0
      %v1570 = vadd.f32 0.0, %v1569
      %v1571 = vpop.f32.mrb[0].mxu0
      %1572 = vmatprep.mubr.f32.mxu0 0.0
      %1573 = vmatmul.mubr.f32.gmra.mrb[0].mxu0 %v745
      %v1574 = vpop.f32.mrb[0].mxu0
      %v1575 = vadd.f32 0.0, %v1574
      %v1576 = vpop.f32.mrb[0].mxu0
      %1577 = vmatprep.mubr.f32.mxu0 0.0
      %1578 = vmatmul.mubr.f32.gmra.mrb[0].mxu0 %v747
      %v1579 = vpop.f32.mrb[0].mxu0
      %v1580 = vadd.f32 0.0, %v1579
      %v1581 = vpop.f32.mrb[0].mxu0
      %1582 = vmatprep.mubr.f32.mxu0 0.0
      %1583 = vmatmul.mubr.f32.gmra.mrb[0].mxu0 %v1115
      %v1584 = vpop.f32.mrb[0].mxu0
      %v1585 = vadd.f32 0.0, %v1584
      %v1586 = vpop.f32.mrb[0].mxu0
      %1587 = vmatprep.mubr.f32.mxu0 0.0
      %1588 = vmatmul.mubr.f32.gmra.mrb[0].mxu0 %v1483
      %v1589 = vpop.f32.mrb[0].mxu0
      %v1590 = vadd.f32 0.0, %v1589
      %v1591 = vpop.f32.mrb[0].mxu0
      %1592 = vdwg.mxu0
      %v1593 = vadd.f32 %v1470, %v1555
      %v1594 = vadd.f32 %v1471, %v1560
      %v1595 = vadd.f32 %v1472, %v1565
      %v1596 = vadd.f32 %v1473, %v1570
      %v1597 = vadd.f32 %v1474, %v1575
      %v1598 = vadd.f32 %v1475, %v1580
      %v1599 = vadd.f32 %v1476, %v1585
      %v1600 = vadd.f32 %v1477, %v1590
      %v1601 = vld [vmem:[%s2] sm:$0x1]
      %v1603 = vlaneseq
      %v1604 = vshrl.u32 %v1603, 7
      %v1605 = vsub.s32 0, %v1604
      %v1606 = vrot.slane %v1601, %v1605
      %v1608 = vadd.f32 %v1593, %v1606
      %v1609 = vadd.f32 %v1594, %v1606
      %v1610 = vadd.f32 %v1595, %v1606
      %v1611 = vadd.f32 %v1596, %v1606
      %v1612 = vadd.f32 %v1597, %v1606
      %v1613 = vadd.f32 %v1598, %v1606
      %v1614 = vadd.f32 %v1599, %v1606
      %v1615 = vadd.f32 %v1600, %v1606
      %1616 = vst [vmem:[%s235] sm:$0xff] %v1608
      %1617 = vst [vmem:[%s235 + $0x8] sm:$0xff] %v1609
      %1618 = vst [vmem:[%s235 + $0x10] sm:$0xff] %v1610
      %1619 = vst [vmem:[%s235 + $0x18] sm:$0xff] %v1611
      %1620 = vst [vmem:[%s235 + $0x20] sm:$0xff] %v1612
      %1621 = vst [vmem:[%s235 + $0x28] sm:$0xff] %v1613
      %1622 = vst [vmem:[%s235 + $0x30] sm:$0xff] %v1614
      %1623 = vst [vmem:[%s235 + $0x38] sm:$0xff] %v1615
      %v1624 = vadd.f32 %v1608, %v1609
      %v1625 = vadd.f32 %v1624, %v1610
      %v1626 = vadd.f32 %v1625, %v1611
      %v1627 = vadd.f32 %v1626, %v1612
      %v1628 = vadd.f32 %v1627, %v1613
      %v1629 = vadd.f32 %v1628, %v1614
      %v1630 = vadd.f32 %v1629, %v1615
      %v1631 = vrot.slane %v1630, 4
      %v1632 = vadd.f32 %v1630, %v1631
      %v1633 = vrot.slane %v1632, 2
      %v1634 = vadd.f32 %v1632, %v1633
      %v1635 = vrot.slane %v1634, 1
      %v1636 = vadd.f32 %v1634, %v1635
      %1637 = vst [vmem:[%s238] sm:$0x1] %v1636
      %v1638 = vmul.f32 %v1608, %v1608
      %v1639 = vmul.f32 %v1609, %v1609
      %v1640 = vmul.f32 %v1610, %v1610
      %v1641 = vmul.f32 %v1611, %v1611
      %v1642 = vmul.f32 %v1612, %v1612
      %v1643 = vmul.f32 %v1613, %v1613
      %v1644 = vmul.f32 %v1614, %v1614
      %v1645 = vmul.f32 %v1615, %v1615
      %v1646 = vadd.f32 %v1638, %v1639
      %v1647 = vadd.f32 %v1646, %v1640
      %v1648 = vadd.f32 %v1647, %v1641
      %v1649 = vadd.f32 %v1648, %v1642
      %v1650 = vadd.f32 %v1649, %v1643
      %v1651 = vadd.f32 %v1650, %v1644
      %v1652 = vadd.f32 %v1651, %v1645
      %v1653 = vrot.slane %v1652, 4
      %v1654 = vadd.f32 %v1652, %v1653
      %v1655 = vrot.slane %v1654, 2
      %v1656 = vadd.f32 %v1654, %v1655
      %v1657 = vrot.slane %v1656, 1
      %v1658 = vadd.f32 %v1656, %v1657
      %1659 = vst [vmem:[%s241] sm:$0x1] %v1658
      %p1660 = scmp.lt.s32.totalorder %s17, 1
      %s1661 = scalar_select %p1660, %s17, 1
      %s1662 = smul.addr %s1661, 8
      %s1663 = smul.addr %s1662, 8
      %s1664 = scalar_lea.vmem %s3, %s1663
      %p1665 = scmp.lt.s32.totalorder %s17, 1
      %s1666 = scalar_select %p1665, %s17, 1
      %s1667 = scalar_lea.vmem %s4, %s1666
      %p1668 = scmp.lt.s32.totalorder %s17, 1
      %s1669 = scalar_select %p1668, %s17, 1
      %s1670 = scalar_lea.vmem %s5, %s1669
      // Predicated region
      $region33: #{down_forward.3} parent=31 // pred_check
        %p1671 = pneg %p103
      $region34: #{down_forward.3} parent=31 // pred_check_branch
        %1673 = sbr.rel (%p1671) target = $region36
      $region35: #{down_forward.3} parent=31 // pred_region
        _
      $region36: #{down_forward.3} parent=31 // pred_fallthru
        _
      // Predicated region
      $region37: #{down_forward.3} parent=31 // pred_check
        %p1674 = pneg %p129
      $region38: #{down_forward.3} parent=31 // pred_check_branch
        %1676 = sbr.rel (%p1674) target = $region40
      $region39: #{down_forward.3} parent=31 // pred_region
        _
      $region40: #{down_forward.3} parent=31 // pred_fallthru
        _
      // Predicated region
      $region41: #{down_forward.3} parent=31 // pred_check
        %p1677 = pneg %p155
      $region42: #{down_forward.3} parent=31 // pred_check_branch
        %1679 = sbr.rel (%p1677) target = $region44
      $region43: #{down_forward.3} parent=31 // pred_region
        _
      $region44: #{down_forward.3} parent=31 // pred_fallthru
        _
    $region32: #{down_forward.3} parent=5 // pred_fallthru
      _
    %p1680 = scmp.le.s32.totalorder 2, %s12
    // Predicated region
    $region45: #{down_forward.3} parent=5 // pred_check
      %p1681 = pneg %p1680
    $region46: #{down_forward.3} parent=5 // pred_check_branch
      %1683 = sbr.rel (%p1681) target = $region48
    $region47: #{down_forward.3} parent=5 // pred_region
      %s1684 = ssub.s32 %s12, 2
      // Predicated region
      $region49: #{down_forward.3} parent=47 // pred_check
        %p1685 = pneg %p109
      $region50: #{down_forward.3} parent=47 // pred_check_branch
        %1687 = sbr.rel (%p1685) target = $region52
      $region51: #{down_forward.3} parent=47 // pred_region
        %p1688 = scmp.lt.s32.totalorder %s18, 1
        %s1689 = scalar_select %p1688, %s18, 1
        %s1690 = smul.addr %s1689, 8
        %s1691 = smul.addr %s1690, 8
        %s1692 = scalar_lea.vmem %s3, %s1691
      $region52: #{down_forward.3} parent=47 // pred_fallthru
        _
      // Predicated region
      $region53: #{down_forward.3} parent=47 // pred_check
        %p1693 = pneg %p135
      $region54: #{down_forward.3} parent=47 // pred_check_branch
        %1695 = sbr.rel (%p1693) target = $region56
      $region55: #{down_forward.3} parent=47 // pred_region
        %p1696 = scmp.lt.s32.totalorder %s18, 1
        %s1697 = scalar_select %p1696, %s18, 1
        %s1698 = scalar_lea.vmem %s4, %s1697
      $region56: #{down_forward.3} parent=47 // pred_fallthru
        _
      // Predicated region
      $region57: #{down_forward.3} parent=47 // pred_check
        %p1699 = pneg %p161
      $region58: #{down_forward.3} parent=47 // pred_check_branch
        %1701 = sbr.rel (%p1699) target = $region60
      $region59: #{down_forward.3} parent=47 // pred_region
        %p1702 = scmp.lt.s32.totalorder %s18, 1
        %s1703 = scalar_select %p1702, %s18, 1
        %s1704 = scalar_lea.vmem %s5, %s1703
      $region60: #{down_forward.3} parent=47 // pred_fallthru
        _
    $region48: #{down_forward.3} parent=5 // pred_fallthru
      _
  $region6: #{down_forward.3} parent=0 // loop_footer
    %s16 = sadd.s32 1, %s12
  $region7: #{down_forward.3} parent=0 // loop_footer_branch
    %11 = sbr.rel target = $region3
  $region8: #{down_forward.3} parent=0 // loop_exit
    _

// kernel: down_forward.4
$region0: #{down_forward.4}
  #allocation0 [shape = 'u32[]', space=smem, size = 0x4, offset = 0x4, fixed_abs, tag = 'smem constant byte address 0x4 - core index']
  #allocation1 [shape = 'u32[144,128]{1,0:T(1,128)}', space=vmem, size = 0x12000, scoped, tag = 'internal scratch']
  #allocation2 [shape = 'f32[10,10,128]{2,1,0:T(8,128)}', space=vmem, size = 0x14000, scoped, tag = 'scratch operand']
  %s0 = inlined_call_operand.vmem [shape: f32[2,8,8,128], index: 0, kind: input, shape index: {}]
  %s1 = inlined_call_operand.vmem [shape: f32[1,128], index: 1, kind: input, shape index: {}]
  %s2 = inlined_call_operand.vmem [shape: f32[1,128], index: 2, kind: input, shape index: {}]
  %s3 = inlined_call_operand.hbm [shape: f32[9,128,128], index: 3, kind: input, shape index: {}]
  %s4 = inlined_call_operand.vmem [shape: f32[1,128], index: 4, kind: input, shape index: {}]
  %s5 = inlined_call_operand.vmem [shape: f32[2,8,8,128], index: 5, kind: output, shape index: {0}]
  %s6 = inlined_call_operand.vmem [shape: f32[2,1,128], index: 6, kind: output, shape index: {1}]
  %s7 = inlined_call_operand.vmem [shape: f32[2,1,128], index: 7, kind: output, shape index: {2}]
  %8 = xla_tuple %s5, %s6, %s7
  %s9 = sld [smem:[#allocation0]]
  $region73: #{down_forward.4} parent=0
    _
  %s11 = ssub.s32 1, %s9
  %s12 = scalar_select 0, %s11, %s9
  $region1: #{down_forward.4} parent=0
    #allocation3 [shape = 'u8[589824]{0}', space=vmem, size = 0x90000, scoped, tag = 'input window, operand 3, single buffered']
    #allocation4 [shape = 's32[2]{0}', space=sflag, size = 0x8, scoped, tag = 'scoped memory for down_forward.4']
    %13 = vsyncpa [#allocation4], 0
    loop: start=0, step=1, limit=4
    $region2: #{down_forward.4} parent=1 // loop_pre_header
      _
    $region3: #{down_forward.4} parent=1 // loop_header
      %s15 = sphi 0, %s19
      %p16 = scmp.ge.s32.totalorder %s15, 4
      %s25 = sphi 0, %s27
      %s28 = sphi 0, %s25
      %s29 = sphi 0, %s28
      %s45 = sphi 0, %s29
      %s49 = sphi 0, %s49
      %s51 = sphi 0, %s49
      %s52 = sphi 0, %s51
      %s66 = sphi 0, %s52
      %s70 = sphi 0, %s70
      %s72 = sphi 0, %s70
      %s73 = sphi 0, %s72
      %s87 = sphi 0, %s73
      %s91 = sphi 0, %s91
      %s93 = sphi 0, %s91
      %s94 = sphi 0, %s93
      %s108 = sphi 0, %s94
      %s112 = sphi 0, %s112
      %s114 = sphi 0, %s112
      %s115 = sphi 0, %s114
      %s129 = sphi 0, %s115
      %s135 = sphi 0, %s137
      %s138 = sphi 0, %s135
      %s139 = sphi 0, %s138
      %s155 = sphi 0, %s139
      %s161 = sphi 0, %s163
      %s164 = sphi 0, %s161
      %s165 = sphi 0, %s164
      %s181 = sphi 0, %s165
      %s187 = sphi 0, %s189
      %s190 = sphi 0, %s187
      %s191 = sphi 0, %s190
      %s207 = sphi 0, %s191
    $region4: #{down_forward.4} parent=1 // loop_header_branch
      %18 = sbr.rel (%p16) target = $region8
    $region5: #{down_forward.4} parent=1 // loop_body
      %s20 = ssub.s32 %s15, 1
      %s21 = ssub.s32 %s15, 2
      %s22 = sadd.s32 %s15, 1
      %s23 = ssub.s32 %s15, %s22
      %p24 = scmp.eq.s32.totalorder %s23, 0
      %s26 = sadd.s32 %s25, 1
      %s27 = scalar_select %p24, %s25, %s26
      %p30 = pneg %p24
      %p31 = scmp.eq.s32.totalorder %s15, 1
      %p32 = por %p30, %p31
      %p33 = scmp.ne.s32.totalorder %s25, %s28
      %p34 = scmp.eq.s32.totalorder %s15, 0
      %p35 = por %p33, %p34
      %p36 = scmp.ne.s32.totalorder %s25, %s28
      %p37 = scmp.eq.s32.totalorder %s20, 1
      %p38 = por %p36, %p37
      %p39 = scmp.ne.s32.totalorder %s28, %s29
      %p40 = scmp.eq.s32.totalorder %s20, 0
      %p41 = por %p39, %p40
      %p42 = scmp.ne.s32.totalorder %s28, %s29
      %p43 = scmp.eq.s32.totalorder %s21, 1
      %p44 = por %p42, %p43
      %p46 = scmp.ne.s32.totalorder %s29, %s45
      %p47 = scmp.eq.s32.totalorder %s21, 0
      %p48 = por %p46, %p47
      %s50 = sadd.s32 %s49, 1
      %p53 = scmp.eq.s32.totalorder %s15, 1
      %p54 = scmp.ne.s32.totalorder %s49, %s51
      %p55 = scmp.eq.s32.totalorder %s15, 0
      %p56 = por %p54, %p55
      %p57 = scmp.ne.s32.totalorder %s49, %s51
      %p58 = scmp.eq.s32.totalorder %s20, 1
      %p59 = por %p57, %p58
      %p60 = scmp.ne.s32.totalorder %s51, %s52
      %p61 = scmp.eq.s32.totalorder %s20, 0
      %p62 = por %p60, %p61
      %p63 = scmp.ne.s32.totalorder %s51, %s52
      %p64 = scmp.eq.s32.totalorder %s21, 1
      %p65 = por %p63, %p64
      %p67 = scmp.ne.s32.totalorder %s52, %s66
      %p68 = scmp.eq.s32.totalorder %s21, 0
      %p69 = por %p67, %p68
      %s71 = sadd.s32 %s70, 1
      %p74 = scmp.eq.s32.totalorder %s15, 1
      %p75 = scmp.ne.s32.totalorder %s70, %s72
      %p76 = scmp.eq.s32.totalorder %s15, 0
      %p77 = por %p75, %p76
      %p78 = scmp.ne.s32.totalorder %s70, %s72
      %p79 = scmp.eq.s32.totalorder %s20, 1
      %p80 = por %p78, %p79
      %p81 = scmp.ne.s32.totalorder %s72, %s73
      %p82 = scmp.eq.s32.totalorder %s20, 0
      %p83 = por %p81, %p82
      %p84 = scmp.ne.s32.totalorder %s72, %s73
      %p85 = scmp.eq.s32.totalorder %s21, 1
      %p86 = por %p84, %p85
      %p88 = scmp.ne.s32.totalorder %s73, %s87
      %p89 = scmp.eq.s32.totalorder %s21, 0
      %p90 = por %p88, %p89
      %s92 = sadd.s32 %s91, 1
      %p95 = scmp.eq.s32.totalorder %s15, 1
      %p96 = scmp.ne.s32.totalorder %s91, %s93
      %p97 = scmp.eq.s32.totalorder %s15, 0
      %p98 = por %p96, %p97
      %p99 = scmp.ne.s32.totalorder %s91, %s93
      %p100 = scmp.eq.s32.totalorder %s20, 1
      %p101 = por %p99, %p100
      %p102 = scmp.ne.s32.totalorder %s93, %s94
      %p103 = scmp.eq.s32.totalorder %s20, 0
      %p104 = por %p102, %p103
      %p105 = scmp.ne.s32.totalorder %s93, %s94
      %p106 = scmp.eq.s32.totalorder %s21, 1
      %p107 = por %p105, %p106
      %p109 = scmp.ne.s32.totalorder %s94, %s108
      %p110 = scmp.eq.s32.totalorder %s21, 0
      %p111 = por %p109, %p110
      %s113 = sadd.s32 %s112, 1
      %p116 = scmp.eq.s32.totalorder %s15, 1
      %p117 = scmp.ne.s32.totalorder %s112, %s114
      %p118 = scmp.eq.s32.totalorder %s15, 0
      %p119 = por %p117, %p118
      %p120 = scmp.ne.s32.totalorder %s112, %s114
      %p121 = scmp.eq.s32.totalorder %s20, 1
      %p122 = por %p120, %p121
      %p123 = scmp.ne.s32.totalorder %s114, %s115
      %p124 = scmp.eq.s32.totalorder %s20, 0
      %p125 = por %p123, %p124
      %p126 = scmp.ne.s32.totalorder %s114, %s115
      %p127 = scmp.eq.s32.totalorder %s21, 1
      %p128 = por %p126, %p127
      %p130 = scmp.ne.s32.totalorder %s115, %s129
      %p131 = scmp.eq.s32.totalorder %s21, 0
      %p132 = por %p130, %p131
      %s133 = ssub.s32 %s15, %s22
      %p134 = scmp.eq.s32.totalorder %s133, 0
      %s136 = sadd.s32 %s135, 1
      %s137 = scalar_select %p134, %s135, %s136
      %p140 = pneg %p134
      %p141 = scmp.eq.s32.totalorder %s15, 1
      %p142 = por %p140, %p141
      %p143 = scmp.ne.s32.totalorder %s135, %s138
      %p144 = scmp.eq.s32.totalorder %s15, 0
      %p145 = por %p143, %p144
      %p146 = scmp.ne.s32.totalorder %s135, %s138
      %p147 = scmp.eq.s32.totalorder %s20, 1
      %p148 = por %p146, %p147
      %p149 = scmp.ne.s32.totalorder %s138, %s139
      %p150 = scmp.eq.s32.totalorder %s20, 0
      %p151 = por %p149, %p150
      %p152 = scmp.ne.s32.totalorder %s138, %s139
      %p153 = scmp.eq.s32.totalorder %s21, 1
      %p154 = por %p152, %p153
      %p156 = scmp.ne.s32.totalorder %s139, %s155
      %p157 = scmp.eq.s32.totalorder %s21, 0
      %p158 = por %p156, %p157
      %s159 = ssub.s32 %s15, %s22
      %p160 = scmp.eq.s32.totalorder %s159, 0
      %s162 = sadd.s32 %s161, 1
      %s163 = scalar_select %p160, %s161, %s162
      %p166 = pneg %p160
      %p167 = scmp.eq.s32.totalorder %s15, 1
      %p168 = por %p166, %p167
      %p169 = scmp.ne.s32.totalorder %s161, %s164
      %p170 = scmp.eq.s32.totalorder %s15, 0
      %p171 = por %p169, %p170
      %p172 = scmp.ne.s32.totalorder %s161, %s164
      %p173 = scmp.eq.s32.totalorder %s20, 1
      %p174 = por %p172, %p173
      %p175 = scmp.ne.s32.totalorder %s164, %s165
      %p176 = scmp.eq.s32.totalorder %s20, 0
      %p177 = por %p175, %p176
      %p178 = scmp.ne.s32.totalorder %s164, %s165
      %p179 = scmp.eq.s32.totalorder %s21, 1
      %p180 = por %p178, %p179
      %p182 = scmp.ne.s32.totalorder %s165, %s181
      %p183 = scmp.eq.s32.totalorder %s21, 0
      %p184 = por %p182, %p183
      %s185 = ssub.s32 %s15, %s22
      %p186 = scmp.eq.s32.totalorder %s185, 0
      %s188 = sadd.s32 %s187, 1
      %s189 = scalar_select %p186, %s187, %s188
      %p192 = pneg %p186
      %p193 = scmp.eq.s32.totalorder %s15, 1
      %p194 = por %p192, %p193
      %p195 = scmp.ne.s32.totalorder %s187, %s190
      %p196 = scmp.eq.s32.totalorder %s15, 0
      %p197 = por %p195, %p196
      %p198 = scmp.ne.s32.totalorder %s187, %s190
      %p199 = scmp.eq.s32.totalorder %s20, 1
      %p200 = por %p198, %p199
      %p201 = scmp.ne.s32.totalorder %s190, %s191
      %p202 = scmp.eq.s32.totalorder %s20, 0
      %p203 = por %p201, %p202
      %p204 = scmp.ne.s32.totalorder %s190, %s191
      %p205 = scmp.eq.s32.totalorder %s21, 1
      %p206 = por %p204, %p205
      %p208 = scmp.ne.s32.totalorder %s191, %s207
      %p209 = scmp.eq.s32.totalorder %s21, 0
      %p210 = por %p208, %p209
      %p211 = scmp.le.s32.totalorder 1, %s15
      %p212 = scmp.lt.s32.totalorder %s15, 3
      %p213 = pnand %p211, %p212
      %p214 = pneg %p213
      // Predicated region
      $region9: #{down_forward.4} parent=5 // pred_check
        _
      $region10: #{down_forward.4} parent=5 // pred_check_branch
        %216 = sbr.rel (%p213) target = $region12
      $region11: #{down_forward.4} parent=5 // pred_region
        %s217 = ssub.s32 %s15, 1
        // Predicated region
        $region13: #{down_forward.4} parent=11 // pred_check
          %p218 = pneg %p62
        $region14: #{down_forward.4} parent=11 // pred_check_branch
          %220 = sbr.rel (%p218) target = $region16
        $region15: #{down_forward.4} parent=11 // pred_region
          _
        $region16: #{down_forward.4} parent=11 // pred_fallthru
          _
        // Predicated region
        $region17: #{down_forward.4} parent=11 // pred_check
          %p221 = pneg %p83
        $region18: #{down_forward.4} parent=11 // pred_check_branch
          %223 = sbr.rel (%p221) target = $region20
        $region19: #{down_forward.4} parent=11 // pred_region
          _
        $region20: #{down_forward.4} parent=11 // pred_fallthru
          _
        // Predicated region
        $region21: #{down_forward.4} parent=11 // pred_check
          %p224 = pneg %p104
        $region22: #{down_forward.4} parent=11 // pred_check_branch
          %226 = sbr.rel (%p224) target = $region24
        $region23: #{down_forward.4} parent=11 // pred_region
          %s228 = ssub.s32 18432, 18432
          %229 = vsyncadd [#allocation4], %s228
          %s230 = sshll.u32 [#allocation3], 4
          %s231 = int_to_ptr.vmem [resolvable:$true] %s230
          %236 = dma.hbm_to_vmem [thread:$0]  %s3, 18432, %s231, [#allocation4], 128, 128, 8
        $region24: #{down_forward.4} parent=11 // pred_fallthru
          _
        // Predicated region
        $region25: #{down_forward.4} parent=11 // pred_check
          %p237 = pneg %p125
        $region26: #{down_forward.4} parent=11 // pred_check_branch
          %239 = sbr.rel (%p237) target = $region28
        $region27: #{down_forward.4} parent=11 // pred_region
          _
        $region28: #{down_forward.4} parent=11 // pred_fallthru
          _
      $region12: #{down_forward.4} parent=5 // pred_fallthru
        _
      %p240 = scmp.lt.s32.totalorder %s15, 2
      // Predicated region
      $region29: #{down_forward.4} parent=5 // pred_check
        %p241 = pneg %p240
      $region30: #{down_forward.4} parent=5 // pred_check_branch
        %243 = sbr.rel (%p241) target = $region32
      $region31: #{down_forward.4} parent=5 // pred_region
        // Predicated region
        $region33: #{down_forward.4} parent=31 // pred_check
          %p244 = pneg %p35
        $region34: #{down_forward.4} parent=31 // pred_check_branch
          %246 = sbr.rel (%p244) target = $region36
        $region35: #{down_forward.4} parent=31 // pred_region
          %p247 = scmp.lt.s32.totalorder %s15, 1
          %s248 = scalar_select %p247, %s15, 1
          %s249 = smul.addr %s248, 8
          %s250 = smul.addr %s249, 8
          %s251 = scalar_lea.vmem %s0, %s250
        $region36: #{down_forward.4} parent=31 // pred_fallthru
          _
      $region32: #{down_forward.4} parent=5 // pred_fallthru
        _
      %p252 = scmp.le.s32.totalorder 1, %s15
      %p253 = scmp.lt.s32.totalorder %s15, 3
      %p254 = pnand %p252, %p253
      %p255 = pneg %p254
      // Predicated region
      $region37: #{down_forward.4} parent=5 // pred_check
        _
      $region38: #{down_forward.4} parent=5 // pred_check_branch
        %257 = sbr.rel (%p254) target = $region40
      $region39: #{down_forward.4} parent=5 // pred_region
        %s258 = ssub.s32 %s15, 1
        // Predicated region
        $region41: #{down_forward.4} parent=39 // pred_check
          %p259 = pneg %p104
        $region42: #{down_forward.4} parent=39 // pred_check_branch
          %261 = sbr.rel (%p259) target = $region44
        $region43: #{down_forward.4} parent=39 // pred_region
          %262 = dma.done [#allocation4], 18432
        $region44: #{down_forward.4} parent=39 // pred_fallthru
          _
        %p263 = scmp.lt.s32.totalorder %s20, 1
        %s264 = scalar_select %p263, %s20, 1
        %s265 = smul.addr %s264, 8
        %s266 = smul.addr %s265, 8
        %s267 = scalar_lea.vmem %s0, %s266
        %p268 = pneg %p41
        %p269 = pneg %p38
        %p270 = pneg %p62
        %p271 = pneg %p59
        %p272 = pneg %p83
        %p273 = pneg %p80
        %p274 = pneg %p104
        %p275 = pneg %p101
        %p276 = pneg %p125
        %p277 = pneg %p122
        %p278 = pneg %p151
        %p279 = pneg %p148
        %p280 = scmp.lt.s32.totalorder %s20, 1
        %s281 = scalar_select %p280, %s20, 1
        %s282 = smul.addr %s281, 8
        %s283 = smul.addr %s282, 8
        %s284 = scalar_lea.vmem %s5, %s283
        %p285 = pneg %p177
        %p286 = pneg %p174
        %p287 = scmp.lt.s32.totalorder %s20, 1
        %s288 = scalar_select %p287, %s20, 1
        %s289 = scalar_lea.vmem %s6, %s288
        %p290 = pneg %p203
        %p291 = pneg %p200
        %p292 = scmp.lt.s32.totalorder %s20, 1
        %s293 = scalar_select %p292, %s20, 1
        %s294 = scalar_lea.vmem %s7, %s293
        %p295 = scmp.lt.s32.totalorder %s20, 1
        %s296 = scalar_select %p295, %s20, 1
        %s297 = smul.addr %s296, 8
        %s298 = smul.addr %s297, 8
        %s299 = scalar_lea.vmem %s0, %s298
        %p300 = scmp.lt.s32.totalorder %s20, 1
        %s301 = scalar_select %p300, %s20, 1
        %s302 = smul.addr %s301, 8
        %s303 = smul.addr %s302, 8
        %s304 = scalar_lea.vmem %s5, %s303
        %p305 = scmp.lt.s32.totalorder %s20, 1
        %s306 = scalar_select %p305, %s20, 1
        %s307 = scalar_lea.vmem %s6, %s306
        %p308 = scmp.lt.s32.totalorder %s20, 1
        %s309 = scalar_select %p308, %s20, 1
        %s310 = scalar_lea.vmem %s7, %s309
        %v311 = vld [vmem:[%s299] sm:$0xff]
        %v312 = vld [vmem:[%s299 + $0x8] sm:$0xff]
        %v313 = vld [vmem:[%s299 + $0x10] sm:$0xff]
        %v314 = vld [vmem:[%s299 + $0x18] sm:$0xff]
        %v315 = vld [vmem:[%s299 + $0x20] sm:$0xff]
        %v316 = vld [vmem:[%s299 + $0x28] sm:$0xff]
        %v317 = vld [vmem:[%s299 + $0x30] sm:$0xff]
        %v318 = vld [vmem:[%s299 + $0x38] sm:$0xff]
        %v319 = vld [vmem:[%s1] sm:$0x1]
        %v321 = vlaneseq
        %v322 = vshrl.u32 %v321, 7
        %v323 = vsub.s32 0, %v322
        %v324 = vrot.slane %v319, %v323
        %v326 = vmul.f32 %v311, %v324
        %v327 = vmul.f32 %v312, %v324
        %v328 = vmul.f32 %v313, %v324
        %v329 = vmul.f32 %v314, %v324
        %v330 = vmul.f32 %v315, %v324
        %v331 = vmul.f32 %v316, %v324
        %v332 = vmul.f32 %v317, %v324
        %v333 = vmul.f32 %v318, %v324
        %v334 = vld [vmem:[%s2] sm:$0x1]
        %v336 = vlaneseq
        %v337 = vshrl.u32 %v336, 7
        %v338 = vsub.s32 0, %v337
        %v339 = vrot.slane %v334, %v338
        %v341 = vadd.f32 %v326, %v339
        %v342 = vadd.f32 %v327, %v339
        %v343 = vadd.f32 %v328, %v339
        %v344 = vadd.f32 %v329, %v339
        %v345 = vadd.f32 %v330, %v339
        %v346 = vadd.f32 %v331, %v339
        %v347 = vadd.f32 %v332, %v339
        %v348 = vadd.f32 %v333, %v339
        %v349 = vmax.f32 %v341, 0.0
        %v350 = vmax.f32 %v342, 0.0
        %v351 = vmax.f32 %v343, 0.0
        %v352 = vmax.f32 %v344, 0.0
        %v353 = vmax.f32 %v345, 0.0
        %v354 = vmax.f32 %v346, 0.0
        %v355 = vmax.f32 %v347, 0.0
        %v356 = vmax.f32 %v348, 0.0
        %357 = vst [vmem:[#allocation2] sm:$0xff] 0.0
        %358 = vst [vmem:[#allocation2 + $0x8] sm:$0x3] 0.0
        %359 = vst [vmem:[#allocation2 + $0x10] sm:$0xff] 0.0
        %360 = vst [vmem:[#allocation2 + $0x18] sm:$0x3] 0.0
        %361 = vst [vmem:[#allocation2 + $0x20] sm:$0xff] 0.0
        %362 = vst [vmem:[#allocation2 + $0x28] sm:$0x3] 0.0
        %363 = vst [vmem:[#allocation2 + $0x30] sm:$0xff] 0.0
        %364 = vst [vmem:[#allocation2 + $0x38] sm:$0x3] 0.0
        %365 = vst [vmem:[#allocation2 + $0x40] sm:$0xff] 0.0
        %366 = vst [vmem:[#allocation2 + $0x48] sm:$0x3] 0.0
        %367 = vst [vmem:[#allocation2 + $0x50] sm:$0xff] 0.0
        %368 = vst [vmem:[#allocation2 + $0x58] sm:$0x3] 0.0
        %369 = vst [vmem:[#allocation2 + $0x60] sm:$0xff] 0.0
        %370 = vst [vmem:[#allocation2 + $0x68] sm:$0x3] 0.0
        %371 = vst [vmem:[#allocation2 + $0x70] sm:$0xff] 0.0
        %372 = vst [vmem:[#allocation2 + $0x78] sm:$0x3] 0.0
        %373 = vst [vmem:[#allocation2 + $0x80] sm:$0xff] 0.0
        %374 = vst [vmem:[#allocation2 + $0x88] sm:$0x3] 0.0
        %375 = vst [vmem:[#allocation2 + $0x90] sm:$0xff] 0.0
        %376 = vst [vmem:[#allocation2 + $0x98] sm:$0x3] 0.0
        %s377 = scalar_lea.vmem [#allocation2], 16
        %378 = vst [vmem:[%s377 + $0x1] sm:$0xff] %v349
        %379 = vst [vmem:[%s377 + $0x11] sm:$0xff] %v350
        %380 = vst [vmem:[%s377 + $0x21] sm:$0xff] %v351
        %381 = vst [vmem:[%s377 + $0x31] sm:$0xff] %v352
        %382 = vst [vmem:[%s377 + $0x41] sm:$0xff] %v353
        %383 = vst [vmem:[%s377 + $0x51] sm:$0xff] %v354
        %384 = vst [vmem:[%s377 + $0x61] sm:$0xff] %v355
        %385 = vst [vmem:[%s377 + $0x71] sm:$0xff] %v356
        %v386 = vld [vmem:[#allocation2] sm:$0xff]
        %v387 = vld [vmem:[#allocation2 + $0x8] sm:$0x3]
        %v388 = vld [vmem:[#allocation2 + $0x10] sm:$0xff]
        %v389 = vld [vmem:[#allocation2 + $0x18] sm:$0x3]
        %v390 = vld [vmem:[#allocation2 + $0x20] sm:$0xff]
        %v391 = vld [vmem:[#allocation2 + $0x28] sm:$0x3]
        %v392 = vld [vmem:[#allocation2 + $0x30] sm:$0xff]
        %v393 = vld [vmem:[#allocation2 + $0x38] sm:$0x3]
        %v394 = vld [vmem:[#allocation2 + $0x40] sm:$0xff]
        %v395 = vld [vmem:[#allocation2 + $0x48] sm:$0x3]
        %v396 = vld [vmem:[#allocation2 + $0x50] sm:$0xff]
        %v397 = vld [vmem:[#allocation2 + $0x58] sm:$0x3]
        %v398 = vld [vmem:[#allocation2 + $0x60] sm:$0xff]
        %v399 = vld [vmem:[#allocation2 + $0x68] sm:$0x3]
        %v400 = vld [vmem:[#allocation2 + $0x70] sm:$0xff]
        %v401 = vld [vmem:[#allocation2 + $0x78] sm:$0x3]
        %v402 = vld [vmem:[#allocation2 + $0x80] sm:$0xff]
        %v403 = vld [vmem:[#allocation2 + $0x88] sm:$0x3]
        %v404 = vld [vmem:[#allocation2 + $0x90] sm:$0xff]
        %v405 = vld [vmem:[#allocation2 + $0x98] sm:$0x3]
        %v406 = vld [vmem:[#allocation3] sm:$0xff]
        %v407 = vld [vmem:[#allocation3 + $0x8] sm:$0xff]
        %v408 = vld [vmem:[#allocation3 + $0x10] sm:$0xff]
        %v409 = vld [vmem:[#allocation3 + $0x18] sm:$0xff]
        %v410 = vld [vmem:[#allocation3 + $0x20] sm:$0xff]
        %v411 = vld [vmem:[#allocation3 + $0x28] sm:$0xff]
        %v412 = vld [vmem:[#allocation3 + $0x30] sm:$0xff]
        %v413 = vld [vmem:[#allocation3 + $0x38] sm:$0xff]
        %v414 = vld [vmem:[#allocation3 + $0x40] sm:$0xff]
        %v415 = vld [vmem:[#allocation3 + $0x48] sm:$0xff]
        %v416 = vld [vmem:[#allocation3 + $0x50] sm:$0xff]
        %v417 = vld [vmem:[#allocation3 + $0x58] sm:$0xff]
        %v418 = vld [vmem:[#allocation3 + $0x60] sm:$0xff]
        %v419 = vld [vmem:[#allocation3 + $0x68] sm:$0xff]
        %v420 = vld [vmem:[#allocation3 + $0x70] sm:$0xff]
        %v421 = vld [vmem:[#allocation3 + $0x78] sm:$0xff]
        %vm438 = vcmask 1046528
        %v439 = vrot.slane %v386, 1
        %v440 = vrot.slane %v387, 1
        %v441 = vsel %vm438, %v439, %v440
        %v442 = vrot.slane %v388, 1
        %v443 = vrot.slane %v389, 1
        %v444 = vsel %vm438, %v442, %v443
        %v445 = vrot.slane %v390, 1
        %v446 = vrot.slane %v391, 1
        %v447 = vsel %vm438, %v445, %v446
        %v448 = vrot.slane %v392, 1
        %v449 = vrot.slane %v393, 1
        %v450 = vsel %vm438, %v448, %v449
        %v451 = vrot.slane %v394, 1
        %v452 = vrot.slane %v395, 1
        %v453 = vsel %vm438, %v451, %v452
        %v454 = vrot.slane %v396, 1
        %v455 = vrot.slane %v397, 1
        %v456 = vsel %vm438, %v454, %v455
        %v457 = vrot.slane %v398, 1
        %v458 = vrot.slane %v399, 1
        %v459 = vsel %vm438, %v457, %v458
        %v460 = vrot.slane %v400, 1
        %v461 = vrot.slane %v401, 1
        %v462 = vsel %vm438, %v460, %v461
        %s471 = scalar_lea.vmem [#allocation3], 128
        %v472 = vld [vmem:[%s471] sm:$0xff]
        %v473 = vld [vmem:[%s471 + $0x8] sm:$0xff]
        %v474 = vld [vmem:[%s471 + $0x10] sm:$0xff]
        %v475 = vld [vmem:[%s471 + $0x18] sm:$0xff]
        %v476 = vld [vmem:[%s471 + $0x20] sm:$0xff]
        %v477 = vld [vmem:[%s471 + $0x28] sm:$0xff]
        %v478 = vld [vmem:[%s471 + $0x30] sm:$0xff]
        %v479 = vld [vmem:[%s471 + $0x38] sm:$0xff]
        %v480 = vld [vmem:[%s471 + $0x40] sm:$0xff]
        %v481 = vld [vmem:[%s471 + $0x48] sm:$0xff]
        %v482 = vld [vmem:[%s471 + $0x50] sm:$0xff]
        %v483 = vld [vmem:[%s471 + $0x58] sm:$0xff]
        %v484 = vld [vmem:[%s471 + $0x60] sm:$0xff]
        %v485 = vld [vmem:[%s471 + $0x68] sm:$0xff]
        %v486 = vld [vmem:[%s471 + $0x70] sm:$0xff]
        %v487 = vld [vmem:[%s471 + $0x78] sm:$0xff]
        %488 = vmatprep.subr.mxu0 0.0
        %489 = vmatpush1.msra.mxu0 %v472
        %490 = vmatprep.subr.mxu0 0.0
        %491 = vmatpush1.msra.mxu0 %v473
        %492 = vmatprep.subr.mxu0 0.0
        %493 = vmatpush1.msra.mxu0 %v474
        %494 = vmatprep.subr.mxu0 0.0
        %495 = vmatpush1.msra.mxu0 %v475
        %496 = vmatprep.subr.mxu0 0.0
        %497 = vmatpush1.msra.mxu0 %v476
        %498 = vmatprep.subr.mxu0 0.0
        %499 = vmatpush1.msra.mxu0 %v477
        %500 = vmatprep.subr.mxu0 0.0
        %501 = vmatpush1.msra.mxu0 %v478
        %502 = vmatprep.subr.mxu0 0.0
        %503 = vmatpush1.msra.mxu0 %v479
        %504 = vmatprep.subr.mxu0 0.0
        %505 = vmatpush1.msra.mxu0 %v480
        %506 = vmatprep.subr.mxu0 0.0
        %507 = vmatpush1.msra.mxu0 %v481
        %508 = vmatprep.subr.mxu0 0.0
        %509 = vmatpush1.msra.mxu0 %v482
        %510 = vmatprep.subr.mxu0 0.0
        %511 = vmatpush1.msra.mxu0 %v483
        %512 = vmatprep.subr.mxu0 0.0
        %513 = vmatpush1.msra.mxu0 %v484
        %514 = vmatprep.subr.mxu0 0.0
        %515 = vmatpush1.msra.mxu0 %v485
        %516 = vmatprep.subr.mxu0 0.0
        %517 = vmatpush1.msra.mxu0 %v486
        %518 = vmatprep.subr.mxu0 0.0
        %519 = vmatpush1.msra.mxu0 %v487
        %520 = vmatprep.subr.mxu0 0.0
        %521 = vmatpush1.msra.mxu0 0.0
        %522 = vmatprep.subr.mxu0 0.0
        %523 = vmatpush1.msra.mxu0 0.0
        %524 = vmatprep.subr.mxu0 0.0
        %525 = vmatpush1.msra.mxu0 0.0
        %526 = vmatprep.subr.mxu0 0.0
        %527 = vmatpush1.msra.mxu0 0.0
        %528 = vmatprep.subr.mxu0 0.0
        %529 = vmatpush1.msra.mxu0 0.0
        %530 = vmatprep.subr.mxu0 0.0
        %531 = vmatpush1.msra.mxu0 0.0
        %532 = vmatprep.subr.mxu0 0.0
        %533 = vmatpush1.msra.mxu0 0.0
        %534 = vmatprep.subr.mxu0 0.0
        %535 = vmatpush1.msra.mxu0 0.0
        %536 = vmatprep.subr.mxu0 0.0
        %537 = vmatpush1.msra.mxu0 0.0
        %538 = vmatprep.subr.mxu0 0.0
        %539 = vmatpush1.msra.mxu0 0.0
        %540 = vmatprep.subr.mxu0 0.0
        %541 = vmatpush1.msra.mxu0 0.0
        %542 = vmatprep.subr.mxu0 0.0
        %543 = vmatpush1.msra.mxu0 0.0
        %544 = vmatprep.subr.mxu0 0.0
        %545 = vmatpush1.msra.mxu0 0.0
        %546 = vmatprep.subr.mxu0 0.0
        %547 = vmatpush1.msra.mxu0 0.0
        %548 = vmatprep.subr.mxu0 0.0
        %549 = vmatpush1.msra.mxu0 0.0
        %550 = vmatprep.subr.mxu0 0.0
        %551 = vmatpush1.msra.mxu0 0.0
        %552 = vmatprep.mubr.f32.mxu0 0.0
        %553 = vmatmul.mubr.f32.gmra.mrb[0].mxu0 %v441
        %v554 = vpop.f32.mrb[0].mxu0
        %v555 = vadd.f32 0.0, %v554
        %v556 = vpop.f32.mrb[0].mxu0
        %557 = vmatprep.mubr.f32.mxu0 0.0
        %558 = vmatmul.mubr.f32.gmra.mrb[0].mxu0 %v444
        %v559 = vpop.f32.mrb[0].mxu0
        %v560 = vadd.f32 0.0, %v559
        %v561 = vpop.f32.mrb[0].mxu0
        %562 = vmatprep.mubr.f32.mxu0 0.0
        %563 = vmatmul.mubr.f32.gmra.mrb[0].mxu0 %v447
        %v564 = vpop.f32.mrb[0].mxu0
        %v565 = vadd.f32 0.0, %v564
        %v566 = vpop.f32.mrb[0].mxu0
        %567 = vmatprep.mubr.f32.mxu0 0.0
        %568 = vmatmul.mubr.f32.gmra.mrb[0].mxu0 %v450
        %v569 = vpop.f32.mrb[0].mxu0
        %v570 = vadd.f32 0.0, %v569
        %v571 = vpop.f32.mrb[0].mxu0
        %572 = vmatprep.mubr.f32.mxu0 0.0
        %573 = vmatmul.mubr.f32.gmra.mrb[0].mxu0 %v453
        %v574 = vpop.f32.mrb[0].mxu0
        %v575 = vadd.f32 0.0, %v574
        %v576 = vpop.f32.mrb[0].mxu0
        %577 = vmatprep.mubr.f32.mxu0 0.0
        %578 = vmatmul.mubr.f32.gmra.mrb[0].mxu0 %v456
        %v579 = vpop.f32.mrb[0].mxu0
        %v580 = vadd.f32 0.0, %v579
        %v581 = vpop.f32.mrb[0].mxu0
        %582 = vmatprep.mubr.f32.mxu0 0.0
        %583 = vmatmul.mubr.f32.gmra.mrb[0].mxu0 %v459
        %v584 = vpop.f32.mrb[0].mxu0
        %v585 = vadd.f32 0.0, %v584
        %v586 = vpop.f32.mrb[0].mxu0
        %587 = vmatprep.mubr.f32.mxu0 0.0
        %588 = vmatmul.mubr.f32.gmra.mrb[0].mxu0 %v462
        %v589 = vpop.f32.mrb[0].mxu0
        %v590 = vadd.f32 0.0, %v589
        %v591 = vpop.f32.mrb[0].mxu0
        %592 = vdwg.mxu0
        %593 = vmatprep.subr.mxu0 0.0
        %594 = vmatpush1.msra.mxu0 %v406
        %595 = vmatprep.subr.mxu0 0.0
        %596 = vmatpush1.msra.mxu0 %v407
        %597 = vmatprep.subr.mxu0 0.0
        %598 = vmatpush1.msra.mxu0 %v408
        %599 = vmatprep.subr.mxu0 0.0
        %600 = vmatpush1.msra.mxu0 %v409
        %601 = vmatprep.subr.mxu0 0.0
        %602 = vmatpush1.msra.mxu0 %v410
        %603 = vmatprep.subr.mxu0 0.0
        %604 = vmatpush1.msra.mxu0 %v411
        %605 = vmatprep.subr.mxu0 0.0
        %606 = vmatpush1.msra.mxu0 %v412
        %607 = vmatprep.subr.mxu0 0.0
        %608 = vmatpush1.msra.mxu0 %v413
        %609 = vmatprep.subr.mxu0 0.0
        %610 = vmatpush1.msra.mxu0 %v414
        %611 = vmatprep.subr.mxu0 0.0
        %612 = vmatpush1.msra.mxu0 %v415
        %613 = vmatprep.subr.mxu0 0.0
        %614 = vmatpush1.msra.mxu0 %v416
        %615 = vmatprep.subr.mxu0 0.0
        %616 = vmatpush1.msra.mxu0 %v417
        %617 = vmatprep.subr.mxu0 0.0
        %618 = vmatpush1.msra.mxu0 %v418
        %619 = vmatprep.subr.mxu0 0.0
        %620 = vmatpush1.msra.mxu0 %v419
        %621 = vmatprep.subr.mxu0 0.0
        %622 = vmatpush1.msra.mxu0 %v420
        %623 = vmatprep.subr.mxu0 0.0
        %624 = vmatpush1.msra.mxu0 %v421
        %625 = vmatprep.subr.mxu0 0.0
        %626 = vmatpush1.msra.mxu0 0.0
        %627 = vmatprep.subr.mxu0 0.0
        %628 = vmatpush1.msra.mxu0 0.0
        %629 = vmatprep.subr.mxu0 0.0
        %630 = vmatpush1.msra.mxu0 0.0
        %631 = vmatprep.subr.mxu0 0.0
        %632 = vmatpush1.msra.mxu0 0.0
        %633 = vmatprep.subr.mxu0 0.0
        %634 = vmatpush1.msra.mxu0 0.0
        %635 = vmatprep.subr.mxu0 0.0
        %636 = vmatpush1.msra.mxu0 0.0
        %637 = vmatprep.subr.mxu0 0.0
        %638 = vmatpush1.msra.mxu0 0.0
        %639 = vmatprep.subr.mxu0 0.0
        %640 = vmatpush1.msra.mxu0 0.0
        %641 = vmatprep.subr.mxu0 0.0
        %642 = vmatpush1.msra.mxu0 0.0
        %643 = vmatprep.subr.mxu0 0.0
        %644 = vmatpush1.msra.mxu0 0.0
        %645 = vmatprep.subr.mxu0 0.0
        %646 = vmatpush1.msra.mxu0 0.0
        %647 = vmatprep.subr.mxu0 0.0
        %648 = vmatpush1.msra.mxu0 0.0
        %649 = vmatprep.subr.mxu0 0.0
        %650 = vmatpush1.msra.mxu0 0.0
        %651 = vmatprep.subr.mxu0 0.0
        %652 = vmatpush1.msra.mxu0 0.0
        %653 = vmatprep.subr.mxu0 0.0
        %654 = vmatpush1.msra.mxu0 0.0
        %655 = vmatprep.subr.mxu0 0.0
        %656 = vmatpush1.msra.mxu0 0.0
        %657 = vmatprep.mubr.f32.mxu0 0.0
        %658 = vmatmul.mubr.f32.gmra.mrb[0].mxu0 %v386
        %v659 = vpop.f32.mrb[0].mxu0
        %v660 = vadd.f32 %v555, %v659
        %v661 = vpop.f32.mrb[0].mxu0
        %662 = vmatprep.mubr.f32.mxu0 0.0
        %663 = vmatmul.mubr.f32.gmra.mrb[0].mxu0 %v388
        %v664 = vpop.f32.mrb[0].mxu0
        %v665 = vadd.f32 %v560, %v664
        %v666 = vpop.f32.mrb[0].mxu0
        %667 = vmatprep.mubr.f32.mxu0 0.0
        %668 = vmatmul.mubr.f32.gmra.mrb[0].mxu0 %v390
        %v669 = vpop.f32.mrb[0].mxu0
        %v670 = vadd.f32 %v565, %v669
        %v671 = vpop.f32.mrb[0].mxu0
        %672 = vmatprep.mubr.f32.mxu0 0.0
        %673 = vmatmul.mubr.f32.gmra.mrb[0].mxu0 %v392
        %v674 = vpop.f32.mrb[0].mxu0
        %v675 = vadd.f32 %v570, %v674
        %v676 = vpop.f32.mrb[0].mxu0
        %677 = vmatprep.mubr.f32.mxu0 0.0
        %678 = vmatmul.mubr.f32.gmra.mrb[0].mxu0 %v394
        %v679 = vpop.f32.mrb[0].mxu0
        %v680 = vadd.f32 %v575, %v679
        %v681 = vpop.f32.mrb[0].mxu0
        %682 = vmatprep.mubr.f32.mxu0 0.0
        %683 = vmatmul.mubr.f32.gmra.mrb[0].mxu0 %v396
        %v684 = vpop.f32.mrb[0].mxu0
        %v685 = vadd.f32 %v580, %v684
        %v686 = vpop.f32.mrb[0].mxu0
        %687 = vmatprep.mubr.f32.mxu0 0.0
        %688 = vmatmul.mubr.f32.gmra.mrb[0].mxu0 %v398
        %v689 = vpop.f32.mrb[0].mxu0
        %v690 = vadd.f32 %v585, %v689
        %v691 = vpop.f32.mrb[0].mxu0
        %692 = vmatprep.mubr.f32.mxu0 0.0
        %693 = vmatmul.mubr.f32.gmra.mrb[0].mxu0 %v400
        %v694 = vpop.f32.mrb[0].mxu0
        %v695 = vadd.f32 %v590, %v694
        %v696 = vpop.f32.mrb[0].mxu0
        %697 = vdwg.mxu0
        %vm698 = vcmask 1045504
        %v699 = vrot.slane %v386, 2
        %v700 = vrot.slane %v387, 2
        %v701 = vsel %vm698, %v699, %v700
        %v702 = vrot.slane %v388, 2
        %v703 = vrot.slane %v389, 2
        %v704 = vsel %vm698, %v702, %v703
        %v705 = vrot.slane %v390, 2
        %v706 = vrot.slane %v391, 2
        %v707 = vsel %vm698, %v705, %v706
        %v708 = vrot.slane %v392, 2
        %v709 = vrot.slane %v393, 2
        %v710 = vsel %vm698, %v708, %v709
        %v711 = vrot.slane %v394, 2
        %v712 = vrot.slane %v395, 2
        %v713 = vsel %vm698, %v711, %v712
        %v714 = vrot.slane %v396, 2
        %v715 = vrot.slane %v397, 2
        %v716 = vsel %vm698, %v714, %v715
        %v717 = vrot.slane %v398, 2
        %v718 = vrot.slane %v399, 2
        %v719 = vsel %vm698, %v717, %v718
        %v720 = vrot.slane %v400, 2
        %v721 = vrot.slane %v401, 2
        %v722 = vsel %vm698, %v720, %v721
        %s731 = scalar_lea.vmem [#allocation3], 256
        %v732 = vld [vmem:[%s731] sm:$0xff]
        %v733 = vld [vmem:[%s731 + $0x8] sm:$0xff]
        %v734 = vld [vmem:[%s731 + $0x10] sm:$0xff]
        %v735 = vld [vmem:[%s731 + $0x18] sm:$0xff]
        %v736 = vld [vmem:[%s731 + $0x20] sm:$0xff]
        %v737 = vld [vmem:[%s731 + $0x28] sm:$0xff]
        %v738 = vld [vmem:[%s731 + $0x30] sm:$0xff]
        %v739 = vld [vmem:[%s731 + $0x38] sm:$0xff]
        %v740 = vld [vmem:[%s731 + $0x40] sm:$0xff]
        %v741 = vld [vmem:[%s731 + $0x48] sm:$0xff]
        %v742 = vld [vmem:[%s731 + $0x50] sm:$0xff]
        %v743 = vld [vmem:[%s731 + $0x58] sm:$0xff]
        %v744 = vld [vmem:[%s731 + $0x60] sm:$0xff]
        %v745 = vld [vmem:[%s731 + $0x68] sm:$0xff]
        %v746 = vld [vmem:[%s731 + $0x70] sm:$0xff]
        %v747 = vld [vmem:[%s731 + $0x78] sm:$0xff]
        %748 = vmatprep.subr.mxu0 0.0
        %749 = vmatpush1.msra.mxu0 %v732
        %750 = vmatprep.subr.mxu0 0.0
        %751 = vmatpush1.msra.mxu0 %v733
        %752 = vmatprep.subr.mxu0 0.0
        %753 = vmatpush1.msra.mxu0 %v734
        %754 = vmatprep.subr.mxu0 0.0
        %755 = vmatpush1.msra.mxu0 %v735
        %756 = vmatprep.subr.mxu0 0.0
        %757 = vmatpush1.msra.mxu0 %v736
        %758 = vmatprep.subr.mxu0 0.0
        %759 = vmatpush1.msra.mxu0 %v737
        %760 = vmatprep.subr.mxu0 0.0
        %761 = vmatpush1.msra.mxu0 %v738
        %762 = vmatprep.subr.mxu0 0.0
        %763 = vmatpush1.msra.mxu0 %v739
        %764 = vmatprep.subr.mxu0 0.0
        %765 = vmatpush1.msra.mxu0 %v740
        %766 = vmatprep.subr.mxu0 0.0
        %767 = vmatpush1.msra.mxu0 %v741
        %768 = vmatprep.subr.mxu0 0.0
        %769 = vmatpush1.msra.mxu0 %v742
        %770 = vmatprep.subr.mxu0 0.0
        %771 = vmatpush1.msra.mxu0 %v743
        %772 = vmatprep.subr.mxu0 0.0
        %773 = vmatpush1.msra.mxu0 %v744
        %774 = vmatprep.subr.mxu0 0.0
        %775 = vmatpush1.msra.mxu0 %v745
        %776 = vmatprep.subr.mxu0 0.0
        %777 = vmatpush1.msra.mxu0 %v746
        %778 = vmatprep.subr.mxu0 0.0
        %779 = vmatpush1.msra.mxu0 %v747
        %780 = vmatprep.subr.mxu0 0.0
        %781 = vmatpush1.msra.mxu0 0.0
        %782 = vmatprep.subr.mxu0 0.0
        %783 = vmatpush1.msra.mxu0 0.0
        %784 = vmatprep.subr.mxu0 0.0
        %785 = vmatpush1.msra.mxu0 0.0
        %786 = vmatprep.subr.mxu0 0.0
        %787 = vmatpush1.msra.mxu0 0.0
        %788 = vmatprep.subr.mxu0 0.0
        %789 = vmatpush1.msra.mxu0 0.0
        %790 = vmatprep.subr.mxu0 0.0
        %791 = vmatpush1.msra.mxu0 0.0
        %792 = vmatprep.subr.mxu0 0.0
        %793 = vmatpush1.msra.mxu0 0.0
        %794 = vmatprep.subr.mxu0 0.0
        %795 = vmatpush1.msra.mxu0 0.0
        %796 = vmatprep.subr.mxu0 0.0
        %797 = vmatpush1.msra.mxu0 0.0
        %798 = vmatprep.subr.mxu0 0.0
        %799 = vmatpush1.msra.mxu0 0.0
        %800 = vmatprep.subr.mxu0 0.0
        %801 = vmatpush1.msra.mxu0 0.0
        %802 = vmatprep.subr.mxu0 0.0
        %803 = vmatpush1.msra.mxu0 0.0
        %804 = vmatprep.subr.mxu0 0.0
        %805 = vmatpush1.msra.mxu0 0.0
        %806 = vmatprep.subr.mxu0 0.0
        %807 = vmatpush1.msra.mxu0 0.0
        %808 = vmatprep.subr.mxu0 0.0
        %809 = vmatpush1.msra.mxu0 0.0
        %810 = vmatprep.subr.mxu0 0.0
        %811 = vmatpush1.msra.mxu0 0.0
        %812 = vmatprep.mubr.f32.mxu0 0.0
        %813 = vmatmul.mubr.f32.gmra.mrb[0].mxu0 %v701
        %v814 = vpop.f32.mrb[0].mxu0
        %v815 = vadd.f32 0.0, %v814
        %v816 = vpop.f32.mrb[0].mxu0
        %817 = vmatprep.mubr.f32.mxu0 0.0
        %818 = vmatmul.mubr.f32.gmra.mrb[0].mxu0 %v704
        %v819 = vpop.f32.mrb[0].mxu0
        %v820 = vadd.f32 0.0, %v819
        %v821 = vpop.f32.mrb[0].mxu0
        %822 = vmatprep.mubr.f32.mxu0 0.0
        %823 = vmatmul.mubr.f32.gmra.mrb[0].mxu0 %v707
        %v824 = vpop.f32.mrb[0].mxu0
        %v825 = vadd.f32 0.0, %v824
        %v826 = vpop.f32.mrb[0].mxu0
        %827 = vmatprep.mubr.f32.mxu0 0.0
        %828 = vmatmul.mubr.f32.gmra.mrb[0].mxu0 %v710
        %v829 = vpop.f32.mrb[0].mxu0
        %v830 = vadd.f32 0.0, %v829
        %v831 = vpop.f32.mrb[0].mxu0
        %832 = vmatprep.mubr.f32.mxu0 0.0
        %833 = vmatmul.mubr.f32.gmra.mrb[0].mxu0 %v713
        %v834 = vpop.f32.mrb[0].mxu0
        %v835 = vadd.f32 0.0, %v834
        %v836 = vpop.f32.mrb[0].mxu0
        %837 = vmatprep.mubr.f32.mxu0 0.0
        %838 = vmatmul.mubr.f32.gmra.mrb[0].mxu0 %v716
        %v839 = vpop.f32.mrb[0].mxu0
        %v840 = vadd.f32 0.0, %v839
        %v841 = vpop.f32.mrb[0].mxu0
        %842 = vmatprep.mubr.f32.mxu0 0.0
        %843 = vmatmul.mubr.f32.gmra.mrb[0].mxu0 %v719
        %v844 = vpop.f32.mrb[0].mxu0
        %v845 = vadd.f32 0.0, %v844
        %v846 = vpop.f32.mrb[0].mxu0
        %847 = vmatprep.mubr.f32.mxu0 0.0
        %848 = vmatmul.mubr.f32.gmra.mrb[0].mxu0 %v722
        %v849 = vpop.f32.mrb[0].mxu0
        %v850 = vadd.f32 0.0, %v849
        %v851 = vpop.f32.mrb[0].mxu0
        %852 = vdwg.mxu0
        %v853 = vadd.f32 %v660, %v815
        %v854 = vadd.f32 %v665, %v820
        %v855 = vadd.f32 %v670, %v825
        %v856 = vadd.f32 %v675, %v830
        %v857 = vadd.f32 %v680, %v835
        %v858 = vadd.f32 %v685, %v840
        %v859 = vadd.f32 %v690, %v845
        %v860 = vadd.f32 %v695, %v850
        %s861 = scalar_lea.vmem [#allocation3], 384
        %v862 = vld [vmem:[%s861] sm:$0xff]
        %v863 = vld [vmem:[%s861 + $0x8] sm:$0xff]
        %v864 = vld [vmem:[%s861 + $0x10] sm:$0xff]
        %v865 = vld [vmem:[%s861 + $0x18] sm:$0xff]
        %v866 = vld [vmem:[%s861 + $0x20] sm:$0xff]
        %v867 = vld [vmem:[%s861 + $0x28] sm:$0xff]
        %v868 = vld [vmem:[%s861 + $0x30] sm:$0xff]
        %v869 = vld [vmem:[%s861 + $0x38] sm:$0xff]
        %v870 = vld [vmem:[%s861 + $0x40] sm:$0xff]
        %v871 = vld [vmem:[%s861 + $0x48] sm:$0xff]
        %v872 = vld [vmem:[%s861 + $0x50] sm:$0xff]
        %v873 = vld [vmem:[%s861 + $0x58] sm:$0xff]
        %v874 = vld [vmem:[%s861 + $0x60] sm:$0xff]
        %v875 = vld [vmem:[%s861 + $0x68] sm:$0xff]
        %v876 = vld [vmem:[%s861 + $0x70] sm:$0xff]
        %v877 = vld [vmem:[%s861 + $0x78] sm:$0xff]
        %878 = vmatprep.subr.mxu0 0.0
        %879 = vmatpush1.msra.mxu0 %v862
        %880 = vmatprep.subr.mxu0 0.0
        %881 = vmatpush1.msra.mxu0 %v863
        %882 = vmatprep.subr.mxu0 0.0
        %883 = vmatpush1.msra.mxu0 %v864
        %884 = vmatprep.subr.mxu0 0.0
        %885 = vmatpush1.msra.mxu0 %v865
        %886 = vmatprep.subr.mxu0 0.0
        %887 = vmatpush1.msra.mxu0 %v866
        %888 = vmatprep.subr.mxu0 0.0
        %889 = vmatpush1.msra.mxu0 %v867
        %890 = vmatprep.subr.mxu0 0.0
        %891 = vmatpush1.msra.mxu0 %v868
        %892 = vmatprep.subr.mxu0 0.0
        %893 = vmatpush1.msra.mxu0 %v869
        %894 = vmatprep.subr.mxu0 0.0
        %895 = vmatpush1.msra.mxu0 %v870
        %896 = vmatprep.subr.mxu0 0.0
        %897 = vmatpush1.msra.mxu0 %v871
        %898 = vmatprep.subr.mxu0 0.0
        %899 = vmatpush1.msra.mxu0 %v872
        %900 = vmatprep.subr.mxu0 0.0
        %901 = vmatpush1.msra.mxu0 %v873
        %902 = vmatprep.subr.mxu0 0.0
        %903 = vmatpush1.msra.mxu0 %v874
        %904 = vmatprep.subr.mxu0 0.0
        %905 = vmatpush1.msra.mxu0 %v875
        %906 = vmatprep.subr.mxu0 0.0
        %907 = vmatpush1.msra.mxu0 %v876
        %908 = vmatprep.subr.mxu0 0.0
        %909 = vmatpush1.msra.mxu0 %v877
        %910 = vmatprep.subr.mxu0 0.0
        %911 = vmatpush1.msra.mxu0 0.0
        %912 = vmatprep.subr.mxu0 0.0
        %913 = vmatpush1.msra.mxu0 0.0
        %914 = vmatprep.subr.mxu0 0.0
        %915 = vmatpush1.msra.mxu0 0.0
        %916 = vmatprep.subr.mxu0 0.0
        %917 = vmatpush1.msra.mxu0 0.0
        %918 = vmatprep.subr.mxu0 0.0
        %919 = vmatpush1.msra.mxu0 0.0
        %920 = vmatprep.subr.mxu0 0.0
        %921 = vmatpush1.msra.mxu0 0.0
        %922 = vmatprep.subr.mxu0 0.0
        %923 = vmatpush1.msra.mxu0 0.0
        %924 = vmatprep.subr.mxu0 0.0
        %925 = vmatpush1.msra.mxu0 0.0
        %926 = vmatprep.subr.mxu0 0.0
        %927 = vmatpush1.msra.mxu0 0.0
        %928 = vmatprep.subr.mxu0 0.0
        %929 = vmatpush1.msra.mxu0 0.0
        %930 = vmatprep.subr.mxu0 0.0
        %931 = vmatpush1.msra.mxu0 0.0
        %932 = vmatprep.subr.mxu0 0.0
        %933 = vmatpush1.msra.mxu0 0.0
        %934 = vmatprep.subr.mxu0 0.0
        %935 = vmatpush1.msra.mxu0 0.0
        %936 = vmatprep.subr.mxu0 0.0
        %937 = vmatpush1.msra.mxu0 0.0
        %938 = vmatprep.subr.mxu0 0.0
        %939 = vmatpush1.msra.mxu0 0.0
        %940 = vmatprep.subr.mxu0 0.0
        %941 = vmatpush1.msra.mxu0 0.0
        %942 = vmatprep.mubr.f32.mxu0 0.0
        %943 = vmatmul.mubr.f32.gmra.mrb[0].mxu0 %v388
        %v944 = vpop.f32.mrb[0].mxu0
        %v945 = vadd.f32 0.0, %v944
        %v946 = vpop.f32.mrb[0].mxu0
        %947 = vmatprep.mubr.f32.mxu0 0.0
        %948 = vmatmul.mubr.f32.gmra.mrb[0].mxu0 %v390
        %v949 = vpop.f32.mrb[0].mxu0
        %v950 = vadd.f32 0.0, %v949
        %v951 = vpop.f32.mrb[0].mxu0
        %952 = vmatprep.mubr.f32.mxu0 0.0
        %953 = vmatmul.mubr.f32.gmra.mrb[0].mxu0 %v392
        %v954 = vpop.f32.mrb[0].mxu0
        %v955 = vadd.f32 0.0, %v954
        %v956 = vpop.f32.mrb[0].mxu0
        %957 = vmatprep.mubr.f32.mxu0 0.0
        %958 = vmatmul.mubr.f32.gmra.mrb[0].mxu0 %v394
        %v959 = vpop.f32.mrb[0].mxu0
        %v960 = vadd.f32 0.0, %v959
        %v961 = vpop.f32.mrb[0].mxu0
        %962 = vmatprep.mubr.f32.mxu0 0.0
        %963 = vmatmul.mubr.f32.gmra.mrb[0].mxu0 %v396
        %v964 = vpop.f32.mrb[0].mxu0
        %v965 = vadd.f32 0.0, %v964
        %v966 = vpop.f32.mrb[0].mxu0
        %967 = vmatprep.mubr.f32.mxu0 0.0
        %968 = vmatmul.mubr.f32.gmra.mrb[0].mxu0 %v398
        %v969 = vpop.f32.mrb[0].mxu0
        %v970 = vadd.f32 0.0, %v969
        %v971 = vpop.f32.mrb[0].mxu0
        %972 = vmatprep.mubr.f32.mxu0 0.0
        %973 = vmatmul.mubr.f32.gmra.mrb[0].mxu0 %v400
        %v974 = vpop.f32.mrb[0].mxu0
        %v975 = vadd.f32 0.0, %v974
        %v976 = vpop.f32.mrb[0].mxu0
        %977 = vmatprep.mubr.f32.mxu0 0.0
        %978 = vmatmul.mubr.f32.gmra.mrb[0].mxu0 %v402
        %v979 = vpop.f32.mrb[0].mxu0
        %v980 = vadd.f32 0.0, %v979
        %v981 = vpop.f32.mrb[0].mxu0
        %982 = vdwg.mxu0
        %v983 = vadd.f32 %v853, %v945
        %v984 = vadd.f32 %v854, %v950
        %v985 = vadd.f32 %v855, %v955
        %v986 = vadd.f32 %v856, %v960
        %v987 = vadd.f32 %v857, %v965
        %v988 = vadd.f32 %v858, %v970
        %v989 = vadd.f32 %v859, %v975
        %v990 = vadd.f32 %v860, %v980
        %v993 = vrot.slane %v402, 1
        %v994 = vrot.slane %v403, 1
        %v995 = vsel %vm438, %v993, %v994
        %s997 = scalar_lea.vmem [#allocation3], 512
        %v998 = vld [vmem:[%s997] sm:$0xff]
        %v999 = vld [vmem:[%s997 + $0x8] sm:$0xff]
        %v1000 = vld [vmem:[%s997 + $0x10] sm:$0xff]
        %v1001 = vld [vmem:[%s997 + $0x18] sm:$0xff]
        %v1002 = vld [vmem:[%s997 + $0x20] sm:$0xff]
        %v1003 = vld [vmem:[%s997 + $0x28] sm:$0xff]
        %v1004 = vld [vmem:[%s997 + $0x30] sm:$0xff]
        %v1005 = vld [vmem:[%s997 + $0x38] sm:$0xff]
        %v1006 = vld [vmem:[%s997 + $0x40] sm:$0xff]
        %v1007 = vld [vmem:[%s997 + $0x48] sm:$0xff]
        %v1008 = vld [vmem:[%s997 + $0x50] sm:$0xff]
        %v1009 = vld [vmem:[%s997 + $0x58] sm:$0xff]
        %v1010 = vld [vmem:[%s997 + $0x60] sm:$0xff]
        %v1011 = vld [vmem:[%s997 + $0x68] sm:$0xff]
        %v1012 = vld [vmem:[%s997 + $0x70] sm:$0xff]
        %v1013 = vld [vmem:[%s997 + $0x78] sm:$0xff]
        %1014 = vmatprep.subr.mxu0 0.0
        %1015 = vmatpush1.msra.mxu0 %v998
        %1016 = vmatprep.subr.mxu0 0.0
        %1017 = vmatpush1.msra.mxu0 %v999
        %1018 = vmatprep.subr.mxu0 0.0
        %1019 = vmatpush1.msra.mxu0 %v1000
        %1020 = vmatprep.subr.mxu0 0.0
        %1021 = vmatpush1.msra.mxu0 %v1001
        %1022 = vmatprep.subr.mxu0 0.0
        %1023 = vmatpush1.msra.mxu0 %v1002
        %1024 = vmatprep.subr.mxu0 0.0
        %1025 = vmatpush1.msra.mxu0 %v1003
        %1026 = vmatprep.subr.mxu0 0.0
        %1027 = vmatpush1.msra.mxu0 %v1004
        %1028 = vmatprep.subr.mxu0 0.0
        %1029 = vmatpush1.msra.mxu0 %v1005
        %1030 = vmatprep.subr.mxu0 0.0
        %1031 = vmatpush1.msra.mxu0 %v1006
        %1032 = vmatprep.subr.mxu0 0.0
        %1033 = vmatpush1.msra.mxu0 %v1007
        %1034 = vmatprep.subr.mxu0 0.0
        %1035 = vmatpush1.msra.mxu0 %v1008
        %1036 = vmatprep.subr.mxu0 0.0
        %1037 = vmatpush1.msra.mxu0 %v1009
        %1038 = vmatprep.subr.mxu0 0.0
        %1039 = vmatpush1.msra.mxu0 %v1010
        %1040 = vmatprep.subr.mxu0 0.0
        %1041 = vmatpush1.msra.mxu0 %v1011
        %1042 = vmatprep.subr.mxu0 0.0
        %1043 = vmatpush1.msra.mxu0 %v1012
        %1044 = vmatprep.subr.mxu0 0.0
        %1045 = vmatpush1.msra.mxu0 %v1013
        %1046 = vmatprep.subr.mxu0 0.0
        %1047 = vmatpush1.msra.mxu0 0.0
        %1048 = vmatprep.subr.mxu0 0.0
        %1049 = vmatpush1.msra.mxu0 0.0
        %1050 = vmatprep.subr.mxu0 0.0
        %1051 = vmatpush1.msra.mxu0 0.0
        %1052 = vmatprep.subr.mxu0 0.0
        %1053 = vmatpush1.msra.mxu0 0.0
        %1054 = vmatprep.subr.mxu0 0.0
        %1055 = vmatpush1.msra.mxu0 0.0
        %1056 = vmatprep.subr.mxu0 0.0
        %1057 = vmatpush1.msra.mxu0 0.0
        %1058 = vmatprep.subr.mxu0 0.0
        %1059 = vmatpush1.msra.mxu0 0.0
        %1060 = vmatprep.subr.mxu0 0.0
        %1061 = vmatpush1.msra.mxu0 0.0
        %1062 = vmatprep.subr.mxu0 0.0
        %1063 = vmatpush1.msra.mxu0 0.0
        %1064 = vmatprep.subr.mxu0 0.0
        %1065 = vmatpush1.msra.mxu0 0.0
        %1066 = vmatprep.subr.mxu0 0.0
        %1067 = vmatpush1.msra.mxu0 0.0
        %1068 = vmatprep.subr.mxu0 0.0
        %1069 = vmatpush1.msra.mxu0 0.0
        %1070 = vmatprep.subr.mxu0 0.0
        %1071 = vmatpush1.msra.mxu0 0.0
        %1072 = vmatprep.subr.mxu0 0.0
        %1073 = vmatpush1.msra.mxu0 0.0
        %1074 = vmatprep.subr.mxu0 0.0
        %1075 = vmatpush1.msra.mxu0 0.0
        %1076 = vmatprep.subr.mxu0 0.0
        %1077 = vmatpush1.msra.mxu0 0.0
        %1078 = vmatprep.mubr.f32.mxu0 0.0
        %1079 = vmatmul.mubr.f32.gmra.mrb[0].mxu0 %v444
        %v1080 = vpop.f32.mrb[0].mxu0
        %v1081 = vadd.f32 0.0, %v1080
        %v1082 = vpop.f32.mrb[0].mxu0
        %1083 = vmatprep.mubr.f32.mxu0 0.0
        %1084 = vmatmul.mubr.f32.gmra.mrb[0].mxu0 %v447
        %v1085 = vpop.f32.mrb[0].mxu0
        %v1086 = vadd.f32 0.0, %v1085
        %v1087 = vpop.f32.mrb[0].mxu0
        %1088 = vmatprep.mubr.f32.mxu0 0.0
        %1089 = vmatmul.mubr.f32.gmra.mrb[0].mxu0 %v450
        %v1090 = vpop.f32.mrb[0].mxu0
        %v1091 = vadd.f32 0.0, %v1090
        %v1092 = vpop.f32.mrb[0].mxu0
        %1093 = vmatprep.mubr.f32.mxu0 0.0
        %1094 = vmatmul.mubr.f32.gmra.mrb[0].mxu0 %v453
        %v1095 = vpop.f32.mrb[0].mxu0
        %v1096 = vadd.f32 0.0, %v1095
        %v1097 = vpop.f32.mrb[0].mxu0
        %1098 = vmatprep.mubr.f32.mxu0 0.0
        %1099 = vmatmul.mubr.f32.gmra.mrb[0].mxu0 %v456
        %v1100 = vpop.f32.mrb[0].mxu0
        %v1101 = vadd.f32 0.0, %v1100
        %v1102 = vpop.f32.mrb[0].mxu0
        %1103 = vmatprep.mubr.f32.mxu0 0.0
        %1104 = vmatmul.mubr.f32.gmra.mrb[0].mxu0 %v459
        %v1105 = vpop.f32.mrb[0].mxu0
        %v1106 = vadd.f32 0.0, %v1105
        %v1107 = vpop.f32.mrb[0].mxu0
        %1108 = vmatprep.mubr.f32.mxu0 0.0
        %1109 = vmatmul.mubr.f32.gmra.mrb[0].mxu0 %v462
        %v1110 = vpop.f32.mrb[0].mxu0
        %v1111 = vadd.f32 0.0, %v1110
        %v1112 = vpop.f32.mrb[0].mxu0
        %1113 = vmatprep.mubr.f32.mxu0 0.0
        %1114 = vmatmul.mubr.f32.gmra.mrb[0].mxu0 %v995
        %v1115 = vpop.f32.mrb[0].mxu0
        %v1116 = vadd.f32 0.0, %v1115
        %v1117 = vpop.f32.mrb[0].mxu0
        %1118 = vdwg.mxu0
        %v1119 = vadd.f32 %v983, %v1081
        %v1120 = vadd.f32 %v984, %v1086
        %v1121 = vadd.f32 %v985, %v1091
        %v1122 = vadd.f32 %v986, %v1096
        %v1123 = vadd.f32 %v987, %v1101
        %v1124 = vadd.f32 %v988, %v1106
        %v1125 = vadd.f32 %v989, %v1111
        %v1126 = vadd.f32 %v990, %v1116
        %v1127 = vrot.slane %v402, 2
        %v1128 = vrot.slane %v403, 2
        %v1129 = vsel %vm698, %v1127, %v1128
        %s1131 = scalar_lea.vmem [#allocation3], 640
        %v1132 = vld [vmem:[%s1131] sm:$0xff]
        %v1133 = vld [vmem:[%s1131 + $0x8] sm:$0xff]
        %v1134 = vld [vmem:[%s1131 + $0x10] sm:$0xff]
        %v1135 = vld [vmem:[%s1131 + $0x18] sm:$0xff]
        %v1136 = vld [vmem:[%s1131 + $0x20] sm:$0xff]
        %v1137 = vld [vmem:[%s1131 + $0x28] sm:$0xff]
        %v1138 = vld [vmem:[%s1131 + $0x30] sm:$0xff]
        %v1139 = vld [vmem:[%s1131 + $0x38] sm:$0xff]
        %v1140 = vld [vmem:[%s1131 + $0x40] sm:$0xff]
        %v1141 = vld [vmem:[%s1131 + $0x48] sm:$0xff]
        %v1142 = vld [vmem:[%s1131 + $0x50] sm:$0xff]
        %v1143 = vld [vmem:[%s1131 + $0x58] sm:$0xff]
        %v1144 = vld [vmem:[%s1131 + $0x60] sm:$0xff]
        %v1145 = vld [vmem:[%s1131 + $0x68] sm:$0xff]
        %v1146 = vld [vmem:[%s1131 + $0x70] sm:$0xff]
        %v1147 = vld [vmem:[%s1131 + $0x78] sm:$0xff]
        %1148 = vmatprep.subr.mxu0 0.0
        %1149 = vmatpush1.msra.mxu0 %v1132
        %1150 = vmatprep.subr.mxu0 0.0
        %1151 = vmatpush1.msra.mxu0 %v1133
        %1152 = vmatprep.subr.mxu0 0.0
        %1153 = vmatpush1.msra.mxu0 %v1134
        %1154 = vmatprep.subr.mxu0 0.0
        %1155 = vmatpush1.msra.mxu0 %v1135
        %1156 = vmatprep.subr.mxu0 0.0
        %1157 = vmatpush1.msra.mxu0 %v1136
        %1158 = vmatprep.subr.mxu0 0.0
        %1159 = vmatpush1.msra.mxu0 %v1137
        %1160 = vmatprep.subr.mxu0 0.0
        %1161 = vmatpush1.msra.mxu0 %v1138
        %1162 = vmatprep.subr.mxu0 0.0
        %1163 = vmatpush1.msra.mxu0 %v1139
        %1164 = vmatprep.subr.mxu0 0.0
        %1165 = vmatpush1.msra.mxu0 %v1140
        %1166 = vmatprep.subr.mxu0 0.0
        %1167 = vmatpush1.msra.mxu0 %v1141
        %1168 = vmatprep.subr.mxu0 0.0
        %1169 = vmatpush1.msra.mxu0 %v1142
        %1170 = vmatprep.subr.mxu0 0.0
        %1171 = vmatpush1.msra.mxu0 %v1143
        %1172 = vmatprep.subr.mxu0 0.0
        %1173 = vmatpush1.msra.mxu0 %v1144
        %1174 = vmatprep.subr.mxu0 0.0
        %1175 = vmatpush1.msra.mxu0 %v1145
        %1176 = vmatprep.subr.mxu0 0.0
        %1177 = vmatpush1.msra.mxu0 %v1146
        %1178 = vmatprep.subr.mxu0 0.0
        %1179 = vmatpush1.msra.mxu0 %v1147
        %1180 = vmatprep.subr.mxu0 0.0
        %1181 = vmatpush1.msra.mxu0 0.0
        %1182 = vmatprep.subr.mxu0 0.0
        %1183 = vmatpush1.msra.mxu0 0.0
        %1184 = vmatprep.subr.mxu0 0.0
        %1185 = vmatpush1.msra.mxu0 0.0
        %1186 = vmatprep.subr.mxu0 0.0
        %1187 = vmatpush1.msra.mxu0 0.0
        %1188 = vmatprep.subr.mxu0 0.0
        %1189 = vmatpush1.msra.mxu0 0.0
        %1190 = vmatprep.subr.mxu0 0.0
        %1191 = vmatpush1.msra.mxu0 0.0
        %1192 = vmatprep.subr.mxu0 0.0
        %1193 = vmatpush1.msra.mxu0 0.0
        %1194 = vmatprep.subr.mxu0 0.0
        %1195 = vmatpush1.msra.mxu0 0.0
        %1196 = vmatprep.subr.mxu0 0.0
        %1197 = vmatpush1.msra.mxu0 0.0
        %1198 = vmatprep.subr.mxu0 0.0
        %1199 = vmatpush1.msra.mxu0 0.0
        %1200 = vmatprep.subr.mxu0 0.0
        %1201 = vmatpush1.msra.mxu0 0.0
        %1202 = vmatprep.subr.mxu0 0.0
        %1203 = vmatpush1.msra.mxu0 0.0
        %1204 = vmatprep.subr.mxu0 0.0
        %1205 = vmatpush1.msra.mxu0 0.0
        %1206 = vmatprep.subr.mxu0 0.0
        %1207 = vmatpush1.msra.mxu0 0.0
        %1208 = vmatprep.subr.mxu0 0.0
        %1209 = vmatpush1.msra.mxu0 0.0
        %1210 = vmatprep.subr.mxu0 0.0
        %1211 = vmatpush1.msra.mxu0 0.0
        %1212 = vmatprep.mubr.f32.mxu0 0.0
        %1213 = vmatmul.mubr.f32.gmra.mrb[0].mxu0 %v704
        %v1214 = vpop.f32.mrb[0].mxu0
        %v1215 = vadd.f32 0.0, %v1214
        %v1216 = vpop.f32.mrb[0].mxu0
        %1217 = vmatprep.mubr.f32.mxu0 0.0
        %1218 = vmatmul.mubr.f32.gmra.mrb[0].mxu0 %v707
        %v1219 = vpop.f32.mrb[0].mxu0
        %v1220 = vadd.f32 0.0, %v1219
        %v1221 = vpop.f32.mrb[0].mxu0
        %1222 = vmatprep.mubr.f32.mxu0 0.0
        %1223 = vmatmul.mubr.f32.gmra.mrb[0].mxu0 %v710
        %v1224 = vpop.f32.mrb[0].mxu0
        %v1225 = vadd.f32 0.0, %v1224
        %v1226 = vpop.f32.mrb[0].mxu0
        %1227 = vmatprep.mubr.f32.mxu0 0.0
        %1228 = vmatmul.mubr.f32.gmra.mrb[0].mxu0 %v713
        %v1229 = vpop.f32.mrb[0].mxu0
        %v1230 = vadd.f32 0.0, %v1229
        %v1231 = vpop.f32.mrb[0].mxu0
        %1232 = vmatprep.mubr.f32.mxu0 0.0
        %1233 = vmatmul.mubr.f32.gmra.mrb[0].mxu0 %v716
        %v1234 = vpop.f32.mrb[0].mxu0
        %v1235 = vadd.f32 0.0, %v1234
        %v1236 = vpop.f32.mrb[0].mxu0
        %1237 = vmatprep.mubr.f32.mxu0 0.0
        %1238 = vmatmul.mubr.f32.gmra.mrb[0].mxu0 %v719
        %v1239 = vpop.f32.mrb[0].mxu0
        %v1240 = vadd.f32 0.0, %v1239
        %v1241 = vpop.f32.mrb[0].mxu0
        %1242 = vmatprep.mubr.f32.mxu0 0.0
        %1243 = vmatmul.mubr.f32.gmra.mrb[0].mxu0 %v722
        %v1244 = vpop.f32.mrb[0].mxu0
        %v1245 = vadd.f32 0.0, %v1244
        %v1246 = vpop.f32.mrb[0].mxu0
        %1247 = vmatprep.mubr.f32.mxu0 0.0
        %1248 = vmatmul.mubr.f32.gmra.mrb[0].mxu0 %v1129
        %v1249 = vpop.f32.mrb[0].mxu0
        %v1250 = vadd.f32 0.0, %v1249
        %v1251 = vpop.f32.mrb[0].mxu0
        %1252 = vdwg.mxu0
        %v1253 = vadd.f32 %v1119, %v1215
        %v1254 = vadd.f32 %v1120, %v1220
        %v1255 = vadd.f32 %v1121, %v1225
        %v1256 = vadd.f32 %v1122, %v1230
        %v1257 = vadd.f32 %v1123, %v1235
        %v1258 = vadd.f32 %v1124, %v1240
        %v1259 = vadd.f32 %v1125, %v1245
        %v1260 = vadd.f32 %v1126, %v1250
        %s1261 = scalar_lea.vmem [#allocation3], 768
        %v1262 = vld [vmem:[%s1261] sm:$0xff]
        %v1263 = vld [vmem:[%s1261 + $0x8] sm:$0xff]
        %v1264 = vld [vmem:[%s1261 + $0x10] sm:$0xff]
        %v1265 = vld [vmem:[%s1261 + $0x18] sm:$0xff]
        %v1266 = vld [vmem:[%s1261 + $0x20] sm:$0xff]
        %v1267 = vld [vmem:[%s1261 + $0x28] sm:$0xff]
        %v1268 = vld [vmem:[%s1261 + $0x30] sm:$0xff]
        %v1269 = vld [vmem:[%s1261 + $0x38] sm:$0xff]
        %v1270 = vld [vmem:[%s1261 + $0x40] sm:$0xff]
        %v1271 = vld [vmem:[%s1261 + $0x48] sm:$0xff]
        %v1272 = vld [vmem:[%s1261 + $0x50] sm:$0xff]
        %v1273 = vld [vmem:[%s1261 + $0x58] sm:$0xff]
        %v1274 = vld [vmem:[%s1261 + $0x60] sm:$0xff]
        %v1275 = vld [vmem:[%s1261 + $0x68] sm:$0xff]
        %v1276 = vld [vmem:[%s1261 + $0x70] sm:$0xff]
        %v1277 = vld [vmem:[%s1261 + $0x78] sm:$0xff]
        %1278 = vmatprep.subr.mxu0 0.0
        %1279 = vmatpush1.msra.mxu0 %v1262
        %1280 = vmatprep.subr.mxu0 0.0
        %1281 = vmatpush1.msra.mxu0 %v1263
        %1282 = vmatprep.subr.mxu0 0.0
        %1283 = vmatpush1.msra.mxu0 %v1264
        %1284 = vmatprep.subr.mxu0 0.0
        %1285 = vmatpush1.msra.mxu0 %v1265
        %1286 = vmatprep.subr.mxu0 0.0
        %1287 = vmatpush1.msra.mxu0 %v1266
        %1288 = vmatprep.subr.mxu0 0.0
        %1289 = vmatpush1.msra.mxu0 %v1267
        %1290 = vmatprep.subr.mxu0 0.0
        %1291 = vmatpush1.msra.mxu0 %v1268
        %1292 = vmatprep.subr.mxu0 0.0
        %1293 = vmatpush1.msra.mxu0 %v1269
        %1294 = vmatprep.subr.mxu0 0.0
        %1295 = vmatpush1.msra.mxu0 %v1270
        %1296 = vmatprep.subr.mxu0 0.0
        %1297 = vmatpush1.msra.mxu0 %v1271
        %1298 = vmatprep.subr.mxu0 0.0
        %1299 = vmatpush1.msra.mxu0 %v1272
        %1300 = vmatprep.subr.mxu0 0.0
        %1301 = vmatpush1.msra.mxu0 %v1273
        %1302 = vmatprep.subr.mxu0 0.0
        %1303 = vmatpush1.msra.mxu0 %v1274
        %1304 = vmatprep.subr.mxu0 0.0
        %1305 = vmatpush1.msra.mxu0 %v1275
        %1306 = vmatprep.subr.mxu0 0.0
        %1307 = vmatpush1.msra.mxu0 %v1276
        %1308 = vmatprep.subr.mxu0 0.0
        %1309 = vmatpush1.msra.mxu0 %v1277
        %1310 = vmatprep.subr.mxu0 0.0
        %1311 = vmatpush1.msra.mxu0 0.0
        %1312 = vmatprep.subr.mxu0 0.0
        %1313 = vmatpush1.msra.mxu0 0.0
        %1314 = vmatprep.subr.mxu0 0.0
        %1315 = vmatpush1.msra.mxu0 0.0
        %1316 = vmatprep.subr.mxu0 0.0
        %1317 = vmatpush1.msra.mxu0 0.0
        %1318 = vmatprep.subr.mxu0 0.0
        %1319 = vmatpush1.msra.mxu0 0.0
        %1320 = vmatprep.subr.mxu0 0.0
        %1321 = vmatpush1.msra.mxu0 0.0
        %1322 = vmatprep.subr.mxu0 0.0
        %1323 = vmatpush1.msra.mxu0 0.0
        %1324 = vmatprep.subr.mxu0 0.0
        %1325 = vmatpush1.msra.mxu0 0.0
        %1326 = vmatprep.subr.mxu0 0.0
        %1327 = vmatpush1.msra.mxu0 0.0
        %1328 = vmatprep.subr.mxu0 0.0
        %1329 = vmatpush1.msra.mxu0 0.0
        %1330 = vmatprep.subr.mxu0 0.0
        %1331 = vmatpush1.msra.mxu0 0.0
        %1332 = vmatprep.subr.mxu0 0.0
        %1333 = vmatpush1.msra.mxu0 0.0
        %1334 = vmatprep.subr.mxu0 0.0
        %1335 = vmatpush1.msra.mxu0 0.0
        %1336 = vmatprep.subr.mxu0 0.0
        %1337 = vmatpush1.msra.mxu0 0.0
        %1338 = vmatprep.subr.mxu0 0.0
        %1339 = vmatpush1.msra.mxu0 0.0
        %1340 = vmatprep.subr.mxu0 0.0
        %1341 = vmatpush1.msra.mxu0 0.0
        %1342 = vmatprep.mubr.f32.mxu0 0.0
        %1343 = vmatmul.mubr.f32.gmra.mrb[0].mxu0 %v390
        %v1344 = vpop.f32.mrb[0].mxu0
        %v1345 = vadd.f32 0.0, %v1344
        %v1346 = vpop.f32.mrb[0].mxu0
        %1347 = vmatprep.mubr.f32.mxu0 0.0
        %1348 = vmatmul.mubr.f32.gmra.mrb[0].mxu0 %v392
        %v1349 = vpop.f32.mrb[0].mxu0
        %v1350 = vadd.f32 0.0, %v1349
        %v1351 = vpop.f32.mrb[0].mxu0
        %1352 = vmatprep.mubr.f32.mxu0 0.0
        %1353 = vmatmul.mubr.f32.gmra.mrb[0].mxu0 %v394
        %v1354 = vpop.f32.mrb[0].mxu0
        %v1355 = vadd.f32 0.0, %v1354
        %v1356 = vpop.f32.mrb[0].mxu0
        %1357 = vmatprep.mubr.f32.mxu0 0.0
        %1358 = vmatmul.mubr.f32.gmra.mrb[0].mxu0 %v396
        %v1359 = vpop.f32.mrb[0].mxu0
        %v1360 = vadd.f32 0.0, %v1359
        %v1361 = vpop.f32.mrb[0].mxu0
        %1362 = vmatprep.mubr.f32.mxu0 0.0
        %1363 = vmatmul.mubr.f32.gmra.mrb[0].mxu0 %v398
        %v1364 = vpop.f32.mrb[0].mxu0
        %v1365 = vadd.f32 0.0, %v1364
        %v1366 = vpop.f32.mrb[0].mxu0
        %1367 = vmatprep.mubr.f32.mxu0 0.0
        %1368 = vmatmul.mubr.f32.gmra.mrb[0].mxu0 %v400
        %v1369 = vpop.f32.mrb[0].mxu0
        %v1370 = vadd.f32 0.0, %v1369
        %v1371 = vpop.f32.mrb[0].mxu0
        %1372 = vmatprep.mubr.f32.mxu0 0.0
        %1373 = vmatmul.mubr.f32.gmra.mrb[0].mxu0 %v402
        %v1374 = vpop.f32.mrb[0].mxu0
        %v1375 = vadd.f32 0.0, %v1374
        %v1376 = vpop.f32.mrb[0].mxu0
        %1377 = vmatprep.mubr.f32.mxu0 0.0
        %1378 = vmatmul.mubr.f32.gmra.mrb[0].mxu0 %v404
        %v1379 = vpop.f32.mrb[0].mxu0
        %v1380 = vadd.f32 0.0, %v1379
        %v1381 = vpop.f32.mrb[0].mxu0
        %1382 = vdwg.mxu0
        %v1383 = vadd.f32 %v1253, %v1345
        %v1384 = vadd.f32 %v1254, %v1350
        %v1385 = vadd.f32 %v1255, %v1355
        %v1386 = vadd.f32 %v1256, %v1360
        %v1387 = vadd.f32 %v1257, %v1365
        %v1388 = vadd.f32 %v1258, %v1370
        %v1389 = vadd.f32 %v1259, %v1375
        %v1390 = vadd.f32 %v1260, %v1380
        %v1393 = vrot.slane %v404, 1
        %v1394 = vrot.slane %v405, 1
        %v1395 = vsel %vm438, %v1393, %v1394
        %s1397 = scalar_lea.vmem [#allocation3], 896
        %v1398 = vld [vmem:[%s1397] sm:$0xff]
        %v1399 = vld [vmem:[%s1397 + $0x8] sm:$0xff]
        %v1400 = vld [vmem:[%s1397 + $0x10] sm:$0xff]
        %v1401 = vld [vmem:[%s1397 + $0x18] sm:$0xff]
        %v1402 = vld [vmem:[%s1397 + $0x20] sm:$0xff]
        %v1403 = vld [vmem:[%s1397 + $0x28] sm:$0xff]
        %v1404 = vld [vmem:[%s1397 + $0x30] sm:$0xff]
        %v1405 = vld [vmem:[%s1397 + $0x38] sm:$0xff]
        %v1406 = vld [vmem:[%s1397 + $0x40] sm:$0xff]
        %v1407 = vld [vmem:[%s1397 + $0x48] sm:$0xff]
        %v1408 = vld [vmem:[%s1397 + $0x50] sm:$0xff]
        %v1409 = vld [vmem:[%s1397 + $0x58] sm:$0xff]
        %v1410 = vld [vmem:[%s1397 + $0x60] sm:$0xff]
        %v1411 = vld [vmem:[%s1397 + $0x68] sm:$0xff]
        %v1412 = vld [vmem:[%s1397 + $0x70] sm:$0xff]
        %v1413 = vld [vmem:[%s1397 + $0x78] sm:$0xff]
        %1414 = vmatprep.subr.mxu0 0.0
        %1415 = vmatpush1.msra.mxu0 %v1398
        %1416 = vmatprep.subr.mxu0 0.0
        %1417 = vmatpush1.msra.mxu0 %v1399
        %1418 = vmatprep.subr.mxu0 0.0
        %1419 = vmatpush1.msra.mxu0 %v1400
        %1420 = vmatprep.subr.mxu0 0.0
        %1421 = vmatpush1.msra.mxu0 %v1401
        %1422 = vmatprep.subr.mxu0 0.0
        %1423 = vmatpush1.msra.mxu0 %v1402
        %1424 = vmatprep.subr.mxu0 0.0
        %1425 = vmatpush1.msra.mxu0 %v1403
        %1426 = vmatprep.subr.mxu0 0.0
        %1427 = vmatpush1.msra.mxu0 %v1404
        %1428 = vmatprep.subr.mxu0 0.0
        %1429 = vmatpush1.msra.mxu0 %v1405
        %1430 = vmatprep.subr.mxu0 0.0
        %1431 = vmatpush1.msra.mxu0 %v1406
        %1432 = vmatprep.subr.mxu0 0.0
        %1433 = vmatpush1.msra.mxu0 %v1407
        %1434 = vmatprep.subr.mxu0 0.0
        %1435 = vmatpush1.msra.mxu0 %v1408
        %1436 = vmatprep.subr.mxu0 0.0
        %1437 = vmatpush1.msra.mxu0 %v1409
        %1438 = vmatprep.subr.mxu0 0.0
        %1439 = vmatpush1.msra.mxu0 %v1410
        %1440 = vmatprep.subr.mxu0 0.0
        %1441 = vmatpush1.msra.mxu0 %v1411
        %1442 = vmatprep.subr.mxu0 0.0
        %1443 = vmatpush1.msra.mxu0 %v1412
        %1444 = vmatprep.subr.mxu0 0.0
        %1445 = vmatpush1.msra.mxu0 %v1413
        %1446 = vmatprep.subr.mxu0 0.0
        %1447 = vmatpush1.msra.mxu0 0.0
        %1448 = vmatprep.subr.mxu0 0.0
        %1449 = vmatpush1.msra.mxu0 0.0
        %1450 = vmatprep.subr.mxu0 0.0
        %1451 = vmatpush1.msra.mxu0 0.0
        %1452 = vmatprep.subr.mxu0 0.0
        %1453 = vmatpush1.msra.mxu0 0.0
        %1454 = vmatprep.subr.mxu0 0.0
        %1455 = vmatpush1.msra.mxu0 0.0
        %1456 = vmatprep.subr.mxu0 0.0
        %1457 = vmatpush1.msra.mxu0 0.0
        %1458 = vmatprep.subr.mxu0 0.0
        %1459 = vmatpush1.msra.mxu0 0.0
        %1460 = vmatprep.subr.mxu0 0.0
        %1461 = vmatpush1.msra.mxu0 0.0
        %1462 = vmatprep.subr.mxu0 0.0
        %1463 = vmatpush1.msra.mxu0 0.0
        %1464 = vmatprep.subr.mxu0 0.0
        %1465 = vmatpush1.msra.mxu0 0.0
        %1466 = vmatprep.subr.mxu0 0.0
        %1467 = vmatpush1.msra.mxu0 0.0
        %1468 = vmatprep.subr.mxu0 0.0
        %1469 = vmatpush1.msra.mxu0 0.0
        %1470 = vmatprep.subr.mxu0 0.0
        %1471 = vmatpush1.msra.mxu0 0.0
        %1472 = vmatprep.subr.mxu0 0.0
        %1473 = vmatpush1.msra.mxu0 0.0
        %1474 = vmatprep.subr.mxu0 0.0
        %1475 = vmatpush1.msra.mxu0 0.0
        %1476 = vmatprep.subr.mxu0 0.0
        %1477 = vmatpush1.msra.mxu0 0.0
        %1478 = vmatprep.mubr.f32.mxu0 0.0
        %1479 = vmatmul.mubr.f32.gmra.mrb[0].mxu0 %v447
        %v1480 = vpop.f32.mrb[0].mxu0
        %v1481 = vadd.f32 0.0, %v1480
        %v1482 = vpop.f32.mrb[0].mxu0
        %1483 = vmatprep.mubr.f32.mxu0 0.0
        %1484 = vmatmul.mubr.f32.gmra.mrb[0].mxu0 %v450
        %v1485 = vpop.f32.mrb[0].mxu0
        %v1486 = vadd.f32 0.0, %v1485
        %v1487 = vpop.f32.mrb[0].mxu0
        %1488 = vmatprep.mubr.f32.mxu0 0.0
        %1489 = vmatmul.mubr.f32.gmra.mrb[0].mxu0 %v453
        %v1490 = vpop.f32.mrb[0].mxu0
        %v1491 = vadd.f32 0.0, %v1490
        %v1492 = vpop.f32.mrb[0].mxu0
        %1493 = vmatprep.mubr.f32.mxu0 0.0
        %1494 = vmatmul.mubr.f32.gmra.mrb[0].mxu0 %v456
        %v1495 = vpop.f32.mrb[0].mxu0
        %v1496 = vadd.f32 0.0, %v1495
        %v1497 = vpop.f32.mrb[0].mxu0
        %1498 = vmatprep.mubr.f32.mxu0 0.0
        %1499 = vmatmul.mubr.f32.gmra.mrb[0].mxu0 %v459
        %v1500 = vpop.f32.mrb[0].mxu0
        %v1501 = vadd.f32 0.0, %v1500
        %v1502 = vpop.f32.mrb[0].mxu0
        %1503 = vmatprep.mubr.f32.mxu0 0.0
        %1504 = vmatmul.mubr.f32.gmra.mrb[0].mxu0 %v462
        %v1505 = vpop.f32.mrb[0].mxu0
        %v1506 = vadd.f32 0.0, %v1505
        %v1507 = vpop.f32.mrb[0].mxu0
        %1508 = vmatprep.mubr.f32.mxu0 0.0
        %1509 = vmatmul.mubr.f32.gmra.mrb[0].mxu0 %v995
        %v1510 = vpop.f32.mrb[0].mxu0
        %v1511 = vadd.f32 0.0, %v1510
        %v1512 = vpop.f32.mrb[0].mxu0
        %1513 = vmatprep.mubr.f32.mxu0 0.0
        %1514 = vmatmul.mubr.f32.gmra.mrb[0].mxu0 %v1395
        %v1515 = vpop.f32.mrb[0].mxu0
        %v1516 = vadd.f32 0.0, %v1515
        %v1517 = vpop.f32.mrb[0].mxu0
        %1518 = vdwg.mxu0
        %v1519 = vadd.f32 %v1383, %v1481
        %v1520 = vadd.f32 %v1384, %v1486
        %v1521 = vadd.f32 %v1385, %v1491
        %v1522 = vadd.f32 %v1386, %v1496
        %v1523 = vadd.f32 %v1387, %v1501
        %v1524 = vadd.f32 %v1388, %v1506
        %v1525 = vadd.f32 %v1389, %v1511
        %v1526 = vadd.f32 %v1390, %v1516
        %v1527 = vrot.slane %v404, 2
        %v1528 = vrot.slane %v405, 2
        %v1529 = vsel %vm698, %v1527, %v1528
        %s1531 = scalar_lea.vmem [#allocation3], 1024
        %v1532 = vld [vmem:[%s1531] sm:$0xff]
        %v1533 = vld [vmem:[%s1531 + $0x8] sm:$0xff]
        %v1534 = vld [vmem:[%s1531 + $0x10] sm:$0xff]
        %v1535 = vld [vmem:[%s1531 + $0x18] sm:$0xff]
        %v1536 = vld [vmem:[%s1531 + $0x20] sm:$0xff]
        %v1537 = vld [vmem:[%s1531 + $0x28] sm:$0xff]
        %v1538 = vld [vmem:[%s1531 + $0x30] sm:$0xff]
        %v1539 = vld [vmem:[%s1531 + $0x38] sm:$0xff]
        %v1540 = vld [vmem:[%s1531 + $0x40] sm:$0xff]
        %v1541 = vld [vmem:[%s1531 + $0x48] sm:$0xff]
        %v1542 = vld [vmem:[%s1531 + $0x50] sm:$0xff]
        %v1543 = vld [vmem:[%s1531 + $0x58] sm:$0xff]
        %v1544 = vld [vmem:[%s1531 + $0x60] sm:$0xff]
        %v1545 = vld [vmem:[%s1531 + $0x68] sm:$0xff]
        %v1546 = vld [vmem:[%s1531 + $0x70] sm:$0xff]
        %v1547 = vld [vmem:[%s1531 + $0x78] sm:$0xff]
        %1548 = vmatprep.subr.mxu0 0.0
        %1549 = vmatpush1.msra.mxu0 %v1532
        %1550 = vmatprep.subr.mxu0 0.0
        %1551 = vmatpush1.msra.mxu0 %v1533
        %1552 = vmatprep.subr.mxu0 0.0
        %1553 = vmatpush1.msra.mxu0 %v1534
        %1554 = vmatprep.subr.mxu0 0.0
        %1555 = vmatpush1.msra.mxu0 %v1535
        %1556 = vmatprep.subr.mxu0 0.0
        %1557 = vmatpush1.msra.mxu0 %v1536
        %1558 = vmatprep.subr.mxu0 0.0
        %1559 = vmatpush1.msra.mxu0 %v1537
        %1560 = vmatprep.subr.mxu0 0.0
        %1561 = vmatpush1.msra.mxu0 %v1538
        %1562 = vmatprep.subr.mxu0 0.0
        %1563 = vmatpush1.msra.mxu0 %v1539
        %1564 = vmatprep.subr.mxu0 0.0
        %1565 = vmatpush1.msra.mxu0 %v1540
        %1566 = vmatprep.subr.mxu0 0.0
        %1567 = vmatpush1.msra.mxu0 %v1541
        %1568 = vmatprep.subr.mxu0 0.0
        %1569 = vmatpush1.msra.mxu0 %v1542
        %1570 = vmatprep.subr.mxu0 0.0
        %1571 = vmatpush1.msra.mxu0 %v1543
        %1572 = vmatprep.subr.mxu0 0.0
        %1573 = vmatpush1.msra.mxu0 %v1544
        %1574 = vmatprep.subr.mxu0 0.0
        %1575 = vmatpush1.msra.mxu0 %v1545
        %1576 = vmatprep.subr.mxu0 0.0
        %1577 = vmatpush1.msra.mxu0 %v1546
        %1578 = vmatprep.subr.mxu0 0.0
        %1579 = vmatpush1.msra.mxu0 %v1547
        %1580 = vmatprep.subr.mxu0 0.0
        %1581 = vmatpush1.msra.mxu0 0.0
        %1582 = vmatprep.subr.mxu0 0.0
        %1583 = vmatpush1.msra.mxu0 0.0
        %1584 = vmatprep.subr.mxu0 0.0
        %1585 = vmatpush1.msra.mxu0 0.0
        %1586 = vmatprep.subr.mxu0 0.0
        %1587 = vmatpush1.msra.mxu0 0.0
        %1588 = vmatprep.subr.mxu0 0.0
        %1589 = vmatpush1.msra.mxu0 0.0
        %1590 = vmatprep.subr.mxu0 0.0
        %1591 = vmatpush1.msra.mxu0 0.0
        %1592 = vmatprep.subr.mxu0 0.0
        %1593 = vmatpush1.msra.mxu0 0.0
        %1594 = vmatprep.subr.mxu0 0.0
        %1595 = vmatpush1.msra.mxu0 0.0
        %1596 = vmatprep.subr.mxu0 0.0
        %1597 = vmatpush1.msra.mxu0 0.0
        %1598 = vmatprep.subr.mxu0 0.0
        %1599 = vmatpush1.msra.mxu0 0.0
        %1600 = vmatprep.subr.mxu0 0.0
        %1601 = vmatpush1.msra.mxu0 0.0
        %1602 = vmatprep.subr.mxu0 0.0
        %1603 = vmatpush1.msra.mxu0 0.0
        %1604 = vmatprep.subr.mxu0 0.0
        %1605 = vmatpush1.msra.mxu0 0.0
        %1606 = vmatprep.subr.mxu0 0.0
        %1607 = vmatpush1.msra.mxu0 0.0
        %1608 = vmatprep.subr.mxu0 0.0
        %1609 = vmatpush1.msra.mxu0 0.0
        %1610 = vmatprep.subr.mxu0 0.0
        %1611 = vmatpush1.msra.mxu0 0.0
        %1612 = vmatprep.mubr.f32.mxu0 0.0
        %1613 = vmatmul.mubr.f32.gmra.mrb[0].mxu0 %v707
        %v1614 = vpop.f32.mrb[0].mxu0
        %v1615 = vadd.f32 0.0, %v1614
        %v1616 = vpop.f32.mrb[0].mxu0
        %1617 = vmatprep.mubr.f32.mxu0 0.0
        %1618 = vmatmul.mubr.f32.gmra.mrb[0].mxu0 %v710
        %v1619 = vpop.f32.mrb[0].mxu0
        %v1620 = vadd.f32 0.0, %v1619
        %v1621 = vpop.f32.mrb[0].mxu0
        %1622 = vmatprep.mubr.f32.mxu0 0.0
        %1623 = vmatmul.mubr.f32.gmra.mrb[0].mxu0 %v713
        %v1624 = vpop.f32.mrb[0].mxu0
        %v1625 = vadd.f32 0.0, %v1624
        %v1626 = vpop.f32.mrb[0].mxu0
        %1627 = vmatprep.mubr.f32.mxu0 0.0
        %1628 = vmatmul.mubr.f32.gmra.mrb[0].mxu0 %v716
        %v1629 = vpop.f32.mrb[0].mxu0
        %v1630 = vadd.f32 0.0, %v1629
        %v1631 = vpop.f32.mrb[0].mxu0
        %1632 = vmatprep.mubr.f32.mxu0 0.0
        %1633 = vmatmul.mubr.f32.gmra.mrb[0].mxu0 %v719
        %v1634 = vpop.f32.mrb[0].mxu0
        %v1635 = vadd.f32 0.0, %v1634
        %v1636 = vpop.f32.mrb[0].mxu0
        %1637 = vmatprep.mubr.f32.mxu0 0.0
        %1638 = vmatmul.mubr.f32.gmra.mrb[0].mxu0 %v722
        %v1639 = vpop.f32.mrb[0].mxu0
        %v1640 = vadd.f32 0.0, %v1639
        %v1641 = vpop.f32.mrb[0].mxu0
        %1642 = vmatprep.mubr.f32.mxu0 0.0
        %1643 = vmatmul.mubr.f32.gmra.mrb[0].mxu0 %v1129
        %v1644 = vpop.f32.mrb[0].mxu0
        %v1645 = vadd.f32 0.0, %v1644
        %v1646 = vpop.f32.mrb[0].mxu0
        %1647 = vmatprep.mubr.f32.mxu0 0.0
        %1648 = vmatmul.mubr.f32.gmra.mrb[0].mxu0 %v1529
        %v1649 = vpop.f32.mrb[0].mxu0
        %v1650 = vadd.f32 0.0, %v1649
        %v1651 = vpop.f32.mrb[0].mxu0
        %1652 = vdwg.mxu0
        %v1653 = vadd.f32 %v1519, %v1615
        %v1654 = vadd.f32 %v1520, %v1620
        %v1655 = vadd.f32 %v1521, %v1625
        %v1656 = vadd.f32 %v1522, %v1630
        %v1657 = vadd.f32 %v1523, %v1635
        %v1658 = vadd.f32 %v1524, %v1640
        %v1659 = vadd.f32 %v1525, %v1645
        %v1660 = vadd.f32 %v1526, %v1650
        %v1661 = vld [vmem:[%s4] sm:$0x1]
        %v1663 = vlaneseq
        %v1664 = vshrl.u32 %v1663, 7
        %v1665 = vsub.s32 0, %v1664
        %v1666 = vrot.slane %v1661, %v1665
        %v1668 = vadd.f32 %v1653, %v1666
        %v1669 = vadd.f32 %v1654, %v1666
        %v1670 = vadd.f32 %v1655, %v1666
        %v1671 = vadd.f32 %v1656, %v1666
        %v1672 = vadd.f32 %v1657, %v1666
        %v1673 = vadd.f32 %v1658, %v1666
        %v1674 = vadd.f32 %v1659, %v1666
        %v1675 = vadd.f32 %v1660, %v1666
        %1676 = vst [vmem:[%s304] sm:$0xff] %v1668
        %1677 = vst [vmem:[%s304 + $0x8] sm:$0xff] %v1669
        %1678 = vst [vmem:[%s304 + $0x10] sm:$0xff] %v1670
        %1679 = vst [vmem:[%s304 + $0x18] sm:$0xff] %v1671
        %1680 = vst [vmem:[%s304 + $0x20] sm:$0xff] %v1672
        %1681 = vst [vmem:[%s304 + $0x28] sm:$0xff] %v1673
        %1682 = vst [vmem:[%s304 + $0x30] sm:$0xff] %v1674
        %1683 = vst [vmem:[%s304 + $0x38] sm:$0xff] %v1675
        %v1684 = vadd.f32 %v1668, %v1669
        %v1685 = vadd.f32 %v1684, %v1670
        %v1686 = vadd.f32 %v1685, %v1671
        %v1687 = vadd.f32 %v1686, %v1672
        %v1688 = vadd.f32 %v1687, %v1673
        %v1689 = vadd.f32 %v1688, %v1674
        %v1690 = vadd.f32 %v1689, %v1675
        %v1691 = vrot.slane %v1690, 4
        %v1692 = vadd.f32 %v1690, %v1691
        %v1693 = vrot.slane %v1692, 2
        %v1694 = vadd.f32 %v1692, %v1693
        %v1695 = vrot.slane %v1694, 1
        %v1696 = vadd.f32 %v1694, %v1695
        %1697 = vst [vmem:[%s307] sm:$0x1] %v1696
        %v1698 = vmul.f32 %v1668, %v1668
        %v1699 = vmul.f32 %v1669, %v1669
        %v1700 = vmul.f32 %v1670, %v1670
        %v1701 = vmul.f32 %v1671, %v1671
        %v1702 = vmul.f32 %v1672, %v1672
        %v1703 = vmul.f32 %v1673, %v1673
        %v1704 = vmul.f32 %v1674, %v1674
        %v1705 = vmul.f32 %v1675, %v1675
        %v1706 = vadd.f32 %v1698, %v1699
        %v1707 = vadd.f32 %v1706, %v1700
        %v1708 = vadd.f32 %v1707, %v1701
        %v1709 = vadd.f32 %v1708, %v1702
        %v1710 = vadd.f32 %v1709, %v1703
        %v1711 = vadd.f32 %v1710, %v1704
        %v1712 = vadd.f32 %v1711, %v1705
        %v1713 = vrot.slane %v1712, 4
        %v1714 = vadd.f32 %v1712, %v1713
        %v1715 = vrot.slane %v1714, 2
        %v1716 = vadd.f32 %v1714, %v1715
        %v1717 = vrot.slane %v1716, 1
        %v1718 = vadd.f32 %v1716, %v1717
        %1719 = vst [vmem:[%s310] sm:$0x1] %v1718
        %p1720 = scmp.lt.s32.totalorder %s20, 1
        %s1721 = scalar_select %p1720, %s20, 1
        %s1722 = smul.addr %s1721, 8
        %s1723 = smul.addr %s1722, 8
        %s1724 = scalar_lea.vmem %s5, %s1723
        %p1725 = scmp.lt.s32.totalorder %s20, 1
        %s1726 = scalar_select %p1725, %s20, 1
        %s1727 = scalar_lea.vmem %s6, %s1726
        %p1728 = scmp.lt.s32.totalorder %s20, 1
        %s1729 = scalar_select %p1728, %s20, 1
        %s1730 = scalar_lea.vmem %s7, %s1729
        // Predicated region
        $region45: #{down_forward.4} parent=39 // pred_check
          %p1731 = pneg %p148
        $region46: #{down_forward.4} parent=39 // pred_check_branch
          %1733 = sbr.rel (%p1731) target = $region48
        $region47: #{down_forward.4} parent=39 // pred_region
          _
        $region48: #{down_forward.4} parent=39 // pred_fallthru
          _
        // Predicated region
        $region49: #{down_forward.4} parent=39 // pred_check
          %p1734 = pneg %p174
        $region50: #{down_forward.4} parent=39 // pred_check_branch
          %1736 = sbr.rel (%p1734) target = $region52
        $region51: #{down_forward.4} parent=39 // pred_region
          _
        $region52: #{down_forward.4} parent=39 // pred_fallthru
          _
        // Predicated region
        $region53: #{down_forward.4} parent=39 // pred_check
          %p1737 = pneg %p200
        $region54: #{down_forward.4} parent=39 // pred_check_branch
          %1739 = sbr.rel (%p1737) target = $region56
        $region55: #{down_forward.4} parent=39 // pred_region
          _
        $region56: #{down_forward.4} parent=39 // pred_fallthru
          _
      $region40: #{down_forward.4} parent=5 // pred_fallthru
        _
      %p1740 = scmp.le.s32.totalorder 2, %s15
      // Predicated region
      $region57: #{down_forward.4} parent=5 // pred_check
        %p1741 = pneg %p1740
      $region58: #{down_forward.4} parent=5 // pred_check_branch
        %1743 = sbr.rel (%p1741) target = $region60
      $region59: #{down_forward.4} parent=5 // pred_region
        %s1744 = ssub.s32 %s15, 2
        // Predicated region
        $region61: #{down_forward.4} parent=59 // pred_check
          %p1745 = pneg %p154
        $region62: #{down_forward.4} parent=59 // pred_check_branch
          %1747 = sbr.rel (%p1745) target = $region64
        $region63: #{down_forward.4} parent=59 // pred_region
          %p1748 = scmp.lt.s32.totalorder %s21, 1
          %s1749 = scalar_select %p1748, %s21, 1
          %s1750 = smul.addr %s1749, 8
          %s1751 = smul.addr %s1750, 8
          %s1752 = scalar_lea.vmem %s5, %s1751
        $region64: #{down_forward.4} parent=59 // pred_fallthru
          _
        // Predicated region
        $region65: #{down_forward.4} parent=59 // pred_check
          %p1753 = pneg %p180
        $region66: #{down_forward.4} parent=59 // pred_check_branch
          %1755 = sbr.rel (%p1753) target = $region68
        $region67: #{down_forward.4} parent=59 // pred_region
          %p1756 = scmp.lt.s32.totalorder %s21, 1
          %s1757 = scalar_select %p1756, %s21, 1
          %s1758 = scalar_lea.vmem %s6, %s1757
        $region68: #{down_forward.4} parent=59 // pred_fallthru
          _
        // Predicated region
        $region69: #{down_forward.4} parent=59 // pred_check
          %p1759 = pneg %p206
        $region70: #{down_forward.4} parent=59 // pred_check_branch
          %1761 = sbr.rel (%p1759) target = $region72
        $region71: #{down_forward.4} parent=59 // pred_region
          %p1762 = scmp.lt.s32.totalorder %s21, 1
          %s1763 = scalar_select %p1762, %s21, 1
          %s1764 = scalar_lea.vmem %s7, %s1763
        $region72: #{down_forward.4} parent=59 // pred_fallthru
          _
      $region60: #{down_forward.4} parent=5 // pred_fallthru
        _
    $region6: #{down_forward.4} parent=1 // loop_footer
      %s19 = sadd.s32 1, %s15
    $region7: #{down_forward.4} parent=1 // loop_footer_branch
      %14 = sbr.rel target = $region3
    $region8: #{down_forward.4} parent=1 // loop_exit
      _
    %1765 = vsyncpa [#allocation4], 1
    %s1766 = scalar_lea.sflag [#allocation4], 1
    %1767 = vsyncpa %s1766, 1

</llo_original>
